<compile_context>
chip_gen: v6e
topology: v6e:2x2x1
jax: 0.10.0
libtpu: 0.0.40
codegen_flags: <defaults>
</compile_context>

<pallas_src>
import jax
import jax.numpy as jnp
from jax.experimental import pallas as pl
from jax.experimental.pallas import tpu as pltpu

EPS = 1e-5


# ---------------------------------------------------------------------------
# Fused Bottleneck kernel (one grid step == B_TILE images, NHWC)
# ---------------------------------------------------------------------------
def _bottleneck_kernel(x_ref, w1_ref, b1_ref, w2_ref, b2_ref, w3_ref, b3_ref,
                       o_ref, pad_ref):
    B, H, W, Cin = x_ref.shape
    Cmid = w1_ref.shape[1]
    Cout = w3_ref.shape[1]

    x = x_ref[...].reshape(B * H * W, Cin)                     # bf16

    # ---- conv1: 1x1 + folded BN + ReLU (MXU, f32 accumulation) ------------
    t1 = jnp.dot(x, w1_ref[...], preferred_element_type=jnp.float32)
    t1 = jnp.maximum(t1 + b1_ref[...], 0.0).reshape(B, H, W, Cmid)

    # ---- conv2 staging: write the three kw-shifted copies of t1 into the
    #      bf16 scratch, one Cmid-wide channel block per width tap.  Rows 0 /
    #      H+1 and the two single edge columns are the zero padding.  The
    #      whole scratch is rewritten every grid step (no cross-step state).
    zrow = jnp.zeros((B, 1, W, 3 * Cmid), jnp.bfloat16)
    zcol = jnp.zeros((B, H, 1, Cmid), jnp.bfloat16)
    pad_ref[:, 0:1] = zrow                                     # top pad row
    pad_ref[:, H + 1:H + 2] = zrow                             # bottom pad row
    # kw = 1 (center tap): aligned full-width store
    pad_ref[:, 1:H + 1, :, Cmid:2 * Cmid] = t1.astype(jnp.bfloat16)
    # kw = 0 (left neighbour): t1 shifted right by one column, zero left edge
    pad_ref[:, 1:H + 1, 0:1, 0:Cmid] = zcol
    pad_ref[:, 1:H + 1, 1:W, 0:Cmid] = t1[:, :, :W - 1, :].astype(jnp.bfloat16)
    # kw = 2 (right neighbour): t1 shifted left by one column, zero right edge
    pad_ref[:, 1:H + 1, 0:W - 1, 2 * Cmid:3 * Cmid] = (
        t1[:, :, 1:, :].astype(jnp.bfloat16))
    pad_ref[:, 1:H + 1, W - 1:W, 2 * Cmid:3 * Cmid] = zcol

    # ---- conv2: 3x3 + folded BN + ReLU as three K=3*Cmid matmuls ----------
    acc = None
    for kh in range(3):
        lhs = pad_ref[:, kh:kh + H].reshape(B * H * W, 3 * Cmid)   # bf16 load
        part = jnp.dot(lhs, w2_ref[kh], preferred_element_type=jnp.float32)
        acc = part if acc is None else acc + part
    t2 = jnp.maximum(acc + b2_ref[...], 0.0).astype(jnp.bfloat16)  # (B*H*W, Cmid)

    # ---- conv3: 1x1 + folded BN + ReLU, residual add, final ReLU ----------
    y = jnp.dot(t2, w3_ref[...], preferred_element_type=jnp.float32)
    y = jnp.maximum(y + b3_ref[...], 0.0)
    ident = x_ref[...].reshape(B * H * W, Cin).astype(jnp.float32)  # re-read
    y = jnp.maximum(y + ident, 0.0)
    o_ref[...] = y.reshape(B, H, W, Cout).astype(o_ref.dtype)


# ---------------------------------------------------------------------------
# Wrappers
# ---------------------------------------------------------------------------
def bottleneck_forward_nhwc(x_nhwc, kp):
    N, H, W, Cin = x_nhwc.shape
    w1, b1 = kp["w1"], kp["b1"]
    w2, b2 = kp["w2"], kp["b2"]
    w3, b3 = kp["w3"], kp["b3"]
    Cmid = w1.shape[1]
    Cout = w3.shape[1]
    if Cin != Cout:
        raise ValueError("identity path requires Cin == Cout (downsample=None)")
    assert W >= 2 and H >= 1

    # --- batch tile sized to a conservative VMEM budget (works on v5e/v6e/v7x)
    def footprint(b):
        io = 2 * 2 * b * H * W * (Cin + Cout) * 2       # double-buffered bf16 in/out
        scratch = b * (H + 2) * W * 3 * Cmid * 2        # bf16 staging scratch
        tmps = 3 * b * H * W * max(Cmid, Cout) * 4      # f32 temporaries
        wts = 2 * (Cin * Cmid + 9 * Cmid * Cmid + Cmid * Cout) * 2
        return io + scratch + tmps + wts

    budget = 24 * 1024 * 1024
    b_tile = 1
    for b in range(1, N + 1):
        if N % b == 0 and footprint(b) <= budget:
            b_tile = b
    vmem_limit = min(64 * 1024 * 1024,
                     max(footprint(b_tile) + (16 << 20), 32 << 20))

    return pl.pallas_call(
        _bottleneck_kernel,
        out_shape=jax.ShapeDtypeStruct((N, H, W, Cout), jnp.bfloat16),
        grid_spec=pltpu.PrefetchScalarGridSpec(
            num_scalar_prefetch=0,
            grid=(N // b_tile,),
            in_specs=[
                pl.BlockSpec((b_tile, H, W, Cin), lambda n: (n, 0, 0, 0)),
                pl.BlockSpec((Cin, Cmid), lambda n: (0, 0)),
                pl.BlockSpec((1, Cmid), lambda n: (0, 0)),
                pl.BlockSpec((3, 3 * Cmid, Cmid), lambda n: (0, 0, 0)),
                pl.BlockSpec((1, Cmid), lambda n: (0, 0)),
                pl.BlockSpec((Cmid, Cout), lambda n: (0, 0)),
                pl.BlockSpec((1, Cout), lambda n: (0, 0)),
            ],
            out_specs=pl.BlockSpec((b_tile, H, W, Cout),
                                   lambda n: (n, 0, 0, 0)),
            scratch_shapes=[
                pltpu.VMEM((b_tile, H + 2, W, 3 * Cmid), jnp.bfloat16)],
        ),
        compiler_params=pltpu.CompilerParams(
            dimension_semantics=("parallel",),
            vmem_limit_bytes=int(vmem_limit)),
    )(x_nhwc, w1, b1, w2, b2, w3, b3)


def bottleneck_forward(x_nchw, kernel_params):
    # NCHW <-> NHWC and f32 <-> bf16 only at the module boundary.
    x = jnp.transpose(x_nchw, (0, 2, 3, 1)).astype(jnp.bfloat16)
    out = bottleneck_forward_nhwc(x, kernel_params)
    return jnp.transpose(out, (0, 3, 1, 2)).astype(jnp.float32)


# ---------------------------------------------------------------------------
# Pure-JAX reference (mirrors the assumed PyTorch module, NCHW, f32)
# ---------------------------------------------------------------------------
def _ref_convblock(x, w_oihw, gamma, beta, mean, var, padding=0):
    y = jax.lax.conv_general_dilated(
        x, w_oihw, window_strides=(1, 1),
        padding=[(padding, padding), (padding, padding)],
        dimension_numbers=("NCHW", "OIHW", "NCHW"))
    s = gamma / jnp.sqrt(var + EPS)
    y = y * s[None, :, None, None] + (beta - mean * s)[None, :, None, None]
    return jnp.maximum(y, 0.0)


def bottleneck_reference(x, params):
    out = _ref_convblock(x, params["w1"], *params["bn1"])
    out = _ref_convblock(out, params["w2"], *params["bn2"], padding=1)
    out = _ref_convblock(out, params["w3"], *params["bn3"])
    out = out + x
    return jnp.maximum(out, 0.0)


# ---------------------------------------------------------------------------
# Deterministic parameter construction
# ---------------------------------------------------------------------------
def _fold_bn(gamma, beta, mean, var):
    scale = gamma / jnp.sqrt(var + EPS)
    bias = beta - mean * scale
    return scale, bias


def make_params(key, inplanes, planes, base_width=64, groups=1):
    width = int(planes * (base_width / 64.0)) * groups
    outc = planes * 4  # expansion
    ks = jax.random.split(key, 9)

    def bn(kg, kb, c):
        gamma = jax.random.uniform(kg, (c,), jnp.float32, 0.5, 1.5)
        beta = jax.random.normal(kb, (c,), jnp.float32) * 0.1
        mean = jax.random.normal(jax.random.fold_in(kb, 1), (c,), jnp.float32) * 0.1
        var = jax.random.uniform(jax.random.fold_in(kg, 1), (c,), jnp.float32, 0.5, 1.5)
        return gamma, beta, mean, var

    w1 = jax.random.normal(ks[0], (width, inplanes, 1, 1), jnp.float32) * 0.1
    w2 = jax.random.normal(ks[1], (width, width, 3, 3), jnp.float32) * 0.1
    w3 = jax.random.normal(ks[2], (outc, width, 1, 1), jnp.float32) * 0.1

    params = {"w1": w1, "w2": w2, "w3": w3,
              "bn1": bn(ks[3], ks[4], width),
              "bn2": bn(ks[5], ks[6], width),
              "bn3": bn(ks[7], ks[8], outc)}

    # Kernel-side params: NHWC-style layouts, BN scale folded into the weights,
    # bf16 matmul operands, f32 biases.  w2 is pre-reshaped to (3, 3*Cmid, Cmid)
    # so each kernel row is one fused K = 3*Cmid matmul.
    s1, b1 = _fold_bn(*params["bn1"])
    s2, b2 = _fold_bn(*params["bn2"])
    s3, b3 = _fold_bn(*params["bn3"])
    w1_mat = jnp.transpose(w1.reshape(width, inplanes), (1, 0))      # (Cin, Cmid)
    w2_hwio = jnp.transpose(w2, (2, 3, 1, 0))                        # (3,3,Cmid,Cmid)
    w2_k = (w2_hwio * s2[None, None, None, :]).reshape(3, 3 * width, width)
    w3_mat = jnp.transpose(w3.reshape(outc, width), (1, 0))          # (Cmid, Cout)
    params["kernel"] = {
        "w1": (w1_mat * s1[None, :]).astype(jnp.bfloat16),
        "b1": b1.reshape(1, -1).astype(jnp.float32),
        "w2": w2_k.astype(jnp.bfloat16),
        "b2": b2.reshape(1, -1).astype(jnp.float32),
        "w3": (w3_mat * s3[None, :]).astype(jnp.bfloat16),
        "b3": b3.reshape(1, -1).astype(jnp.float32),
    }
    return params


# ---------------------------------------------------------------------------
if __name__ == "__main__":
    key = jax.random.PRNGKey(0)
    k_x, k_p = jax.random.split(key)

    N, inplanes, H, W = 2, 64, 16, 16
    planes = 16  # expansion=4 -> output channels = 64 = inplanes (identity matches)

    x = jax.random.normal(k_x, (N, inplanes, H, W), jnp.float32)
    params = make_params(k_p, inplanes, planes)

    fwd = jax.jit(bottleneck_forward)
    out = jax.block_until_ready(fwd(x, params["kernel"]))
    ref = jax.block_until_ready(bottleneck_reference(x, params))

    assert out.shape == (N, planes * 4, H, W), out.shape
    max_err = float(jnp.max(jnp.abs(out - ref)))
    max_ref = float(jnp.max(jnp.abs(ref)))
    # bf16 activations/weights (f32 accumulation) vs an f32 reference.
    assert max_err <= 5e-2 * max(1.0, max_ref), (max_err, max_ref)

    print("KERNEL_OK")
</pallas_src>

<mosaic_0001>
module attributes {stable_mosaic.version = 11 : i64} {
  func.func @_bottleneck_kernel(%arg0: i32, %arg1: memref<2x16x16x64xbf16, #tpu.memory_space<vmem>>, %arg2: memref<64x16xbf16, #tpu.memory_space<vmem>>, %arg3: memref<1x16xf32, #tpu.memory_space<vmem>>, %arg4: memref<3x48x16xbf16, #tpu.memory_space<vmem>>, %arg5: memref<1x16xf32, #tpu.memory_space<vmem>>, %arg6: memref<16x64xbf16, #tpu.memory_space<vmem>>, %arg7: memref<1x64xf32, #tpu.memory_space<vmem>>, %arg8: memref<2x16x16x64xbf16, #tpu.memory_space<vmem>>, %arg9: memref<2x18x16x48xbf16, #tpu.memory_space<vmem>>) attributes {dimension_semantics = [#tpu.dimension_semantics<parallel>], iteration_bounds = array<i64: 1>, scalar_prefetch = 0 : i64, scratch_operands = 1 : i64, tpu.core_type = #tpu.core_type<tc>, window_params = [{transform_indices = @transform_0, window_bounds = array<i64: 2, 16, 16, 64>}, {pipeline_mode = #tpu.pipeline_mode<synchronous>, transform_indices = @transform_1, window_bounds = array<i64: 64, 16>}, {pipeline_mode = #tpu.pipeline_mode<synchronous>, transform_indices = @transform_2, window_bounds = array<i64: 1, 16>}, {pipeline_mode = #tpu.pipeline_mode<synchronous>, transform_indices = @transform_3, window_bounds = array<i64: 3, 48, 16>}, {pipeline_mode = #tpu.pipeline_mode<synchronous>, transform_indices = @transform_4, window_bounds = array<i64: 1, 16>}, {pipeline_mode = #tpu.pipeline_mode<synchronous>, transform_indices = @transform_5, window_bounds = array<i64: 16, 64>}, {pipeline_mode = #tpu.pipeline_mode<synchronous>, transform_indices = @transform_6, window_bounds = array<i64: 1, 64>}, {transform_indices = @transform_7, window_bounds = array<i64: 2, 16, 16, 64>}]} {
    %c0 = arith.constant 0 : index
    %c0_0 = arith.constant 0 : index
    %c0_1 = arith.constant 0 : index
    %c0_2 = arith.constant 0 : index
    %0 = vector.load %arg1[%c0, %c0_0, %c0_1, %c0_2] : memref<2x16x16x64xbf16, #tpu.memory_space<vmem>>, vector<2x16x16x64xbf16>
    %1 = vector.shape_cast %0 : vector<2x16x16x64xbf16> to vector<512x64xbf16>
    %c0_3 = arith.constant 0 : index
    %c0_4 = arith.constant 0 : index
    %2 = vector.load %arg2[%c0_3, %c0_4] : memref<64x16xbf16, #tpu.memory_space<vmem>>, vector<64x16xbf16>
    %cst = arith.constant dense<0.000000e+00> : vector<512x16xf32>
    %3 = tpu.matmul %1, %2, %cst {dimension_numbers = #tpu.dot_dimension_numbers<[1], [0], [0], [1], [0, 0, 1, 1], [], []>} : vector<512x64xbf16>, vector<64x16xbf16>, vector<512x16xf32> -> vector<512x16xf32>
    %c0_5 = arith.constant 0 : index
    %c0_6 = arith.constant 0 : index
    %4 = vector.load %arg3[%c0_5, %c0_6] : memref<1x16xf32, #tpu.memory_space<vmem>>, vector<1x16xf32>
    %5 = vector.broadcast %4 : vector<1x16xf32> to vector<512x16xf32>
    %6 = arith.addf %3, %5 : vector<512x16xf32>
    %cst_7 = arith.constant 0.000000e+00 : f32
    %7 = vector.broadcast %cst_7 : f32 to vector<512x16xf32>
    %8 = arith.maximumf %6, %7 : vector<512x16xf32>
    %9 = vector.shape_cast %8 : vector<512x16xf32> to vector<2x16x16x16xf32>
    %cst_8 = arith.constant 0.000000e+00 : bf16
    %10 = vector.broadcast %cst_8 : bf16 to vector<2x1x16x48xbf16>
    %cst_9 = arith.constant 0.000000e+00 : bf16
    %11 = vector.broadcast %cst_9 : bf16 to vector<2x16x1x16xbf16>
    %c0_10 = arith.constant 0 : index
    %c0_11 = arith.constant 0 : index
    %c0_12 = arith.constant 0 : index
    %c0_13 = arith.constant 0 : index
    %12 = vector.load %arg9[%c0_10, %c0_11, %c0_12, %c0_13] : memref<2x18x16x48xbf16, #tpu.memory_space<vmem>>, vector<2x1x16x48xbf16>
    tpu.vector_store %arg9[%c0_10, %c0_11, %c0_12, %c0_13], %10 {strides = array<i32>} : memref<2x18x16x48xbf16, #tpu.memory_space<vmem>>, vector<2x1x16x48xbf16>,
    %c0_14 = arith.constant 0 : index
    %c17 = arith.constant 17 : index
    %c0_15 = arith.constant 0 : index
    %c0_16 = arith.constant 0 : index
    %13 = vector.load %arg9[%c0_14, %c17, %c0_15, %c0_16] : memref<2x18x16x48xbf16, #tpu.memory_space<vmem>>, vector<2x1x16x48xbf16>
    tpu.vector_store %arg9[%c0_14, %c17, %c0_15, %c0_16], %10 {strides = array<i32>} : memref<2x18x16x48xbf16, #tpu.memory_space<vmem>>, vector<2x1x16x48xbf16>,
    %14 = arith.truncf %9 : vector<2x16x16x16xf32> to vector<2x16x16x16xbf16>
    %c0_17 = arith.constant 0 : index
    %c1 = arith.constant 1 : index
    %c0_18 = arith.constant 0 : index
    %c16 = arith.constant 16 : index
    %15 = vector.load %arg9[%c0_17, %c1, %c0_18, %c16] : memref<2x18x16x48xbf16, #tpu.memory_space<vmem>>, vector<2x16x16x16xbf16>
    tpu.vector_store %arg9[%c0_17, %c1, %c0_18, %c16], %14 {strides = array<i32>} : memref<2x18x16x48xbf16, #tpu.memory_space<vmem>>, vector<2x16x16x16xbf16>,
    %c0_19 = arith.constant 0 : index
    %c1_20 = arith.constant 1 : index
    %c0_21 = arith.constant 0 : index
    %c0_22 = arith.constant 0 : index
    %16 = vector.load %arg9[%c0_19, %c1_20, %c0_21, %c0_22] : memref<2x18x16x48xbf16, #tpu.memory_space<vmem>>, vector<2x16x1x16xbf16>
    tpu.vector_store %arg9[%c0_19, %c1_20, %c0_21, %c0_22], %11 {strides = array<i32>} : memref<2x18x16x48xbf16, #tpu.memory_space<vmem>>, vector<2x16x1x16xbf16>,
    %17 = vector.extract_strided_slice %9 {offsets = [0, 0, 0, 0], sizes = [2, 16, 15, 16], strides = [1, 1, 1, 1]} : vector<2x16x16x16xf32> to vector<2x16x15x16xf32>
    %18 = arith.truncf %17 : vector<2x16x15x16xf32> to vector<2x16x15x16xbf16>
    %c0_23 = arith.constant 0 : index
    %c1_24 = arith.constant 1 : index
    %c1_25 = arith.constant 1 : index
    %c0_26 = arith.constant 0 : index
    %19 = vector.load %arg9[%c0_23, %c1_24, %c1_25, %c0_26] : memref<2x18x16x48xbf16, #tpu.memory_space<vmem>>, vector<2x16x15x16xbf16>
    tpu.vector_store %arg9[%c0_23, %c1_24, %c1_25, %c0_26], %18 {strides = array<i32>} : memref<2x18x16x48xbf16, #tpu.memory_space<vmem>>, vector<2x16x15x16xbf16>,
    %20 = vector.extract_strided_slice %9 {offsets = [0, 0, 1, 0], sizes = [2, 16, 15, 16], strides = [1, 1, 1, 1]} : vector<2x16x16x16xf32> to vector<2x16x15x16xf32>
    %21 = arith.truncf %20 : vector<2x16x15x16xf32> to vector<2x16x15x16xbf16>
    %c0_27 = arith.constant 0 : index
    %c1_28 = arith.constant 1 : index
    %c0_29 = arith.constant 0 : index
    %c32 = arith.constant 32 : index
    %22 = vector.load %arg9[%c0_27, %c1_28, %c0_29, %c32] : memref<2x18x16x48xbf16, #tpu.memory_space<vmem>>, vector<2x16x15x16xbf16>
    tpu.vector_store %arg9[%c0_27, %c1_28, %c0_29, %c32], %21 {strides = array<i32>} : memref<2x18x16x48xbf16, #tpu.memory_space<vmem>>, vector<2x16x15x16xbf16>,
    %c0_30 = arith.constant 0 : index
    %c1_31 = arith.constant 1 : index
    %c15 = arith.constant 15 : index
    %c32_32 = arith.constant 32 : index
    %23 = vector.load %arg9[%c0_30, %c1_31, %c15, %c32_32] : memref<2x18x16x48xbf16, #tpu.memory_space<vmem>>, vector<2x16x1x16xbf16>
    tpu.vector_store %arg9[%c0_30, %c1_31, %c15, %c32_32], %11 {strides = array<i32>} : memref<2x18x16x48xbf16, #tpu.memory_space<vmem>>, vector<2x16x1x16xbf16>,
    %c0_33 = arith.constant 0 : index
    %c0_34 = arith.constant 0 : index
    %c0_35 = arith.constant 0 : index
    %c0_36 = arith.constant 0 : index
    %24 = vector.load %arg9[%c0_33, %c0_34, %c0_35, %c0_36] : memref<2x18x16x48xbf16, #tpu.memory_space<vmem>>, vector<2x16x16x48xbf16>
    %25 = vector.shape_cast %24 : vector<2x16x16x48xbf16> to vector<512x48xbf16>
    %c0_37 = arith.constant 0 : index
    %c0_38 = arith.constant 0 : index
    %c0_39 = arith.constant 0 : index
    %26 = vector.load %arg4[%c0_37, %c0_38, %c0_39] : memref<3x48x16xbf16, #tpu.memory_space<vmem>>, vector<1x48x16xbf16>
    %27 = vector.shape_cast %26 : vector<1x48x16xbf16> to vector<48x16xbf16>
    %cst_40 = arith.constant dense<0.000000e+00> : vector<512x16xf32>
    %28 = tpu.matmul %25, %27, %cst_40 {dimension_numbers = #tpu.dot_dimension_numbers<[1], [0], [0], [1], [0, 0, 1, 1], [], []>} : vector<512x48xbf16>, vector<48x16xbf16>, vector<512x16xf32> -> vector<512x16xf32>
    %c0_41 = arith.constant 0 : index
    %c1_42 = arith.constant 1 : index
    %c0_43 = arith.constant 0 : index
    %c0_44 = arith.constant 0 : index
    %29 = vector.load %arg9[%c0_41, %c1_42, %c0_43, %c0_44] : memref<2x18x16x48xbf16, #tpu.memory_space<vmem>>, vector<2x16x16x48xbf16>
    %30 = vector.shape_cast %29 : vector<2x16x16x48xbf16> to vector<512x48xbf16>
    %c1_45 = arith.constant 1 : index
    %c0_46 = arith.constant 0 : index
    %c0_47 = arith.constant 0 : index
    %31 = vector.load %arg4[%c1_45, %c0_46, %c0_47] : memref<3x48x16xbf16, #tpu.memory_space<vmem>>, vector<1x48x16xbf16>
    %32 = vector.shape_cast %31 : vector<1x48x16xbf16> to vector<48x16xbf16>
    %cst_48 = arith.constant dense<0.000000e+00> : vector<512x16xf32>
    %33 = tpu.matmul %30, %32, %cst_48 {dimension_numbers = #tpu.dot_dimension_numbers<[1], [0], [0], [1], [0, 0, 1, 1], [], []>} : vector<512x48xbf16>, vector<48x16xbf16>, vector<512x16xf32> -> vector<512x16xf32>
    %34 = arith.addf %28, %33 : vector<512x16xf32>
    %c0_49 = arith.constant 0 : index
    %c2 = arith.constant 2 : index
    %c0_50 = arith.constant 0 : index
    %c0_51 = arith.constant 0 : index
    %35 = vector.load %arg9[%c0_49, %c2, %c0_50, %c0_51] : memref<2x18x16x48xbf16, #tpu.memory_space<vmem>>, vector<2x16x16x48xbf16>
    %36 = vector.shape_cast %35 : vector<2x16x16x48xbf16> to vector<512x48xbf16>
    %c2_52 = arith.constant 2 : index
    %c0_53 = arith.constant 0 : index
    %c0_54 = arith.constant 0 : index
    %37 = vector.load %arg4[%c2_52, %c0_53, %c0_54] : memref<3x48x16xbf16, #tpu.memory_space<vmem>>, vector<1x48x16xbf16>
    %38 = vector.shape_cast %37 : vector<1x48x16xbf16> to vector<48x16xbf16>
    %cst_55 = arith.constant dense<0.000000e+00> : vector<512x16xf32>
    %39 = tpu.matmul %36, %38, %cst_55 {dimension_numbers = #tpu.dot_dimension_numbers<[1], [0], [0], [1], [0, 0, 1, 1], [], []>} : vector<512x48xbf16>, vector<48x16xbf16>, vector<512x16xf32> -> vector<512x16xf32>
    %40 = arith.addf %34, %39 : vector<512x16xf32>
    %c0_56 = arith.constant 0 : index
    %c0_57 = arith.constant 0 : index
    %41 = vector.load %arg5[%c0_56, %c0_57] : memref<1x16xf32, #tpu.memory_space<vmem>>, vector<1x16xf32>
    %42 = vector.broadcast %41 : vector<1x16xf32> to vector<512x16xf32>
    %43 = arith.addf %40, %42 : vector<512x16xf32>
    %cst_58 = arith.constant 0.000000e+00 : f32
    %44 = vector.broadcast %cst_58 : f32 to vector<512x16xf32>
    %45 = arith.maximumf %43, %44 : vector<512x16xf32>
    %46 = arith.truncf %45 : vector<512x16xf32> to vector<512x16xbf16>
    %c0_59 = arith.constant 0 : index
    %c0_60 = arith.constant 0 : index
    %47 = vector.load %arg6[%c0_59, %c0_60] : memref<16x64xbf16, #tpu.memory_space<vmem>>, vector<16x64xbf16>
    %cst_61 = arith.constant dense<0.000000e+00> : vector<512x64xf32>
    %48 = tpu.matmul %46, %47, %cst_61 {dimension_numbers = #tpu.dot_dimension_numbers<[1], [0], [0], [1], [0, 0, 1, 1], [], []>} : vector<512x16xbf16>, vector<16x64xbf16>, vector<512x64xf32> -> vector<512x64xf32>
    %c0_62 = arith.constant 0 : index
    %c0_63 = arith.constant 0 : index
    %49 = vector.load %arg7[%c0_62, %c0_63] : memref<1x64xf32, #tpu.memory_space<vmem>>, vector<1x64xf32>
    %50 = vector.broadcast %49 : vector<1x64xf32> to vector<512x64xf32>
    %51 = arith.addf %48, %50 : vector<512x64xf32>
    %cst_64 = arith.constant 0.000000e+00 : f32
    %52 = vector.broadcast %cst_64 : f32 to vector<512x64xf32>
    %53 = arith.maximumf %51, %52 : vector<512x64xf32>
    %c0_65 = arith.constant 0 : index
    %c0_66 = arith.constant 0 : index
    %c0_67 = arith.constant 0 : index
    %c0_68 = arith.constant 0 : index
    %54 = vector.load %arg1[%c0_65, %c0_66, %c0_67, %c0_68] : memref<2x16x16x64xbf16, #tpu.memory_space<vmem>>, vector<2x16x16x64xbf16>
    %55 = vector.shape_cast %54 : vector<2x16x16x64xbf16> to vector<512x64xbf16>
    %56 = arith.extf %55 : vector<512x64xbf16> to vector<512x64xf32>
    %57 = arith.addf %53, %56 : vector<512x64xf32>
    %cst_69 = arith.constant 0.000000e+00 : f32
    %58 = vector.broadcast %cst_69 : f32 to vector<512x64xf32>
    %59 = arith.maximumf %57, %58 : vector<512x64xf32>
    %60 = vector.shape_cast %59 : vector<512x64xf32> to vector<2x16x16x64xf32>
    %61 = arith.truncf %60 : vector<2x16x16x64xf32> to vector<2x16x16x64xbf16>
    %c0_70 = arith.constant 0 : index
    %c0_71 = arith.constant 0 : index
    %c0_72 = arith.constant 0 : index
    %c0_73 = arith.constant 0 : index
    %62 = vector.load %arg8[%c0_70, %c0_71, %c0_72, %c0_73] : memref<2x16x16x64xbf16, #tpu.memory_space<vmem>>, vector<2x16x16x64xbf16>
    tpu.vector_store %arg8[%c0_70, %c0_71, %c0_72, %c0_73], %61 {strides = array<i32>} : memref<2x16x16x64xbf16, #tpu.memory_space<vmem>>, vector<2x16x16x64xbf16>,
    return
  }
  func.func @transform_0(%arg0: i32) -> (i32, i32, i32, i32) {
    %c0_i32 = arith.constant 0 : i32
    %c0_i32_0 = arith.constant 0 : i32
    %c0_i32_1 = arith.constant 0 : i32
    %c0_i32_2 = arith.constant 0 : i32
    return %arg0, %c0_i32, %c0_i32_0, %c0_i32_1 : i32, i32, i32, i32
  }
  func.func @transform_1(%arg0: i32) -> (i32, i32) {
    %c0_i32 = arith.constant 0 : i32
    %c0_i32_0 = arith.constant 0 : i32
    %c0_i32_1 = arith.constant 0 : i32
    return %c0_i32, %c0_i32_0 : i32, i32
  }
  func.func @transform_2(%arg0: i32) -> (i32, i32) {
    %c0_i32 = arith.constant 0 : i32
    %c0_i32_0 = arith.constant 0 : i32
    %c0_i32_1 = arith.constant 0 : i32
    return %c0_i32, %c0_i32_0 : i32, i32
  }
  func.func @transform_3(%arg0: i32) -> (i32, i32, i32) {
    %c0_i32 = arith.constant 0 : i32
    %c0_i32_0 = arith.constant 0 : i32
    %c0_i32_1 = arith.constant 0 : i32
    %c0_i32_2 = arith.constant 0 : i32
    return %c0_i32, %c0_i32_0, %c0_i32_1 : i32, i32, i32
  }
  func.func @transform_4(%arg0: i32) -> (i32, i32) {
    %c0_i32 = arith.constant 0 : i32
    %c0_i32_0 = arith.constant 0 : i32
    %c0_i32_1 = arith.constant 0 : i32
    return %c0_i32, %c0_i32_0 : i32, i32
  }
  func.func @transform_5(%arg0: i32) -> (i32, i32) {
    %c0_i32 = arith.constant 0 : i32
    %c0_i32_0 = arith.constant 0 : i32
    %c0_i32_1 = arith.constant 0 : i32
    return %c0_i32, %c0_i32_0 : i32, i32
  }
  func.func @transform_6(%arg0: i32) -> (i32, i32) {
    %c0_i32 = arith.constant 0 : i32
    %c0_i32_0 = arith.constant 0 : i32
    %c0_i32_1 = arith.constant 0 : i32
    return %c0_i32, %c0_i32_0 : i32, i32
  }
  func.func @transform_7(%arg0: i32) -> (i32, i32, i32, i32) {
    %c0_i32 = arith.constant 0 : i32
    %c0_i32_0 = arith.constant 0 : i32
    %c0_i32_1 = arith.constant 0 : i32
    %c0_i32_2 = arith.constant 0 : i32
    return %arg0, %c0_i32, %c0_i32_0, %c0_i32_1 : i32, i32, i32, i32
  }
}

</mosaic_0001>

<llo_original>
// kernel: bottleneck_forward.1
$region0: #{bottleneck_forward.1}
  #allocation0 [shape = 'u32[]', space=smem, size = 0x4, offset = 0x4, fixed_abs, tag = 'smem constant byte address 0x4 - core index']
  #allocation1 [shape = 'u32[144,128]{1,0:T(1,128)}', space=vmem, size = 0x12000, scoped, tag = 'internal scratch']
  #allocation2 [shape = 'bf16[2,18,16,48]{3,2,1,0:T(8,128)(2,1)}', space=vmem, size = 0x24000, scoped, tag = 'scratch operand']
  %s0 = inlined_call_operand.vmem [shape: bf16[2,16,16,64], index: 0, kind: input, shape index: {}]
  %s1 = inlined_call_operand.vmem [shape: bf16[64,16], index: 1, kind: input, shape index: {}]
  %s2 = inlined_call_operand.vmem [shape: f32[1,16], index: 2, kind: input, shape index: {}]
  %s3 = inlined_call_operand.vmem [shape: bf16[3,48,16], index: 3, kind: input, shape index: {}]
  %s4 = inlined_call_operand.vmem [shape: f32[1,16], index: 4, kind: input, shape index: {}]
  %s5 = inlined_call_operand.vmem [shape: bf16[16,64], index: 5, kind: input, shape index: {}]
  %s6 = inlined_call_operand.vmem [shape: f32[1,64], index: 6, kind: input, shape index: {}]
  %s7 = inlined_call_operand.vmem [shape: bf16[2,16,16,64], index: 7, kind: output, shape index: {}]
  %s8 = sld [smem:[#allocation0]]
  $region38: #{bottleneck_forward.1} parent=0
    _
  %s10 = ssub.s32 1, %s8
  %s11 = scalar_select 0, %s10, %s8
  // Predicated region
  $region2: #{bottleneck_forward.1} parent=0 // pred_check
    _
  $region3: #{bottleneck_forward.1} parent=0 // pred_check_branch
    %13 = sbr.rel (0) target = $region5
  $region4: #{bottleneck_forward.1} parent=0 // pred_region
    _
  $region5: #{bottleneck_forward.1} parent=0 // pred_fallthru
    _
  // Predicated region
  $region6: #{bottleneck_forward.1} parent=0 // pred_check
    _
  $region7: #{bottleneck_forward.1} parent=0 // pred_check_branch
    %15 = sbr.rel (0) target = $region9
  $region8: #{bottleneck_forward.1} parent=0 // pred_region
    _
  $region9: #{bottleneck_forward.1} parent=0 // pred_fallthru
    _
  // Predicated region
  $region10: #{bottleneck_forward.1} parent=0 // pred_check
    _
  $region11: #{bottleneck_forward.1} parent=0 // pred_check_branch
    %17 = sbr.rel (0) target = $region13
  $region12: #{bottleneck_forward.1} parent=0 // pred_region
    _
  $region13: #{bottleneck_forward.1} parent=0 // pred_fallthru
    _
  // Predicated region
  $region14: #{bottleneck_forward.1} parent=0 // pred_check
    _
  $region15: #{bottleneck_forward.1} parent=0 // pred_check_branch
    %19 = sbr.rel (0) target = $region17
  $region16: #{bottleneck_forward.1} parent=0 // pred_region
    _
  $region17: #{bottleneck_forward.1} parent=0 // pred_fallthru
    _
  // Predicated region
  $region18: #{bottleneck_forward.1} parent=0 // pred_check
    _
  $region19: #{bottleneck_forward.1} parent=0 // pred_check_branch
    %21 = sbr.rel (0) target = $region21
  $region20: #{bottleneck_forward.1} parent=0 // pred_region
    _
  $region21: #{bottleneck_forward.1} parent=0 // pred_fallthru
    _
  // Predicated region
  $region22: #{bottleneck_forward.1} parent=0 // pred_check
    _
  $region23: #{bottleneck_forward.1} parent=0 // pred_check_branch
    %23 = sbr.rel (0) target = $region25
  $region24: #{bottleneck_forward.1} parent=0 // pred_region
    _
  $region25: #{bottleneck_forward.1} parent=0 // pred_fallthru
    _
  // Predicated region
  $region26: #{bottleneck_forward.1} parent=0 // pred_check
    _
  $region27: #{bottleneck_forward.1} parent=0 // pred_check_branch
    %25 = sbr.rel (0) target = $region29
  $region28: #{bottleneck_forward.1} parent=0 // pred_region
    _
  $region29: #{bottleneck_forward.1} parent=0 // pred_fallthru
    _
  %v27 = vld [vmem:[%s0] sm:$0xf]
  %v28 = vld [vmem:[%s0 + $0x4] sm:$0xf]
  %v29 = vld [vmem:[%s0 + $0x8] sm:$0xf]
  %v30 = vld [vmem:[%s0 + $0xc] sm:$0xf]
  %v31 = vld [vmem:[%s0 + $0x10] sm:$0xf]
  %v32 = vld [vmem:[%s0 + $0x14] sm:$0xf]
  %v33 = vld [vmem:[%s0 + $0x18] sm:$0xf]
  %v34 = vld [vmem:[%s0 + $0x1c] sm:$0xf]
  %v35 = vld [vmem:[%s0 + $0x20] sm:$0xf]
  %v36 = vld [vmem:[%s0 + $0x24] sm:$0xf]
  %v37 = vld [vmem:[%s0 + $0x28] sm:$0xf]
  %v38 = vld [vmem:[%s0 + $0x2c] sm:$0xf]
  %v39 = vld [vmem:[%s0 + $0x30] sm:$0xf]
  %v40 = vld [vmem:[%s0 + $0x34] sm:$0xf]
  %v41 = vld [vmem:[%s0 + $0x38] sm:$0xf]
  %v42 = vld [vmem:[%s0 + $0x3c] sm:$0xf]
  %v43 = vld [vmem:[%s0 + $0x40] sm:$0xf]
  %v44 = vld [vmem:[%s0 + $0x44] sm:$0xf]
  %v45 = vld [vmem:[%s0 + $0x48] sm:$0xf]
  %v46 = vld [vmem:[%s0 + $0x4c] sm:$0xf]
  %v47 = vld [vmem:[%s0 + $0x50] sm:$0xf]
  %v48 = vld [vmem:[%s0 + $0x54] sm:$0xf]
  %v49 = vld [vmem:[%s0 + $0x58] sm:$0xf]
  %v50 = vld [vmem:[%s0 + $0x5c] sm:$0xf]
  %v51 = vld [vmem:[%s0 + $0x60] sm:$0xf]
  %v52 = vld [vmem:[%s0 + $0x64] sm:$0xf]
  %v53 = vld [vmem:[%s0 + $0x68] sm:$0xf]
  %v54 = vld [vmem:[%s0 + $0x6c] sm:$0xf]
  %v55 = vld [vmem:[%s0 + $0x70] sm:$0xf]
  %v56 = vld [vmem:[%s0 + $0x74] sm:$0xf]
  %v57 = vld [vmem:[%s0 + $0x78] sm:$0xf]
  %v58 = vld [vmem:[%s0 + $0x7c] sm:$0xf]
  %v59 = vld [vmem:[%s0 + $0x80] sm:$0xf]
  %v60 = vld [vmem:[%s0 + $0x84] sm:$0xf]
  %v61 = vld [vmem:[%s0 + $0x88] sm:$0xf]
  %v62 = vld [vmem:[%s0 + $0x8c] sm:$0xf]
  %v63 = vld [vmem:[%s0 + $0x90] sm:$0xf]
  %v64 = vld [vmem:[%s0 + $0x94] sm:$0xf]
  %v65 = vld [vmem:[%s0 + $0x98] sm:$0xf]
  %v66 = vld [vmem:[%s0 + $0x9c] sm:$0xf]
  %v67 = vld [vmem:[%s0 + $0xa0] sm:$0xf]
  %v68 = vld [vmem:[%s0 + $0xa4] sm:$0xf]
  %v69 = vld [vmem:[%s0 + $0xa8] sm:$0xf]
  %v70 = vld [vmem:[%s0 + $0xac] sm:$0xf]
  %v71 = vld [vmem:[%s0 + $0xb0] sm:$0xf]
  %v72 = vld [vmem:[%s0 + $0xb4] sm:$0xf]
  %v73 = vld [vmem:[%s0 + $0xb8] sm:$0xf]
  %v74 = vld [vmem:[%s0 + $0xbc] sm:$0xf]
  %v75 = vld [vmem:[%s0 + $0xc0] sm:$0xf]
  %v76 = vld [vmem:[%s0 + $0xc4] sm:$0xf]
  %v77 = vld [vmem:[%s0 + $0xc8] sm:$0xf]
  %v78 = vld [vmem:[%s0 + $0xcc] sm:$0xf]
  %v79 = vld [vmem:[%s0 + $0xd0] sm:$0xf]
  %v80 = vld [vmem:[%s0 + $0xd4] sm:$0xf]
  %v81 = vld [vmem:[%s0 + $0xd8] sm:$0xf]
  %v82 = vld [vmem:[%s0 + $0xdc] sm:$0xf]
  %v83 = vld [vmem:[%s0 + $0xe0] sm:$0xf]
  %v84 = vld [vmem:[%s0 + $0xe4] sm:$0xf]
  %v85 = vld [vmem:[%s0 + $0xe8] sm:$0xf]
  %v86 = vld [vmem:[%s0 + $0xec] sm:$0xf]
  %v87 = vld [vmem:[%s0 + $0xf0] sm:$0xf]
  %v88 = vld [vmem:[%s0 + $0xf4] sm:$0xf]
  %v89 = vld [vmem:[%s0 + $0xf8] sm:$0xf]
  %v90 = vld [vmem:[%s0 + $0xfc] sm:$0xf]
  %v91 = vld [vmem:[%s1] sm:$0xf]
  %v92 = vld [vmem:[%s1 + $0x4] sm:$0xf]
  %v93 = vld [vmem:[%s1 + $0x8] sm:$0xf]
  %v94 = vld [vmem:[%s1 + $0xc] sm:$0xf]
  %v95 = vld [vmem:[%s1 + $0x10] sm:$0xf]
  %v96 = vld [vmem:[%s1 + $0x14] sm:$0xf]
  %v97 = vld [vmem:[%s1 + $0x18] sm:$0xf]
  %v98 = vld [vmem:[%s1 + $0x1c] sm:$0xf]
  %v99 = vld [vmem:[%s2] sm:$0x1]
  %v101 = vlaneseq
  %v102 = vshrl.u32 %v101, 7
  %v103 = vsub.s32 0, %v102
  %v104 = vrot.slane %v99, %v103
  %v170 = vunpack.c.l.b16 %v27
  %v171 = vunpack.c.l.b16 %v28
  %v172 = vunpack.c.l.b16 %v29
  %v173 = vunpack.c.l.b16 %v30
  %v174 = vunpack.c.l.b16 %v31
  %v175 = vunpack.c.l.b16 %v32
  %v176 = vunpack.c.l.b16 %v33
  %v177 = vunpack.c.l.b16 %v34
  %v178 = vunpack.c.l.b16 %v35
  %v179 = vunpack.c.l.b16 %v36
  %v180 = vunpack.c.l.b16 %v37
  %v181 = vunpack.c.l.b16 %v38
  %v182 = vunpack.c.l.b16 %v39
  %v183 = vunpack.c.l.b16 %v40
  %v184 = vunpack.c.l.b16 %v41
  %v185 = vunpack.c.l.b16 %v42
  %v186 = vunpack.c.l.b16 %v43
  %v187 = vunpack.c.l.b16 %v44
  %v188 = vunpack.c.l.b16 %v45
  %v189 = vunpack.c.l.b16 %v46
  %v190 = vunpack.c.l.b16 %v47
  %v191 = vunpack.c.l.b16 %v48
  %v192 = vunpack.c.l.b16 %v49
  %v193 = vunpack.c.l.b16 %v50
  %v194 = vunpack.c.l.b16 %v51
  %v195 = vunpack.c.l.b16 %v52
  %v196 = vunpack.c.l.b16 %v53
  %v197 = vunpack.c.l.b16 %v54
  %v198 = vunpack.c.l.b16 %v55
  %v199 = vunpack.c.l.b16 %v56
  %v200 = vunpack.c.l.b16 %v57
  %v201 = vunpack.c.l.b16 %v58
  %v202 = vunpack.c.l.b16 %v59
  %v203 = vunpack.c.l.b16 %v60
  %v204 = vunpack.c.l.b16 %v61
  %v205 = vunpack.c.l.b16 %v62
  %v206 = vunpack.c.l.b16 %v63
  %v207 = vunpack.c.l.b16 %v64
  %v208 = vunpack.c.l.b16 %v65
  %v209 = vunpack.c.l.b16 %v66
  %v210 = vunpack.c.l.b16 %v67
  %v211 = vunpack.c.l.b16 %v68
  %v212 = vunpack.c.l.b16 %v69
  %v213 = vunpack.c.l.b16 %v70
  %v214 = vunpack.c.l.b16 %v71
  %v215 = vunpack.c.l.b16 %v72
  %v216 = vunpack.c.l.b16 %v73
  %v217 = vunpack.c.l.b16 %v74
  %v218 = vunpack.c.l.b16 %v75
  %v219 = vunpack.c.l.b16 %v76
  %v220 = vunpack.c.l.b16 %v77
  %v221 = vunpack.c.l.b16 %v78
  %v222 = vunpack.c.l.b16 %v79
  %v223 = vunpack.c.l.b16 %v80
  %v224 = vunpack.c.l.b16 %v81
  %v225 = vunpack.c.l.b16 %v82
  %v226 = vunpack.c.l.b16 %v83
  %v227 = vunpack.c.l.b16 %v84
  %v228 = vunpack.c.l.b16 %v85
  %v229 = vunpack.c.l.b16 %v86
  %v230 = vunpack.c.l.b16 %v87
  %v231 = vunpack.c.l.b16 %v88
  %v232 = vunpack.c.l.b16 %v89
  %v233 = vunpack.c.l.b16 %v90
  %v234 = vpack.c.b16 %v171, %v170
  %v235 = vpack.c.b16 %v173, %v172
  %v236 = vpack.c.b16 %v175, %v174
  %v237 = vpack.c.b16 %v177, %v176
  %v238 = vpack.c.b16 %v179, %v178
  %v239 = vpack.c.b16 %v181, %v180
  %v240 = vpack.c.b16 %v183, %v182
  %v241 = vpack.c.b16 %v185, %v184
  %v242 = vpack.c.b16 %v187, %v186
  %v243 = vpack.c.b16 %v189, %v188
  %v244 = vpack.c.b16 %v191, %v190
  %v245 = vpack.c.b16 %v193, %v192
  %v246 = vpack.c.b16 %v195, %v194
  %v247 = vpack.c.b16 %v197, %v196
  %v248 = vpack.c.b16 %v199, %v198
  %v249 = vpack.c.b16 %v201, %v200
  %v250 = vpack.c.b16 %v203, %v202
  %v251 = vpack.c.b16 %v205, %v204
  %v252 = vpack.c.b16 %v207, %v206
  %v253 = vpack.c.b16 %v209, %v208
  %v254 = vpack.c.b16 %v211, %v210
  %v255 = vpack.c.b16 %v213, %v212
  %v256 = vpack.c.b16 %v215, %v214
  %v257 = vpack.c.b16 %v217, %v216
  %v258 = vpack.c.b16 %v219, %v218
  %v259 = vpack.c.b16 %v221, %v220
  %v260 = vpack.c.b16 %v223, %v222
  %v261 = vpack.c.b16 %v225, %v224
  %v262 = vpack.c.b16 %v227, %v226
  %v263 = vpack.c.b16 %v229, %v228
  %v264 = vpack.c.b16 %v231, %v230
  %v265 = vpack.c.b16 %v233, %v232
  %v274 = vunpack.c.l.b16 %v91
  %v275 = vunpack.c.l.b16 %v92
  %v276 = vunpack.c.l.b16 %v93
  %v277 = vunpack.c.l.b16 %v94
  %v278 = vunpack.c.l.b16 %v95
  %v279 = vunpack.c.l.b16 %v96
  %v280 = vunpack.c.l.b16 %v97
  %v281 = vunpack.c.l.b16 %v98
  %v282 = vpack.c.b16 %v275, %v274
  %v283 = vpack.c.b16 %v277, %v276
  %v284 = vpack.c.b16 %v279, %v278
  %v285 = vpack.c.b16 %v281, %v280
  %vm290 = vcmask 523264
  %v292 = vsel %vm290, %v234, 0
  %v295 = vsel %vm290, %v235, 0
  %v298 = vsel %vm290, %v236, 0
  %v301 = vsel %vm290, %v237, 0
  %v304 = vsel %vm290, %v238, 0
  %v307 = vsel %vm290, %v239, 0
  %v310 = vsel %vm290, %v240, 0
  %v313 = vsel %vm290, %v241, 0
  %v316 = vsel %vm290, %v242, 0
  %v319 = vsel %vm290, %v243, 0
  %v322 = vsel %vm290, %v244, 0
  %v325 = vsel %vm290, %v245, 0
  %v328 = vsel %vm290, %v246, 0
  %v331 = vsel %vm290, %v247, 0
  %v334 = vsel %vm290, %v248, 0
  %v337 = vsel %vm290, %v249, 0
  %v340 = vsel %vm290, %v250, 0
  %v343 = vsel %vm290, %v251, 0
  %v346 = vsel %vm290, %v252, 0
  %v349 = vsel %vm290, %v253, 0
  %v352 = vsel %vm290, %v254, 0
  %v355 = vsel %vm290, %v255, 0
  %v358 = vsel %vm290, %v256, 0
  %v361 = vsel %vm290, %v257, 0
  %v364 = vsel %vm290, %v258, 0
  %v367 = vsel %vm290, %v259, 0
  %v370 = vsel %vm290, %v260, 0
  %v373 = vsel %vm290, %v261, 0
  %v376 = vsel %vm290, %v262, 0
  %v379 = vsel %vm290, %v263, 0
  %v382 = vsel %vm290, %v264, 0
  %v385 = vsel %vm290, %v265, 0
  %387 = vmatprep.subr.bf16.mxu0 0
  %388 = vmatpush1.bf16.msra.mxu0 0
  %389 = vmatprep.subr.bf16.mxu0 0
  %390 = vmatpush1.bf16.msra.mxu0 0
  %391 = vmatprep.subr.bf16.mxu0 0
  %392 = vmatpush1.bf16.msra.mxu0 0
  %393 = vmatprep.subr.bf16.mxu0 0
  %394 = vmatpush1.bf16.msra.mxu0 0
  %395 = vmatprep.subr.bf16.mxu0 0
  %396 = vmatpush1.bf16.msra.mxu0 %v285
  %397 = vmatprep.subr.bf16.mxu0 0
  %398 = vmatpush1.bf16.msra.mxu0 %v284
  %399 = vmatprep.subr.bf16.mxu0 0
  %400 = vmatpush1.bf16.msra.mxu0 %v283
  %401 = vmatprep.subr.bf16.mxu0 0
  %402 = vmatpush1.bf16.msra.mxu0 %v282
  %403 = vmatprep.subr.bf16.mxu0 0
  %404 = vmatpush2.bf16.msra.mxu0 0
  %405 = vmatprep.subr.bf16.mxu0 0
  %406 = vmatpush2.bf16.msra.mxu0 0
  %407 = vmatprep.subr.bf16.mxu0 0
  %408 = vmatpush2.bf16.msra.mxu0 0
  %409 = vmatprep.subr.bf16.mxu0 0
  %410 = vmatpush2.bf16.msra.mxu0 0
  %411 = vmatprep.subr.bf16.mxu0 0
  %412 = vmatpush2.bf16.msra.mxu0 0
  %413 = vmatprep.subr.bf16.mxu0 0
  %414 = vmatpush2.bf16.msra.mxu0 0
  %415 = vmatprep.subr.bf16.mxu0 0
  %416 = vmatpush2.bf16.msra.mxu0 0
  %417 = vmatprep.subr.bf16.mxu0 0
  %418 = vmatpush2.bf16.msra.mxu0 0
  %419 = vmatprep.mubr.bf16.mxu0 0
  %420 = vmatmul.mubr.bf16.gmra.mxu0 %v292
  %v421 = vpop.f32.mrf.mxu0
  %v422 = vadd.f32 %v104, %v421
  %v423 = vpop.f32.mrf.mxu0
  %v424 = vpop.f32.mrf.mxu0
  %v425 = vadd.f32 %v104, %v424
  %v426 = vpop.f32.mrf.mxu0
  %427 = vmatprep.mubr.bf16.mxu0 0
  %428 = vmatmul.mubr.bf16.gmra.mxu0 %v295
  %v429 = vpop.f32.mrf.mxu0
  %v430 = vadd.f32 %v104, %v429
  %v431 = vpop.f32.mrf.mxu0
  %v432 = vpop.f32.mrf.mxu0
  %v433 = vadd.f32 %v104, %v432
  %v434 = vpop.f32.mrf.mxu0
  %435 = vmatprep.mubr.bf16.mxu0 0
  %436 = vmatmul.mubr.bf16.gmra.mxu0 %v298
  %v437 = vpop.f32.mrf.mxu0
  %v438 = vadd.f32 %v104, %v437
  %v439 = vpop.f32.mrf.mxu0
  %v440 = vpop.f32.mrf.mxu0
  %v441 = vadd.f32 %v104, %v440
  %v442 = vpop.f32.mrf.mxu0
  %443 = vmatprep.mubr.bf16.mxu0 0
  %444 = vmatmul.mubr.bf16.gmra.mxu0 %v301
  %v445 = vpop.f32.mrf.mxu0
  %v446 = vadd.f32 %v104, %v445
  %v447 = vpop.f32.mrf.mxu0
  %v448 = vpop.f32.mrf.mxu0
  %v449 = vadd.f32 %v104, %v448
  %v450 = vpop.f32.mrf.mxu0
  %451 = vmatprep.mubr.bf16.mxu0 0
  %452 = vmatmul.mubr.bf16.gmra.mxu0 %v304
  %v453 = vpop.f32.mrf.mxu0
  %v454 = vadd.f32 %v104, %v453
  %v455 = vpop.f32.mrf.mxu0
  %v456 = vpop.f32.mrf.mxu0
  %v457 = vadd.f32 %v104, %v456
  %v458 = vpop.f32.mrf.mxu0
  %459 = vmatprep.mubr.bf16.mxu0 0
  %460 = vmatmul.mubr.bf16.gmra.mxu0 %v307
  %v461 = vpop.f32.mrf.mxu0
  %v462 = vadd.f32 %v104, %v461
  %v463 = vpop.f32.mrf.mxu0
  %v464 = vpop.f32.mrf.mxu0
  %v465 = vadd.f32 %v104, %v464
  %v466 = vpop.f32.mrf.mxu0
  %467 = vmatprep.mubr.bf16.mxu0 0
  %468 = vmatmul.mubr.bf16.gmra.mxu0 %v310
  %v469 = vpop.f32.mrf.mxu0
  %v470 = vadd.f32 %v104, %v469
  %v471 = vpop.f32.mrf.mxu0
  %v472 = vpop.f32.mrf.mxu0
  %v473 = vadd.f32 %v104, %v472
  %v474 = vpop.f32.mrf.mxu0
  %475 = vmatprep.mubr.bf16.mxu0 0
  %476 = vmatmul.mubr.bf16.gmra.mxu0 %v313
  %v477 = vpop.f32.mrf.mxu0
  %v478 = vadd.f32 %v104, %v477
  %v479 = vpop.f32.mrf.mxu0
  %v480 = vpop.f32.mrf.mxu0
  %v481 = vadd.f32 %v104, %v480
  %v482 = vpop.f32.mrf.mxu0
  %483 = vmatprep.mubr.bf16.mxu0 0
  %484 = vmatmul.mubr.bf16.gmra.mxu0 %v316
  %v485 = vpop.f32.mrf.mxu0
  %v486 = vadd.f32 %v104, %v485
  %v487 = vpop.f32.mrf.mxu0
  %v488 = vpop.f32.mrf.mxu0
  %v489 = vadd.f32 %v104, %v488
  %v490 = vpop.f32.mrf.mxu0
  %491 = vmatprep.mubr.bf16.mxu0 0
  %492 = vmatmul.mubr.bf16.gmra.mxu0 %v319
  %v493 = vpop.f32.mrf.mxu0
  %v494 = vadd.f32 %v104, %v493
  %v495 = vpop.f32.mrf.mxu0
  %v496 = vpop.f32.mrf.mxu0
  %v497 = vadd.f32 %v104, %v496
  %v498 = vpop.f32.mrf.mxu0
  %499 = vmatprep.mubr.bf16.mxu0 0
  %500 = vmatmul.mubr.bf16.gmra.mxu0 %v322
  %v501 = vpop.f32.mrf.mxu0
  %v502 = vadd.f32 %v104, %v501
  %v503 = vpop.f32.mrf.mxu0
  %v504 = vpop.f32.mrf.mxu0
  %v505 = vadd.f32 %v104, %v504
  %v506 = vpop.f32.mrf.mxu0
  %507 = vmatprep.mubr.bf16.mxu0 0
  %508 = vmatmul.mubr.bf16.gmra.mxu0 %v325
  %v509 = vpop.f32.mrf.mxu0
  %v510 = vadd.f32 %v104, %v509
  %v511 = vpop.f32.mrf.mxu0
  %v512 = vpop.f32.mrf.mxu0
  %v513 = vadd.f32 %v104, %v512
  %v514 = vpop.f32.mrf.mxu0
  %515 = vmatprep.mubr.bf16.mxu0 0
  %516 = vmatmul.mubr.bf16.gmra.mxu0 %v328
  %v517 = vpop.f32.mrf.mxu0
  %v518 = vadd.f32 %v104, %v517
  %v519 = vpop.f32.mrf.mxu0
  %v520 = vpop.f32.mrf.mxu0
  %v521 = vadd.f32 %v104, %v520
  %v522 = vpop.f32.mrf.mxu0
  %523 = vmatprep.mubr.bf16.mxu0 0
  %524 = vmatmul.mubr.bf16.gmra.mxu0 %v331
  %v525 = vpop.f32.mrf.mxu0
  %v526 = vadd.f32 %v104, %v525
  %v527 = vpop.f32.mrf.mxu0
  %v528 = vpop.f32.mrf.mxu0
  %v529 = vadd.f32 %v104, %v528
  %v530 = vpop.f32.mrf.mxu0
  %531 = vmatprep.mubr.bf16.mxu0 0
  %532 = vmatmul.mubr.bf16.gmra.mxu0 %v334
  %v533 = vpop.f32.mrf.mxu0
  %v534 = vadd.f32 %v104, %v533
  %v535 = vpop.f32.mrf.mxu0
  %v536 = vpop.f32.mrf.mxu0
  %v537 = vadd.f32 %v104, %v536
  %v538 = vpop.f32.mrf.mxu0
  %539 = vmatprep.mubr.bf16.mxu0 0
  %540 = vmatmul.mubr.bf16.gmra.mxu0 %v337
  %v541 = vpop.f32.mrf.mxu0
  %v542 = vadd.f32 %v104, %v541
  %v543 = vpop.f32.mrf.mxu0
  %v544 = vpop.f32.mrf.mxu0
  %v545 = vadd.f32 %v104, %v544
  %v546 = vpop.f32.mrf.mxu0
  %547 = vmatprep.mubr.bf16.mxu0 0
  %548 = vmatmul.mubr.bf16.gmra.mxu0 %v340
  %v549 = vpop.f32.mrf.mxu0
  %v550 = vadd.f32 %v104, %v549
  %v551 = vpop.f32.mrf.mxu0
  %v552 = vpop.f32.mrf.mxu0
  %v553 = vadd.f32 %v104, %v552
  %v554 = vpop.f32.mrf.mxu0
  %555 = vmatprep.mubr.bf16.mxu0 0
  %556 = vmatmul.mubr.bf16.gmra.mxu0 %v343
  %v557 = vpop.f32.mrf.mxu0
  %v558 = vadd.f32 %v104, %v557
  %v559 = vpop.f32.mrf.mxu0
  %v560 = vpop.f32.mrf.mxu0
  %v561 = vadd.f32 %v104, %v560
  %v562 = vpop.f32.mrf.mxu0
  %563 = vmatprep.mubr.bf16.mxu0 0
  %564 = vmatmul.mubr.bf16.gmra.mxu0 %v346
  %v565 = vpop.f32.mrf.mxu0
  %v566 = vadd.f32 %v104, %v565
  %v567 = vpop.f32.mrf.mxu0
  %v568 = vpop.f32.mrf.mxu0
  %v569 = vadd.f32 %v104, %v568
  %v570 = vpop.f32.mrf.mxu0
  %571 = vmatprep.mubr.bf16.mxu0 0
  %572 = vmatmul.mubr.bf16.gmra.mxu0 %v349
  %v573 = vpop.f32.mrf.mxu0
  %v574 = vadd.f32 %v104, %v573
  %v575 = vpop.f32.mrf.mxu0
  %v576 = vpop.f32.mrf.mxu0
  %v577 = vadd.f32 %v104, %v576
  %v578 = vpop.f32.mrf.mxu0
  %579 = vmatprep.mubr.bf16.mxu0 0
  %580 = vmatmul.mubr.bf16.gmra.mxu0 %v352
  %v581 = vpop.f32.mrf.mxu0
  %v582 = vadd.f32 %v104, %v581
  %v583 = vpop.f32.mrf.mxu0
  %v584 = vpop.f32.mrf.mxu0
  %v585 = vadd.f32 %v104, %v584
  %v586 = vpop.f32.mrf.mxu0
  %587 = vmatprep.mubr.bf16.mxu0 0
  %588 = vmatmul.mubr.bf16.gmra.mxu0 %v355
  %v589 = vpop.f32.mrf.mxu0
  %v590 = vadd.f32 %v104, %v589
  %v591 = vpop.f32.mrf.mxu0
  %v592 = vpop.f32.mrf.mxu0
  %v593 = vadd.f32 %v104, %v592
  %v594 = vpop.f32.mrf.mxu0
  %595 = vmatprep.mubr.bf16.mxu0 0
  %596 = vmatmul.mubr.bf16.gmra.mxu0 %v358
  %v597 = vpop.f32.mrf.mxu0
  %v598 = vadd.f32 %v104, %v597
  %v599 = vpop.f32.mrf.mxu0
  %v600 = vpop.f32.mrf.mxu0
  %v601 = vadd.f32 %v104, %v600
  %v602 = vpop.f32.mrf.mxu0
  %603 = vmatprep.mubr.bf16.mxu0 0
  %604 = vmatmul.mubr.bf16.gmra.mxu0 %v361
  %v605 = vpop.f32.mrf.mxu0
  %v606 = vadd.f32 %v104, %v605
  %v607 = vpop.f32.mrf.mxu0
  %v608 = vpop.f32.mrf.mxu0
  %v609 = vadd.f32 %v104, %v608
  %v610 = vpop.f32.mrf.mxu0
  %611 = vmatprep.mubr.bf16.mxu0 0
  %612 = vmatmul.mubr.bf16.gmra.mxu0 %v364
  %v613 = vpop.f32.mrf.mxu0
  %v614 = vadd.f32 %v104, %v613
  %v615 = vpop.f32.mrf.mxu0
  %v616 = vpop.f32.mrf.mxu0
  %v617 = vadd.f32 %v104, %v616
  %v618 = vpop.f32.mrf.mxu0
  %619 = vmatprep.mubr.bf16.mxu0 0
  %620 = vmatmul.mubr.bf16.gmra.mxu0 %v367
  %v621 = vpop.f32.mrf.mxu0
  %v622 = vadd.f32 %v104, %v621
  %v623 = vpop.f32.mrf.mxu0
  %v624 = vpop.f32.mrf.mxu0
  %v625 = vadd.f32 %v104, %v624
  %v626 = vpop.f32.mrf.mxu0
  %627 = vmatprep.mubr.bf16.mxu0 0
  %628 = vmatmul.mubr.bf16.gmra.mxu0 %v370
  %v629 = vpop.f32.mrf.mxu0
  %v630 = vadd.f32 %v104, %v629
  %v631 = vpop.f32.mrf.mxu0
  %v632 = vpop.f32.mrf.mxu0
  %v633 = vadd.f32 %v104, %v632
  %v634 = vpop.f32.mrf.mxu0
  %635 = vmatprep.mubr.bf16.mxu0 0
  %636 = vmatmul.mubr.bf16.gmra.mxu0 %v373
  %v637 = vpop.f32.mrf.mxu0
  %v638 = vadd.f32 %v104, %v637
  %v639 = vpop.f32.mrf.mxu0
  %v640 = vpop.f32.mrf.mxu0
  %v641 = vadd.f32 %v104, %v640
  %v642 = vpop.f32.mrf.mxu0
  %643 = vmatprep.mubr.bf16.mxu0 0
  %644 = vmatmul.mubr.bf16.gmra.mxu0 %v376
  %v645 = vpop.f32.mrf.mxu0
  %v646 = vadd.f32 %v104, %v645
  %v647 = vpop.f32.mrf.mxu0
  %v648 = vpop.f32.mrf.mxu0
  %v649 = vadd.f32 %v104, %v648
  %v650 = vpop.f32.mrf.mxu0
  %651 = vmatprep.mubr.bf16.mxu0 0
  %652 = vmatmul.mubr.bf16.gmra.mxu0 %v379
  %v653 = vpop.f32.mrf.mxu0
  %v654 = vadd.f32 %v104, %v653
  %v655 = vpop.f32.mrf.mxu0
  %v656 = vpop.f32.mrf.mxu0
  %v657 = vadd.f32 %v104, %v656
  %v658 = vpop.f32.mrf.mxu0
  %659 = vmatprep.mubr.bf16.mxu0 0
  %660 = vmatmul.mubr.bf16.gmra.mxu0 %v382
  %v661 = vpop.f32.mrf.mxu0
  %v662 = vadd.f32 %v104, %v661
  %v663 = vpop.f32.mrf.mxu0
  %v664 = vpop.f32.mrf.mxu0
  %v665 = vadd.f32 %v104, %v664
  %v666 = vpop.f32.mrf.mxu0
  %667 = vmatprep.mubr.bf16.mxu0 0
  %668 = vmatmul.mubr.bf16.gmra.mxu0 %v385
  %v669 = vpop.f32.mrf.mxu0
  %v670 = vadd.f32 %v104, %v669
  %v671 = vpop.f32.mrf.mxu0
  %v672 = vpop.f32.mrf.mxu0
  %v673 = vadd.f32 %v104, %v672
  %v674 = vpop.f32.mrf.mxu0
  %675 = vdwg.mxu0
  %v676 = vmax.f32 %v422, 0.0
  %v677 = vmax.f32 %v425, 0.0
  %v678 = vmax.f32 %v430, 0.0
  %v679 = vmax.f32 %v433, 0.0
  %v680 = vmax.f32 %v438, 0.0
  %v681 = vmax.f32 %v441, 0.0
  %v682 = vmax.f32 %v446, 0.0
  %v683 = vmax.f32 %v449, 0.0
  %v684 = vmax.f32 %v454, 0.0
  %v685 = vmax.f32 %v457, 0.0
  %v686 = vmax.f32 %v462, 0.0
  %v687 = vmax.f32 %v465, 0.0
  %v688 = vmax.f32 %v470, 0.0
  %v689 = vmax.f32 %v473, 0.0
  %v690 = vmax.f32 %v478, 0.0
  %v691 = vmax.f32 %v481, 0.0
  %v692 = vmax.f32 %v486, 0.0
  %v693 = vmax.f32 %v489, 0.0
  %v694 = vmax.f32 %v494, 0.0
  %v695 = vmax.f32 %v497, 0.0
  %v696 = vmax.f32 %v502, 0.0
  %v697 = vmax.f32 %v505, 0.0
  %v698 = vmax.f32 %v510, 0.0
  %v699 = vmax.f32 %v513, 0.0
  %v700 = vmax.f32 %v518, 0.0
  %v701 = vmax.f32 %v521, 0.0
  %v702 = vmax.f32 %v526, 0.0
  %v703 = vmax.f32 %v529, 0.0
  %v704 = vmax.f32 %v534, 0.0
  %v705 = vmax.f32 %v537, 0.0
  %v706 = vmax.f32 %v542, 0.0
  %v707 = vmax.f32 %v545, 0.0
  %v708 = vmax.f32 %v550, 0.0
  %v709 = vmax.f32 %v553, 0.0
  %v710 = vmax.f32 %v558, 0.0
  %v711 = vmax.f32 %v561, 0.0
  %v712 = vmax.f32 %v566, 0.0
  %v713 = vmax.f32 %v569, 0.0
  %v714 = vmax.f32 %v574, 0.0
  %v715 = vmax.f32 %v577, 0.0
  %v716 = vmax.f32 %v582, 0.0
  %v717 = vmax.f32 %v585, 0.0
  %v718 = vmax.f32 %v590, 0.0
  %v719 = vmax.f32 %v593, 0.0
  %v720 = vmax.f32 %v598, 0.0
  %v721 = vmax.f32 %v601, 0.0
  %v722 = vmax.f32 %v606, 0.0
  %v723 = vmax.f32 %v609, 0.0
  %v724 = vmax.f32 %v614, 0.0
  %v725 = vmax.f32 %v617, 0.0
  %v726 = vmax.f32 %v622, 0.0
  %v727 = vmax.f32 %v625, 0.0
  %v728 = vmax.f32 %v630, 0.0
  %v729 = vmax.f32 %v633, 0.0
  %v730 = vmax.f32 %v638, 0.0
  %v731 = vmax.f32 %v641, 0.0
  %v732 = vmax.f32 %v646, 0.0
  %v733 = vmax.f32 %v649, 0.0
  %v734 = vmax.f32 %v654, 0.0
  %v735 = vmax.f32 %v657, 0.0
  %v736 = vmax.f32 %v662, 0.0
  %v737 = vmax.f32 %v665, 0.0
  %v738 = vmax.f32 %v670, 0.0
  %v739 = vmax.f32 %v673, 0.0
  %vm740 = vcmask 388096
  %741 = vst.msk [vmem:[#allocation2] sm:$0xf] %vm740, 0
  %742 = vst.msk [vmem:[#allocation2 + $0x4] sm:$0xf] %vm740, 0
  %743 = vst.msk [vmem:[#allocation2 + $0x90] sm:$0xf] %vm740, 0
  %744 = vst.msk [vmem:[#allocation2 + $0x94] sm:$0xf] %vm740, 0
  %s745 = scalar_lea.vmem [#allocation2], 136
  %746 = vst.msk [vmem:[%s745] sm:$0xf] %vm740, 0
  %747 = vst.msk [vmem:[%s745 + $0x4] sm:$0xf] %vm740, 0
  %748 = vst.msk [vmem:[%s745 + $0x90] sm:$0xf] %vm740, 0
  %749 = vst.msk [vmem:[%s745 + $0x94] sm:$0xf] %vm740, 0
  %v750 = vpack.c.bf16 %v677, %v676
  %v751 = vpack.c.bf16 %v679, %v678
  %v752 = vpack.c.bf16 %v681, %v680
  %v753 = vpack.c.bf16 %v683, %v682
  %v754 = vpack.c.bf16 %v685, %v684
  %v755 = vpack.c.bf16 %v687, %v686
  %v756 = vpack.c.bf16 %v689, %v688
  %v757 = vpack.c.bf16 %v691, %v690
  %v758 = vpack.c.bf16 %v693, %v692
  %v759 = vpack.c.bf16 %v695, %v694
  %v760 = vpack.c.bf16 %v697, %v696
  %v761 = vpack.c.bf16 %v699, %v698
  %v762 = vpack.c.bf16 %v701, %v700
  %v763 = vpack.c.bf16 %v703, %v702
  %v764 = vpack.c.bf16 %v705, %v704
  %v765 = vpack.c.bf16 %v707, %v706
  %v766 = vpack.c.bf16 %v709, %v708
  %v767 = vpack.c.bf16 %v711, %v710
  %v768 = vpack.c.bf16 %v713, %v712
  %v769 = vpack.c.bf16 %v715, %v714
  %v770 = vpack.c.bf16 %v717, %v716
  %v771 = vpack.c.bf16 %v719, %v718
  %v772 = vpack.c.bf16 %v721, %v720
  %v773 = vpack.c.bf16 %v723, %v722
  %v774 = vpack.c.bf16 %v725, %v724
  %v775 = vpack.c.bf16 %v727, %v726
  %v776 = vpack.c.bf16 %v729, %v728
  %v777 = vpack.c.bf16 %v731, %v730
  %v778 = vpack.c.bf16 %v733, %v732
  %v779 = vpack.c.bf16 %v735, %v734
  %v780 = vpack.c.bf16 %v737, %v736
  %v781 = vpack.c.bf16 %v739, %v738
  %v814 = vunpack.c.l.b16 %v750
  %v815 = vunpack.c.h.b16 %v750
  %v816 = vunpack.c.l.b16 %v751
  %v817 = vunpack.c.h.b16 %v751
  %v818 = vunpack.c.l.b16 %v752
  %v819 = vunpack.c.h.b16 %v752
  %v820 = vunpack.c.l.b16 %v753
  %v821 = vunpack.c.h.b16 %v753
  %v822 = vunpack.c.l.b16 %v754
  %v823 = vunpack.c.h.b16 %v754
  %v824 = vunpack.c.l.b16 %v755
  %v825 = vunpack.c.h.b16 %v755
  %v826 = vunpack.c.l.b16 %v756
  %v827 = vunpack.c.h.b16 %v756
  %v828 = vunpack.c.l.b16 %v757
  %v829 = vunpack.c.h.b16 %v757
  %v830 = vunpack.c.l.b16 %v758
  %v831 = vunpack.c.h.b16 %v758
  %v832 = vunpack.c.l.b16 %v759
  %v833 = vunpack.c.h.b16 %v759
  %v834 = vunpack.c.l.b16 %v760
  %v835 = vunpack.c.h.b16 %v760
  %v836 = vunpack.c.l.b16 %v761
  %v837 = vunpack.c.h.b16 %v761
  %v838 = vunpack.c.l.b16 %v762
  %v839 = vunpack.c.h.b16 %v762
  %v840 = vunpack.c.l.b16 %v763
  %v841 = vunpack.c.h.b16 %v763
  %v842 = vunpack.c.l.b16 %v764
  %v843 = vunpack.c.h.b16 %v764
  %v844 = vunpack.c.l.b16 %v765
  %v845 = vunpack.c.h.b16 %v765
  %v846 = vunpack.c.l.b16 %v766
  %v847 = vunpack.c.h.b16 %v766
  %v848 = vunpack.c.l.b16 %v767
  %v849 = vunpack.c.h.b16 %v767
  %v850 = vunpack.c.l.b16 %v768
  %v851 = vunpack.c.h.b16 %v768
  %v852 = vunpack.c.l.b16 %v769
  %v853 = vunpack.c.h.b16 %v769
  %v854 = vunpack.c.l.b16 %v770
  %v855 = vunpack.c.h.b16 %v770
  %v856 = vunpack.c.l.b16 %v771
  %v857 = vunpack.c.h.b16 %v771
  %v858 = vunpack.c.l.b16 %v772
  %v859 = vunpack.c.h.b16 %v772
  %v860 = vunpack.c.l.b16 %v773
  %v861 = vunpack.c.h.b16 %v773
  %v862 = vunpack.c.l.b16 %v774
  %v863 = vunpack.c.h.b16 %v774
  %v864 = vunpack.c.l.b16 %v775
  %v865 = vunpack.c.h.b16 %v775
  %v866 = vunpack.c.l.b16 %v776
  %v867 = vunpack.c.h.b16 %v776
  %v868 = vunpack.c.l.b16 %v777
  %v869 = vunpack.c.h.b16 %v777
  %v870 = vunpack.c.l.b16 %v778
  %v871 = vunpack.c.h.b16 %v778
  %v872 = vunpack.c.l.b16 %v779
  %v873 = vunpack.c.h.b16 %v779
  %v874 = vunpack.c.l.b16 %v780
  %v875 = vunpack.c.h.b16 %v780
  %v876 = vunpack.c.l.b16 %v781
  %v877 = vunpack.c.h.b16 %v781
  %v878 = vpack.c.b16 %v814, %v814
  %v879 = vpack.c.b16 %v815, %v815
  %v880 = vpack.c.b16 %v816, %v816
  %v881 = vpack.c.b16 %v817, %v817
  %v882 = vpack.c.b16 %v818, %v818
  %v883 = vpack.c.b16 %v819, %v819
  %v884 = vpack.c.b16 %v820, %v820
  %v885 = vpack.c.b16 %v821, %v821
  %v886 = vpack.c.b16 %v822, %v822
  %v887 = vpack.c.b16 %v823, %v823
  %v888 = vpack.c.b16 %v824, %v824
  %v889 = vpack.c.b16 %v825, %v825
  %v890 = vpack.c.b16 %v826, %v826
  %v891 = vpack.c.b16 %v827, %v827
  %v892 = vpack.c.b16 %v828, %v828
  %v893 = vpack.c.b16 %v829, %v829
  %v894 = vpack.c.b16 %v830, %v830
  %v895 = vpack.c.b16 %v831, %v831
  %v896 = vpack.c.b16 %v832, %v832
  %v897 = vpack.c.b16 %v833, %v833
  %v898 = vpack.c.b16 %v834, %v834
  %v899 = vpack.c.b16 %v835, %v835
  %v900 = vpack.c.b16 %v836, %v836
  %v901 = vpack.c.b16 %v837, %v837
  %v902 = vpack.c.b16 %v838, %v838
  %v903 = vpack.c.b16 %v839, %v839
  %v904 = vpack.c.b16 %v840, %v840
  %v905 = vpack.c.b16 %v841, %v841
  %v906 = vpack.c.b16 %v842, %v842
  %v907 = vpack.c.b16 %v843, %v843
  %v908 = vpack.c.b16 %v844, %v844
  %v909 = vpack.c.b16 %v845, %v845
  %v910 = vpack.c.b16 %v846, %v846
  %v911 = vpack.c.b16 %v847, %v847
  %v912 = vpack.c.b16 %v848, %v848
  %v913 = vpack.c.b16 %v849, %v849
  %v914 = vpack.c.b16 %v850, %v850
  %v915 = vpack.c.b16 %v851, %v851
  %v916 = vpack.c.b16 %v852, %v852
  %v917 = vpack.c.b16 %v853, %v853
  %v918 = vpack.c.b16 %v854, %v854
  %v919 = vpack.c.b16 %v855, %v855
  %v920 = vpack.c.b16 %v856, %v856
  %v921 = vpack.c.b16 %v857, %v857
  %v922 = vpack.c.b16 %v858, %v858
  %v923 = vpack.c.b16 %v859, %v859
  %v924 = vpack.c.b16 %v860, %v860
  %v925 = vpack.c.b16 %v861, %v861
  %v926 = vpack.c.b16 %v862, %v862
  %v927 = vpack.c.b16 %v863, %v863
  %v928 = vpack.c.b16 %v864, %v864
  %v929 = vpack.c.b16 %v865, %v865
  %v930 = vpack.c.b16 %v866, %v866
  %v931 = vpack.c.b16 %v867, %v867
  %v932 = vpack.c.b16 %v868, %v868
  %v933 = vpack.c.b16 %v869, %v869
  %v934 = vpack.c.b16 %v870, %v870
  %v935 = vpack.c.b16 %v871, %v871
  %v936 = vpack.c.b16 %v872, %v872
  %v937 = vpack.c.b16 %v873, %v873
  %v938 = vpack.c.b16 %v874, %v874
  %v939 = vpack.c.b16 %v875, %v875
  %v940 = vpack.c.b16 %v876, %v876
  %v941 = vpack.c.b16 %v877, %v877
  %942 = vrot.lane.b32.xlu0 %v878, 16
  %v943 = vpop.permute.xlu0 %942
  %944 = vrot.lane.b32.xlu0 %v879, 16
  %v945 = vpop.permute.xlu0 %944
  %946 = vrot.lane.b32.xlu0 %v880, 16
  %v947 = vpop.permute.xlu0 %946
  %948 = vrot.lane.b32.xlu0 %v881, 16
  %v949 = vpop.permute.xlu0 %948
  %950 = vrot.lane.b32.xlu0 %v882, 16
  %v951 = vpop.permute.xlu0 %950
  %952 = vrot.lane.b32.xlu0 %v883, 16
  %v953 = vpop.permute.xlu0 %952
  %954 = vrot.lane.b32.xlu0 %v884, 16
  %v955 = vpop.permute.xlu0 %954
  %956 = vrot.lane.b32.xlu0 %v885, 16
  %v957 = vpop.permute.xlu0 %956
  %958 = vrot.lane.b32.xlu0 %v886, 16
  %v959 = vpop.permute.xlu0 %958
  %960 = vrot.lane.b32.xlu0 %v887, 16
  %v961 = vpop.permute.xlu0 %960
  %962 = vrot.lane.b32.xlu0 %v888, 16
  %v963 = vpop.permute.xlu0 %962
  %964 = vrot.lane.b32.xlu0 %v889, 16
  %v965 = vpop.permute.xlu0 %964
  %966 = vrot.lane.b32.xlu0 %v890, 16
  %v967 = vpop.permute.xlu0 %966
  %968 = vrot.lane.b32.xlu0 %v891, 16
  %v969 = vpop.permute.xlu0 %968
  %970 = vrot.lane.b32.xlu0 %v892, 16
  %v971 = vpop.permute.xlu0 %970
  %972 = vrot.lane.b32.xlu0 %v893, 16
  %v973 = vpop.permute.xlu0 %972
  %974 = vrot.lane.b32.xlu0 %v894, 16
  %v975 = vpop.permute.xlu0 %974
  %976 = vrot.lane.b32.xlu0 %v895, 16
  %v977 = vpop.permute.xlu0 %976
  %978 = vrot.lane.b32.xlu0 %v896, 16
  %v979 = vpop.permute.xlu0 %978
  %980 = vrot.lane.b32.xlu0 %v897, 16
  %v981 = vpop.permute.xlu0 %980
  %982 = vrot.lane.b32.xlu0 %v898, 16
  %v983 = vpop.permute.xlu0 %982
  %984 = vrot.lane.b32.xlu0 %v899, 16
  %v985 = vpop.permute.xlu0 %984
  %986 = vrot.lane.b32.xlu0 %v900, 16
  %v987 = vpop.permute.xlu0 %986
  %988 = vrot.lane.b32.xlu0 %v901, 16
  %v989 = vpop.permute.xlu0 %988
  %990 = vrot.lane.b32.xlu0 %v902, 16
  %v991 = vpop.permute.xlu0 %990
  %992 = vrot.lane.b32.xlu0 %v903, 16
  %v993 = vpop.permute.xlu0 %992
  %994 = vrot.lane.b32.xlu0 %v904, 16
  %v995 = vpop.permute.xlu0 %994
  %996 = vrot.lane.b32.xlu0 %v905, 16
  %v997 = vpop.permute.xlu0 %996
  %998 = vrot.lane.b32.xlu0 %v906, 16
  %v999 = vpop.permute.xlu0 %998
  %1000 = vrot.lane.b32.xlu0 %v907, 16
  %v1001 = vpop.permute.xlu0 %1000
  %1002 = vrot.lane.b32.xlu0 %v908, 16
  %v1003 = vpop.permute.xlu0 %1002
  %1004 = vrot.lane.b32.xlu0 %v909, 16
  %v1005 = vpop.permute.xlu0 %1004
  %1006 = vrot.lane.b32.xlu0 %v910, 16
  %v1007 = vpop.permute.xlu0 %1006
  %1008 = vrot.lane.b32.xlu0 %v911, 16
  %v1009 = vpop.permute.xlu0 %1008
  %1010 = vrot.lane.b32.xlu0 %v912, 16
  %v1011 = vpop.permute.xlu0 %1010
  %1012 = vrot.lane.b32.xlu0 %v913, 16
  %v1013 = vpop.permute.xlu0 %1012
  %1014 = vrot.lane.b32.xlu0 %v914, 16
  %v1015 = vpop.permute.xlu0 %1014
  %1016 = vrot.lane.b32.xlu0 %v915, 16
  %v1017 = vpop.permute.xlu0 %1016
  %1018 = vrot.lane.b32.xlu0 %v916, 16
  %v1019 = vpop.permute.xlu0 %1018
  %1020 = vrot.lane.b32.xlu0 %v917, 16
  %v1021 = vpop.permute.xlu0 %1020
  %1022 = vrot.lane.b32.xlu0 %v918, 16
  %v1023 = vpop.permute.xlu0 %1022
  %1024 = vrot.lane.b32.xlu0 %v919, 16
  %v1025 = vpop.permute.xlu0 %1024
  %1026 = vrot.lane.b32.xlu0 %v920, 16
  %v1027 = vpop.permute.xlu0 %1026
  %1028 = vrot.lane.b32.xlu0 %v921, 16
  %v1029 = vpop.permute.xlu0 %1028
  %1030 = vrot.lane.b32.xlu0 %v922, 16
  %v1031 = vpop.permute.xlu0 %1030
  %1032 = vrot.lane.b32.xlu0 %v923, 16
  %v1033 = vpop.permute.xlu0 %1032
  %1034 = vrot.lane.b32.xlu0 %v924, 16
  %v1035 = vpop.permute.xlu0 %1034
  %1036 = vrot.lane.b32.xlu0 %v925, 16
  %v1037 = vpop.permute.xlu0 %1036
  %1038 = vrot.lane.b32.xlu0 %v926, 16
  %v1039 = vpop.permute.xlu0 %1038
  %1040 = vrot.lane.b32.xlu0 %v927, 16
  %v1041 = vpop.permute.xlu0 %1040
  %1042 = vrot.lane.b32.xlu0 %v928, 16
  %v1043 = vpop.permute.xlu0 %1042
  %1044 = vrot.lane.b32.xlu0 %v929, 16
  %v1045 = vpop.permute.xlu0 %1044
  %1046 = vrot.lane.b32.xlu0 %v930, 16
  %v1047 = vpop.permute.xlu0 %1046
  %1048 = vrot.lane.b32.xlu0 %v931, 16
  %v1049 = vpop.permute.xlu0 %1048
  %1050 = vrot.lane.b32.xlu0 %v932, 16
  %v1051 = vpop.permute.xlu0 %1050
  %1052 = vrot.lane.b32.xlu0 %v933, 16
  %v1053 = vpop.permute.xlu0 %1052
  %1054 = vrot.lane.b32.xlu0 %v934, 16
  %v1055 = vpop.permute.xlu0 %1054
  %1056 = vrot.lane.b32.xlu0 %v935, 16
  %v1057 = vpop.permute.xlu0 %1056
  %1058 = vrot.lane.b32.xlu0 %v936, 16
  %v1059 = vpop.permute.xlu0 %1058
  %1060 = vrot.lane.b32.xlu0 %v937, 16
  %v1061 = vpop.permute.xlu0 %1060
  %1062 = vrot.lane.b32.xlu0 %v938, 16
  %v1063 = vpop.permute.xlu0 %1062
  %1064 = vrot.lane.b32.xlu0 %v939, 16
  %v1065 = vpop.permute.xlu0 %1064
  %1066 = vrot.lane.b32.xlu0 %v940, 16
  %v1067 = vpop.permute.xlu0 %1066
  %1068 = vrot.lane.b32.xlu0 %v941, 16
  %v1069 = vpop.permute.xlu0 %1068
  %s1134 = scalar_lea.vmem [#allocation2], 8
  %vm1135 = vcmask 257152
  %1136 = vst.msk [vmem:[%s1134] sm:$0xf] %vm1135, %v943
  %1137 = vst.msk [vmem:[%s1134 + $0x4] sm:$0xf] %vm1135, %v945
  %1138 = vst.msk [vmem:[%s1134 + $0x8] sm:$0xf] %vm1135, %v947
  %1139 = vst.msk [vmem:[%s1134 + $0xc] sm:$0xf] %vm1135, %v949
  %1140 = vst.msk [vmem:[%s1134 + $0x10] sm:$0xf] %vm1135, %v951
  %1141 = vst.msk [vmem:[%s1134 + $0x14] sm:$0xf] %vm1135, %v953
  %1142 = vst.msk [vmem:[%s1134 + $0x18] sm:$0xf] %vm1135, %v955
  %1143 = vst.msk [vmem:[%s1134 + $0x1c] sm:$0xf] %vm1135, %v957
  %1144 = vst.msk [vmem:[%s1134 + $0x20] sm:$0xf] %vm1135, %v959
  %1145 = vst.msk [vmem:[%s1134 + $0x24] sm:$0xf] %vm1135, %v961
  %1146 = vst.msk [vmem:[%s1134 + $0x28] sm:$0xf] %vm1135, %v963
  %1147 = vst.msk [vmem:[%s1134 + $0x2c] sm:$0xf] %vm1135, %v965
  %1148 = vst.msk [vmem:[%s1134 + $0x30] sm:$0xf] %vm1135, %v967
  %1149 = vst.msk [vmem:[%s1134 + $0x34] sm:$0xf] %vm1135, %v969
  %1150 = vst.msk [vmem:[%s1134 + $0x38] sm:$0xf] %vm1135, %v971
  %1151 = vst.msk [vmem:[%s1134 + $0x3c] sm:$0xf] %vm1135, %v973
  %1152 = vst.msk [vmem:[%s1134 + $0x40] sm:$0xf] %vm1135, %v975
  %1153 = vst.msk [vmem:[%s1134 + $0x44] sm:$0xf] %vm1135, %v977
  %1154 = vst.msk [vmem:[%s1134 + $0x48] sm:$0xf] %vm1135, %v979
  %1155 = vst.msk [vmem:[%s1134 + $0x4c] sm:$0xf] %vm1135, %v981
  %1156 = vst.msk [vmem:[%s1134 + $0x50] sm:$0xf] %vm1135, %v983
  %1157 = vst.msk [vmem:[%s1134 + $0x54] sm:$0xf] %vm1135, %v985
  %1158 = vst.msk [vmem:[%s1134 + $0x58] sm:$0xf] %vm1135, %v987
  %1159 = vst.msk [vmem:[%s1134 + $0x5c] sm:$0xf] %vm1135, %v989
  %1160 = vst.msk [vmem:[%s1134 + $0x60] sm:$0xf] %vm1135, %v991
  %1161 = vst.msk [vmem:[%s1134 + $0x64] sm:$0xf] %vm1135, %v993
  %1162 = vst.msk [vmem:[%s1134 + $0x68] sm:$0xf] %vm1135, %v995
  %1163 = vst.msk [vmem:[%s1134 + $0x6c] sm:$0xf] %vm1135, %v997
  %1164 = vst.msk [vmem:[%s1134 + $0x70] sm:$0xf] %vm1135, %v999
  %1165 = vst.msk [vmem:[%s1134 + $0x74] sm:$0xf] %vm1135, %v1001
  %1166 = vst.msk [vmem:[%s1134 + $0x78] sm:$0xf] %vm1135, %v1003
  %1167 = vst.msk [vmem:[%s1134 + $0x7c] sm:$0xf] %vm1135, %v1005
  %1168 = vst.msk [vmem:[%s1134 + $0x90] sm:$0xf] %vm1135, %v1007
  %1169 = vst.msk [vmem:[%s1134 + $0x94] sm:$0xf] %vm1135, %v1009
  %1170 = vst.msk [vmem:[%s1134 + $0x98] sm:$0xf] %vm1135, %v1011
  %1171 = vst.msk [vmem:[%s1134 + $0x9c] sm:$0xf] %vm1135, %v1013
  %1172 = vst.msk [vmem:[%s1134 + $0xa0] sm:$0xf] %vm1135, %v1015
  %1173 = vst.msk [vmem:[%s1134 + $0xa4] sm:$0xf] %vm1135, %v1017
  %1174 = vst.msk [vmem:[%s1134 + $0xa8] sm:$0xf] %vm1135, %v1019
  %1175 = vst.msk [vmem:[%s1134 + $0xac] sm:$0xf] %vm1135, %v1021
  %1176 = vst.msk [vmem:[%s1134 + $0xb0] sm:$0xf] %vm1135, %v1023
  %1177 = vst.msk [vmem:[%s1134 + $0xb4] sm:$0xf] %vm1135, %v1025
  %1178 = vst.msk [vmem:[%s1134 + $0xb8] sm:$0xf] %vm1135, %v1027
  %1179 = vst.msk [vmem:[%s1134 + $0xbc] sm:$0xf] %vm1135, %v1029
  %1180 = vst.msk [vmem:[%s1134 + $0xc0] sm:$0xf] %vm1135, %v1031
  %1181 = vst.msk [vmem:[%s1134 + $0xc4] sm:$0xf] %vm1135, %v1033
  %1182 = vst.msk [vmem:[%s1134 + $0xc8] sm:$0xf] %vm1135, %v1035
  %1183 = vst.msk [vmem:[%s1134 + $0xcc] sm:$0xf] %vm1135, %v1037
  %1184 = vst.msk [vmem:[%s1134 + $0xd0] sm:$0xf] %vm1135, %v1039
  %1185 = vst.msk [vmem:[%s1134 + $0xd4] sm:$0xf] %vm1135, %v1041
  %1186 = vst.msk [vmem:[%s1134 + $0xd8] sm:$0xf] %vm1135, %v1043
  %1187 = vst.msk [vmem:[%s1134 + $0xdc] sm:$0xf] %vm1135, %v1045
  %1188 = vst.msk [vmem:[%s1134 + $0xe0] sm:$0xf] %vm1135, %v1047
  %1189 = vst.msk [vmem:[%s1134 + $0xe4] sm:$0xf] %vm1135, %v1049
  %1190 = vst.msk [vmem:[%s1134 + $0xe8] sm:$0xf] %vm1135, %v1051
  %1191 = vst.msk [vmem:[%s1134 + $0xec] sm:$0xf] %vm1135, %v1053
  %1192 = vst.msk [vmem:[%s1134 + $0xf0] sm:$0xf] %vm1135, %v1055
  %1193 = vst.msk [vmem:[%s1134 + $0xf4] sm:$0xf] %vm1135, %v1057
  %1194 = vst.msk [vmem:[%s1134 + $0xf8] sm:$0xf] %vm1135, %v1059
  %1195 = vst.msk [vmem:[%s1134 + $0xfc] sm:$0xf] %vm1135, %v1061
  %1196 = vst.msk [vmem:[%s1134 + $0x100] sm:$0xf] %vm1135, %v1063
  %1197 = vst.msk [vmem:[%s1134 + $0x104] sm:$0xf] %vm1135, %v1065
  %1198 = vst.msk [vmem:[%s1134 + $0x108] sm:$0xf] %vm1135, %v1067
  %1199 = vst.msk [vmem:[%s1134 + $0x10c] sm:$0xf] %vm1135, %v1069
  %vm1200 = vcmask 122880
  %vm1201 = vsmask.f32 256
  %vm1202 = vmand %vm1200, %vm1201
  %v1203 = vld [vmem:[%s1134] sm:$0x1]
  %v1204 = vsel %vm1202, 0, %v1203
  %1205 = vst [vmem:[%s1134] sm:$0x1] %v1204
  %v1206 = vld [vmem:[%s1134 + $0x8] sm:$0x1]
  %v1207 = vsel %vm1202, 0, %v1206
  %1208 = vst [vmem:[%s1134 + $0x8] sm:$0x1] %v1207
  %v1209 = vld [vmem:[%s1134 + $0x10] sm:$0x1]
  %v1210 = vsel %vm1202, 0, %v1209
  %1211 = vst [vmem:[%s1134 + $0x10] sm:$0x1] %v1210
  %v1212 = vld [vmem:[%s1134 + $0x18] sm:$0x1]
  %v1213 = vsel %vm1202, 0, %v1212
  %1214 = vst [vmem:[%s1134 + $0x18] sm:$0x1] %v1213
  %v1215 = vld [vmem:[%s1134 + $0x20] sm:$0x1]
  %v1216 = vsel %vm1202, 0, %v1215
  %1217 = vst [vmem:[%s1134 + $0x20] sm:$0x1] %v1216
  %v1218 = vld [vmem:[%s1134 + $0x28] sm:$0x1]
  %v1219 = vsel %vm1202, 0, %v1218
  %1220 = vst [vmem:[%s1134 + $0x28] sm:$0x1] %v1219
  %v1221 = vld [vmem:[%s1134 + $0x30] sm:$0x1]
  %v1222 = vsel %vm1202, 0, %v1221
  %1223 = vst [vmem:[%s1134 + $0x30] sm:$0x1] %v1222
  %v1224 = vld [vmem:[%s1134 + $0x38] sm:$0x1]
  %v1225 = vsel %vm1202, 0, %v1224
  %1226 = vst [vmem:[%s1134 + $0x38] sm:$0x1] %v1225
  %v1227 = vld [vmem:[%s1134 + $0x40] sm:$0x1]
  %v1228 = vsel %vm1202, 0, %v1227
  %1229 = vst [vmem:[%s1134 + $0x40] sm:$0x1] %v1228
  %v1230 = vld [vmem:[%s1134 + $0x48] sm:$0x1]
  %v1231 = vsel %vm1202, 0, %v1230
  %1232 = vst [vmem:[%s1134 + $0x48] sm:$0x1] %v1231
  %v1233 = vld [vmem:[%s1134 + $0x50] sm:$0x1]
  %v1234 = vsel %vm1202, 0, %v1233
  %1235 = vst [vmem:[%s1134 + $0x50] sm:$0x1] %v1234
  %v1236 = vld [vmem:[%s1134 + $0x58] sm:$0x1]
  %v1237 = vsel %vm1202, 0, %v1236
  %1238 = vst [vmem:[%s1134 + $0x58] sm:$0x1] %v1237
  %v1239 = vld [vmem:[%s1134 + $0x60] sm:$0x1]
  %v1240 = vsel %vm1202, 0, %v1239
  %1241 = vst [vmem:[%s1134 + $0x60] sm:$0x1] %v1240
  %v1242 = vld [vmem:[%s1134 + $0x68] sm:$0x1]
  %v1243 = vsel %vm1202, 0, %v1242
  %1244 = vst [vmem:[%s1134 + $0x68] sm:$0x1] %v1243
  %v1245 = vld [vmem:[%s1134 + $0x70] sm:$0x1]
  %v1246 = vsel %vm1202, 0, %v1245
  %1247 = vst [vmem:[%s1134 + $0x70] sm:$0x1] %v1246
  %v1248 = vld [vmem:[%s1134 + $0x78] sm:$0x1]
  %v1249 = vsel %vm1202, 0, %v1248
  %1250 = vst [vmem:[%s1134 + $0x78] sm:$0x1] %v1249
  %v1251 = vld [vmem:[%s1134 + $0x90] sm:$0x1]
  %v1252 = vsel %vm1202, 0, %v1251
  %1253 = vst [vmem:[%s1134 + $0x90] sm:$0x1] %v1252
  %v1254 = vld [vmem:[%s1134 + $0x98] sm:$0x1]
  %v1255 = vsel %vm1202, 0, %v1254
  %1256 = vst [vmem:[%s1134 + $0x98] sm:$0x1] %v1255
  %v1257 = vld [vmem:[%s1134 + $0xa0] sm:$0x1]
  %v1258 = vsel %vm1202, 0, %v1257
  %1259 = vst [vmem:[%s1134 + $0xa0] sm:$0x1] %v1258
  %v1260 = vld [vmem:[%s1134 + $0xa8] sm:$0x1]
  %v1261 = vsel %vm1202, 0, %v1260
  %1262 = vst [vmem:[%s1134 + $0xa8] sm:$0x1] %v1261
  %v1263 = vld [vmem:[%s1134 + $0xb0] sm:$0x1]
  %v1264 = vsel %vm1202, 0, %v1263
  %1265 = vst [vmem:[%s1134 + $0xb0] sm:$0x1] %v1264
  %v1266 = vld [vmem:[%s1134 + $0xb8] sm:$0x1]
  %v1267 = vsel %vm1202, 0, %v1266
  %1268 = vst [vmem:[%s1134 + $0xb8] sm:$0x1] %v1267
  %v1269 = vld [vmem:[%s1134 + $0xc0] sm:$0x1]
  %v1270 = vsel %vm1202, 0, %v1269
  %1271 = vst [vmem:[%s1134 + $0xc0] sm:$0x1] %v1270
  %v1272 = vld [vmem:[%s1134 + $0xc8] sm:$0x1]
  %v1273 = vsel %vm1202, 0, %v1272
  %1274 = vst [vmem:[%s1134 + $0xc8] sm:$0x1] %v1273
  %v1275 = vld [vmem:[%s1134 + $0xd0] sm:$0x1]
  %v1276 = vsel %vm1202, 0, %v1275
  %1277 = vst [vmem:[%s1134 + $0xd0] sm:$0x1] %v1276
  %v1278 = vld [vmem:[%s1134 + $0xd8] sm:$0x1]
  %v1279 = vsel %vm1202, 0, %v1278
  %1280 = vst [vmem:[%s1134 + $0xd8] sm:$0x1] %v1279
  %v1281 = vld [vmem:[%s1134 + $0xe0] sm:$0x1]
  %v1282 = vsel %vm1202, 0, %v1281
  %1283 = vst [vmem:[%s1134 + $0xe0] sm:$0x1] %v1282
  %v1284 = vld [vmem:[%s1134 + $0xe8] sm:$0x1]
  %v1285 = vsel %vm1202, 0, %v1284
  %1286 = vst [vmem:[%s1134 + $0xe8] sm:$0x1] %v1285
  %v1287 = vld [vmem:[%s1134 + $0xf0] sm:$0x1]
  %v1288 = vsel %vm1202, 0, %v1287
  %1289 = vst [vmem:[%s1134 + $0xf0] sm:$0x1] %v1288
  %v1290 = vld [vmem:[%s1134 + $0xf8] sm:$0x1]
  %v1291 = vsel %vm1202, 0, %v1290
  %1292 = vst [vmem:[%s1134 + $0xf8] sm:$0x1] %v1291
  %v1293 = vld [vmem:[%s1134 + $0x100] sm:$0x1]
  %v1294 = vsel %vm1202, 0, %v1293
  %1295 = vst [vmem:[%s1134 + $0x100] sm:$0x1] %v1294
  %v1296 = vld [vmem:[%s1134 + $0x108] sm:$0x1]
  %v1297 = vsel %vm1202, 0, %v1296
  %1298 = vst [vmem:[%s1134 + $0x108] sm:$0x1] %v1297
  %vm1299 = vsmask.f32 4368
  %vm1300 = vmor %vm1201, %vm1299
  %v1302 = vshrl.u32 %v878, 16
  %v1304 = vrot.slane %v1302, 7
  %v1305 = vshll.u32 %v878, 16
  %v1307 = vor.u32 %v1304, %v1305
  %v1308 = vrot.slane %v1304, 4
  %v1310 = vshrl.u32 %v879, 16
  %v1312 = vrot.slane %v1310, 7
  %v1313 = vshll.u32 %v879, 16
  %v1315 = vor.u32 %v1312, %v1313
  %v1316 = vsel %vm1300, %v1308, %v1315
  %v1318 = vshrl.u32 %v880, 16
  %v1320 = vrot.slane %v1318, 7
  %v1321 = vshll.u32 %v880, 16
  %v1323 = vor.u32 %v1320, %v1321
  %v1324 = vrot.slane %v1320, 4
  %v1326 = vshrl.u32 %v881, 16
  %v1328 = vrot.slane %v1326, 7
  %v1329 = vshll.u32 %v881, 16
  %v1331 = vor.u32 %v1328, %v1329
  %v1332 = vsel %vm1300, %v1324, %v1331
  %v1334 = vshrl.u32 %v882, 16
  %v1336 = vrot.slane %v1334, 7
  %v1337 = vshll.u32 %v882, 16
  %v1339 = vor.u32 %v1336, %v1337
  %v1340 = vrot.slane %v1336, 4
  %v1342 = vshrl.u32 %v883, 16
  %v1344 = vrot.slane %v1342, 7
  %v1345 = vshll.u32 %v883, 16
  %v1347 = vor.u32 %v1344, %v1345
  %v1348 = vsel %vm1300, %v1340, %v1347
  %v1350 = vshrl.u32 %v884, 16
  %v1352 = vrot.slane %v1350, 7
  %v1353 = vshll.u32 %v884, 16
  %v1355 = vor.u32 %v1352, %v1353
  %v1356 = vrot.slane %v1352, 4
  %v1358 = vshrl.u32 %v885, 16
  %v1360 = vrot.slane %v1358, 7
  %v1361 = vshll.u32 %v885, 16
  %v1363 = vor.u32 %v1360, %v1361
  %v1364 = vsel %vm1300, %v1356, %v1363
  %v1366 = vshrl.u32 %v886, 16
  %v1368 = vrot.slane %v1366, 7
  %v1369 = vshll.u32 %v886, 16
  %v1371 = vor.u32 %v1368, %v1369
  %v1372 = vrot.slane %v1368, 4
  %v1374 = vshrl.u32 %v887, 16
  %v1376 = vrot.slane %v1374, 7
  %v1377 = vshll.u32 %v887, 16
  %v1379 = vor.u32 %v1376, %v1377
  %v1380 = vsel %vm1300, %v1372, %v1379
  %v1382 = vshrl.u32 %v888, 16
  %v1384 = vrot.slane %v1382, 7
  %v1385 = vshll.u32 %v888, 16
  %v1387 = vor.u32 %v1384, %v1385
  %v1388 = vrot.slane %v1384, 4
  %v1390 = vshrl.u32 %v889, 16
  %v1392 = vrot.slane %v1390, 7
  %v1393 = vshll.u32 %v889, 16
  %v1395 = vor.u32 %v1392, %v1393
  %v1396 = vsel %vm1300, %v1388, %v1395
  %v1398 = vshrl.u32 %v890, 16
  %v1400 = vrot.slane %v1398, 7
  %v1401 = vshll.u32 %v890, 16
  %v1403 = vor.u32 %v1400, %v1401
  %v1404 = vrot.slane %v1400, 4
  %v1406 = vshrl.u32 %v891, 16
  %v1408 = vrot.slane %v1406, 7
  %v1409 = vshll.u32 %v891, 16
  %v1411 = vor.u32 %v1408, %v1409
  %v1412 = vsel %vm1300, %v1404, %v1411
  %v1414 = vshrl.u32 %v892, 16
  %v1416 = vrot.slane %v1414, 7
  %v1417 = vshll.u32 %v892, 16
  %v1419 = vor.u32 %v1416, %v1417
  %v1420 = vrot.slane %v1416, 4
  %v1422 = vshrl.u32 %v893, 16
  %v1424 = vrot.slane %v1422, 7
  %v1425 = vshll.u32 %v893, 16
  %v1427 = vor.u32 %v1424, %v1425
  %v1428 = vsel %vm1300, %v1420, %v1427
  %v1430 = vshrl.u32 %v894, 16
  %v1432 = vrot.slane %v1430, 7
  %v1433 = vshll.u32 %v894, 16
  %v1435 = vor.u32 %v1432, %v1433
  %v1436 = vrot.slane %v1432, 4
  %v1438 = vshrl.u32 %v895, 16
  %v1440 = vrot.slane %v1438, 7
  %v1441 = vshll.u32 %v895, 16
  %v1443 = vor.u32 %v1440, %v1441
  %v1444 = vsel %vm1300, %v1436, %v1443
  %v1446 = vshrl.u32 %v896, 16
  %v1448 = vrot.slane %v1446, 7
  %v1449 = vshll.u32 %v896, 16
  %v1451 = vor.u32 %v1448, %v1449
  %v1452 = vrot.slane %v1448, 4
  %v1454 = vshrl.u32 %v897, 16
  %v1456 = vrot.slane %v1454, 7
  %v1457 = vshll.u32 %v897, 16
  %v1459 = vor.u32 %v1456, %v1457
  %v1460 = vsel %vm1300, %v1452, %v1459
  %v1462 = vshrl.u32 %v898, 16
  %v1464 = vrot.slane %v1462, 7
  %v1465 = vshll.u32 %v898, 16
  %v1467 = vor.u32 %v1464, %v1465
  %v1468 = vrot.slane %v1464, 4
  %v1470 = vshrl.u32 %v899, 16
  %v1472 = vrot.slane %v1470, 7
  %v1473 = vshll.u32 %v899, 16
  %v1475 = vor.u32 %v1472, %v1473
  %v1476 = vsel %vm1300, %v1468, %v1475
  %v1478 = vshrl.u32 %v900, 16
  %v1480 = vrot.slane %v1478, 7
  %v1481 = vshll.u32 %v900, 16
  %v1483 = vor.u32 %v1480, %v1481
  %v1484 = vrot.slane %v1480, 4
  %v1486 = vshrl.u32 %v901, 16
  %v1488 = vrot.slane %v1486, 7
  %v1489 = vshll.u32 %v901, 16
  %v1491 = vor.u32 %v1488, %v1489
  %v1492 = vsel %vm1300, %v1484, %v1491
  %v1494 = vshrl.u32 %v902, 16
  %v1496 = vrot.slane %v1494, 7
  %v1497 = vshll.u32 %v902, 16
  %v1499 = vor.u32 %v1496, %v1497
  %v1500 = vrot.slane %v1496, 4
  %v1502 = vshrl.u32 %v903, 16
  %v1504 = vrot.slane %v1502, 7
  %v1505 = vshll.u32 %v903, 16
  %v1507 = vor.u32 %v1504, %v1505
  %v1508 = vsel %vm1300, %v1500, %v1507
  %v1510 = vshrl.u32 %v904, 16
  %v1512 = vrot.slane %v1510, 7
  %v1513 = vshll.u32 %v904, 16
  %v1515 = vor.u32 %v1512, %v1513
  %v1516 = vrot.slane %v1512, 4
  %v1518 = vshrl.u32 %v905, 16
  %v1520 = vrot.slane %v1518, 7
  %v1521 = vshll.u32 %v905, 16
  %v1523 = vor.u32 %v1520, %v1521
  %v1524 = vsel %vm1300, %v1516, %v1523
  %v1526 = vshrl.u32 %v906, 16
  %v1528 = vrot.slane %v1526, 7
  %v1529 = vshll.u32 %v906, 16
  %v1531 = vor.u32 %v1528, %v1529
  %v1532 = vrot.slane %v1528, 4
  %v1534 = vshrl.u32 %v907, 16
  %v1536 = vrot.slane %v1534, 7
  %v1537 = vshll.u32 %v907, 16
  %v1539 = vor.u32 %v1536, %v1537
  %v1540 = vsel %vm1300, %v1532, %v1539
  %v1542 = vshrl.u32 %v908, 16
  %v1544 = vrot.slane %v1542, 7
  %v1545 = vshll.u32 %v908, 16
  %v1547 = vor.u32 %v1544, %v1545
  %v1548 = vrot.slane %v1544, 4
  %v1550 = vshrl.u32 %v909, 16
  %v1552 = vrot.slane %v1550, 7
  %v1553 = vshll.u32 %v909, 16
  %v1555 = vor.u32 %v1552, %v1553
  %v1556 = vsel %vm1300, %v1548, %v1555
  %v1558 = vshrl.u32 %v910, 16
  %v1560 = vrot.slane %v1558, 7
  %v1561 = vshll.u32 %v910, 16
  %v1563 = vor.u32 %v1560, %v1561
  %v1564 = vrot.slane %v1560, 4
  %v1566 = vshrl.u32 %v911, 16
  %v1568 = vrot.slane %v1566, 7
  %v1569 = vshll.u32 %v911, 16
  %v1571 = vor.u32 %v1568, %v1569
  %v1572 = vsel %vm1300, %v1564, %v1571
  %v1574 = vshrl.u32 %v912, 16
  %v1576 = vrot.slane %v1574, 7
  %v1577 = vshll.u32 %v912, 16
  %v1579 = vor.u32 %v1576, %v1577
  %v1580 = vrot.slane %v1576, 4
  %v1582 = vshrl.u32 %v913, 16
  %v1584 = vrot.slane %v1582, 7
  %v1585 = vshll.u32 %v913, 16
  %v1587 = vor.u32 %v1584, %v1585
  %v1588 = vsel %vm1300, %v1580, %v1587
  %v1590 = vshrl.u32 %v914, 16
  %v1592 = vrot.slane %v1590, 7
  %v1593 = vshll.u32 %v914, 16
  %v1595 = vor.u32 %v1592, %v1593
  %v1596 = vrot.slane %v1592, 4
  %v1598 = vshrl.u32 %v915, 16
  %v1600 = vrot.slane %v1598, 7
  %v1601 = vshll.u32 %v915, 16
  %v1603 = vor.u32 %v1600, %v1601
  %v1604 = vsel %vm1300, %v1596, %v1603
  %v1606 = vshrl.u32 %v916, 16
  %v1608 = vrot.slane %v1606, 7
  %v1609 = vshll.u32 %v916, 16
  %v1611 = vor.u32 %v1608, %v1609
  %v1612 = vrot.slane %v1608, 4
  %v1614 = vshrl.u32 %v917, 16
  %v1616 = vrot.slane %v1614, 7
  %v1617 = vshll.u32 %v917, 16
  %v1619 = vor.u32 %v1616, %v1617
  %v1620 = vsel %vm1300, %v1612, %v1619
  %v1622 = vshrl.u32 %v918, 16
  %v1624 = vrot.slane %v1622, 7
  %v1625 = vshll.u32 %v918, 16
  %v1627 = vor.u32 %v1624, %v1625
  %v1628 = vrot.slane %v1624, 4
  %v1630 = vshrl.u32 %v919, 16
  %v1632 = vrot.slane %v1630, 7
  %v1633 = vshll.u32 %v919, 16
  %v1635 = vor.u32 %v1632, %v1633
  %v1636 = vsel %vm1300, %v1628, %v1635
  %v1638 = vshrl.u32 %v920, 16
  %v1640 = vrot.slane %v1638, 7
  %v1641 = vshll.u32 %v920, 16
  %v1643 = vor.u32 %v1640, %v1641
  %v1644 = vrot.slane %v1640, 4
  %v1646 = vshrl.u32 %v921, 16
  %v1648 = vrot.slane %v1646, 7
  %v1649 = vshll.u32 %v921, 16
  %v1651 = vor.u32 %v1648, %v1649
  %v1652 = vsel %vm1300, %v1644, %v1651
  %v1654 = vshrl.u32 %v922, 16
  %v1656 = vrot.slane %v1654, 7
  %v1657 = vshll.u32 %v922, 16
  %v1659 = vor.u32 %v1656, %v1657
  %v1660 = vrot.slane %v1656, 4
  %v1662 = vshrl.u32 %v923, 16
  %v1664 = vrot.slane %v1662, 7
  %v1665 = vshll.u32 %v923, 16
  %v1667 = vor.u32 %v1664, %v1665
  %v1668 = vsel %vm1300, %v1660, %v1667
  %v1670 = vshrl.u32 %v924, 16
  %v1672 = vrot.slane %v1670, 7
  %v1673 = vshll.u32 %v924, 16
  %v1675 = vor.u32 %v1672, %v1673
  %v1676 = vrot.slane %v1672, 4
  %v1678 = vshrl.u32 %v925, 16
  %v1680 = vrot.slane %v1678, 7
  %v1681 = vshll.u32 %v925, 16
  %v1683 = vor.u32 %v1680, %v1681
  %v1684 = vsel %vm1300, %v1676, %v1683
  %v1686 = vshrl.u32 %v926, 16
  %v1688 = vrot.slane %v1686, 7
  %v1689 = vshll.u32 %v926, 16
  %v1691 = vor.u32 %v1688, %v1689
  %v1692 = vrot.slane %v1688, 4
  %v1694 = vshrl.u32 %v927, 16
  %v1696 = vrot.slane %v1694, 7
  %v1697 = vshll.u32 %v927, 16
  %v1699 = vor.u32 %v1696, %v1697
  %v1700 = vsel %vm1300, %v1692, %v1699
  %v1702 = vshrl.u32 %v928, 16
  %v1704 = vrot.slane %v1702, 7
  %v1705 = vshll.u32 %v928, 16
  %v1707 = vor.u32 %v1704, %v1705
  %v1708 = vrot.slane %v1704, 4
  %v1710 = vshrl.u32 %v929, 16
  %v1712 = vrot.slane %v1710, 7
  %v1713 = vshll.u32 %v929, 16
  %v1715 = vor.u32 %v1712, %v1713
  %v1716 = vsel %vm1300, %v1708, %v1715
  %v1718 = vshrl.u32 %v930, 16
  %v1720 = vrot.slane %v1718, 7
  %v1721 = vshll.u32 %v930, 16
  %v1723 = vor.u32 %v1720, %v1721
  %v1724 = vrot.slane %v1720, 4
  %v1726 = vshrl.u32 %v931, 16
  %v1728 = vrot.slane %v1726, 7
  %v1729 = vshll.u32 %v931, 16
  %v1731 = vor.u32 %v1728, %v1729
  %v1732 = vsel %vm1300, %v1724, %v1731
  %v1734 = vshrl.u32 %v932, 16
  %v1736 = vrot.slane %v1734, 7
  %v1737 = vshll.u32 %v932, 16
  %v1739 = vor.u32 %v1736, %v1737
  %v1740 = vrot.slane %v1736, 4
  %v1742 = vshrl.u32 %v933, 16
  %v1744 = vrot.slane %v1742, 7
  %v1745 = vshll.u32 %v933, 16
  %v1747 = vor.u32 %v1744, %v1745
  %v1748 = vsel %vm1300, %v1740, %v1747
  %v1750 = vshrl.u32 %v934, 16
  %v1752 = vrot.slane %v1750, 7
  %v1753 = vshll.u32 %v934, 16
  %v1755 = vor.u32 %v1752, %v1753
  %v1756 = vrot.slane %v1752, 4
  %v1758 = vshrl.u32 %v935, 16
  %v1760 = vrot.slane %v1758, 7
  %v1761 = vshll.u32 %v935, 16
  %v1763 = vor.u32 %v1760, %v1761
  %v1764 = vsel %vm1300, %v1756, %v1763
  %v1766 = vshrl.u32 %v936, 16
  %v1768 = vrot.slane %v1766, 7
  %v1769 = vshll.u32 %v936, 16
  %v1771 = vor.u32 %v1768, %v1769
  %v1772 = vrot.slane %v1768, 4
  %v1774 = vshrl.u32 %v937, 16
  %v1776 = vrot.slane %v1774, 7
  %v1777 = vshll.u32 %v937, 16
  %v1779 = vor.u32 %v1776, %v1777
  %v1780 = vsel %vm1300, %v1772, %v1779
  %v1782 = vshrl.u32 %v938, 16
  %v1784 = vrot.slane %v1782, 7
  %v1785 = vshll.u32 %v938, 16
  %v1787 = vor.u32 %v1784, %v1785
  %v1788 = vrot.slane %v1784, 4
  %v1790 = vshrl.u32 %v939, 16
  %v1792 = vrot.slane %v1790, 7
  %v1793 = vshll.u32 %v939, 16
  %v1795 = vor.u32 %v1792, %v1793
  %v1796 = vsel %vm1300, %v1788, %v1795
  %v1798 = vshrl.u32 %v940, 16
  %v1800 = vrot.slane %v1798, 7
  %v1801 = vshll.u32 %v940, 16
  %v1803 = vor.u32 %v1800, %v1801
  %v1804 = vrot.slane %v1800, 4
  %v1806 = vshrl.u32 %v941, 16
  %v1808 = vrot.slane %v1806, 7
  %v1809 = vshll.u32 %v941, 16
  %v1811 = vor.u32 %v1808, %v1809
  %v1812 = vsel %vm1300, %v1804, %v1811
  %vm1877 = vcmask 125952
  %vm1878 = vsmask.f32 7938
  %vm1879 = vmand %vm1877, %vm1878
  %v1880 = vld [vmem:[%s1134] sm:$0xf]
  %v1881 = vsel %vm1879, %v1307, %v1880
  %1882 = vst [vmem:[%s1134] sm:$0xf] %v1881
  %vm1883 = vcmask 125952
  %1884 = vst.msk [vmem:[%s1134 + $0x4] sm:$0xf] %vm1883, %v1316
  %v1885 = vld [vmem:[%s1134 + $0x8] sm:$0xf]
  %v1886 = vsel %vm1879, %v1323, %v1885
  %1887 = vst [vmem:[%s1134 + $0x8] sm:$0xf] %v1886
  %1888 = vst.msk [vmem:[%s1134 + $0xc] sm:$0xf] %vm1883, %v1332
  %v1889 = vld [vmem:[%s1134 + $0x10] sm:$0xf]
  %v1890 = vsel %vm1879, %v1339, %v1889
  %1891 = vst [vmem:[%s1134 + $0x10] sm:$0xf] %v1890
  %1892 = vst.msk [vmem:[%s1134 + $0x14] sm:$0xf] %vm1883, %v1348
  %v1893 = vld [vmem:[%s1134 + $0x18] sm:$0xf]
  %v1894 = vsel %vm1879, %v1355, %v1893
  %1895 = vst [vmem:[%s1134 + $0x18] sm:$0xf] %v1894
  %1896 = vst.msk [vmem:[%s1134 + $0x1c] sm:$0xf] %vm1883, %v1364
  %v1897 = vld [vmem:[%s1134 + $0x20] sm:$0xf]
  %v1898 = vsel %vm1879, %v1371, %v1897
  %1899 = vst [vmem:[%s1134 + $0x20] sm:$0xf] %v1898
  %1900 = vst.msk [vmem:[%s1134 + $0x24] sm:$0xf] %vm1883, %v1380
  %v1901 = vld [vmem:[%s1134 + $0x28] sm:$0xf]
  %v1902 = vsel %vm1879, %v1387, %v1901
  %1903 = vst [vmem:[%s1134 + $0x28] sm:$0xf] %v1902
  %1904 = vst.msk [vmem:[%s1134 + $0x2c] sm:$0xf] %vm1883, %v1396
  %v1905 = vld [vmem:[%s1134 + $0x30] sm:$0xf]
  %v1906 = vsel %vm1879, %v1403, %v1905
  %1907 = vst [vmem:[%s1134 + $0x30] sm:$0xf] %v1906
  %1908 = vst.msk [vmem:[%s1134 + $0x34] sm:$0xf] %vm1883, %v1412
  %v1909 = vld [vmem:[%s1134 + $0x38] sm:$0xf]
  %v1910 = vsel %vm1879, %v1419, %v1909
  %1911 = vst [vmem:[%s1134 + $0x38] sm:$0xf] %v1910
  %1912 = vst.msk [vmem:[%s1134 + $0x3c] sm:$0xf] %vm1883, %v1428
  %v1913 = vld [vmem:[%s1134 + $0x40] sm:$0xf]
  %v1914 = vsel %vm1879, %v1435, %v1913
  %1915 = vst [vmem:[%s1134 + $0x40] sm:$0xf] %v1914
  %1916 = vst.msk [vmem:[%s1134 + $0x44] sm:$0xf] %vm1883, %v1444
  %v1917 = vld [vmem:[%s1134 + $0x48] sm:$0xf]
  %v1918 = vsel %vm1879, %v1451, %v1917
  %1919 = vst [vmem:[%s1134 + $0x48] sm:$0xf] %v1918
  %1920 = vst.msk [vmem:[%s1134 + $0x4c] sm:$0xf] %vm1883, %v1460
  %v1921 = vld [vmem:[%s1134 + $0x50] sm:$0xf]
  %v1922 = vsel %vm1879, %v1467, %v1921
  %1923 = vst [vmem:[%s1134 + $0x50] sm:$0xf] %v1922
  %1924 = vst.msk [vmem:[%s1134 + $0x54] sm:$0xf] %vm1883, %v1476
  %v1925 = vld [vmem:[%s1134 + $0x58] sm:$0xf]
  %v1926 = vsel %vm1879, %v1483, %v1925
  %1927 = vst [vmem:[%s1134 + $0x58] sm:$0xf] %v1926
  %1928 = vst.msk [vmem:[%s1134 + $0x5c] sm:$0xf] %vm1883, %v1492
  %v1929 = vld [vmem:[%s1134 + $0x60] sm:$0xf]
  %v1930 = vsel %vm1879, %v1499, %v1929
  %1931 = vst [vmem:[%s1134 + $0x60] sm:$0xf] %v1930
  %1932 = vst.msk [vmem:[%s1134 + $0x64] sm:$0xf] %vm1883, %v1508
  %v1933 = vld [vmem:[%s1134 + $0x68] sm:$0xf]
  %v1934 = vsel %vm1879, %v1515, %v1933
  %1935 = vst [vmem:[%s1134 + $0x68] sm:$0xf] %v1934
  %1936 = vst.msk [vmem:[%s1134 + $0x6c] sm:$0xf] %vm1883, %v1524
  %v1937 = vld [vmem:[%s1134 + $0x70] sm:$0xf]
  %v1938 = vsel %vm1879, %v1531, %v1937
  %1939 = vst [vmem:[%s1134 + $0x70] sm:$0xf] %v1938
  %1940 = vst.msk [vmem:[%s1134 + $0x74] sm:$0xf] %vm1883, %v1540
  %v1941 = vld [vmem:[%s1134 + $0x78] sm:$0xf]
  %v1942 = vsel %vm1879, %v1547, %v1941
  %1943 = vst [vmem:[%s1134 + $0x78] sm:$0xf] %v1942
  %1944 = vst.msk [vmem:[%s1134 + $0x7c] sm:$0xf] %vm1883, %v1556
  %v1945 = vld [vmem:[%s1134 + $0x90] sm:$0xf]
  %v1946 = vsel %vm1879, %v1563, %v1945
  %1947 = vst [vmem:[%s1134 + $0x90] sm:$0xf] %v1946
  %1948 = vst.msk [vmem:[%s1134 + $0x94] sm:$0xf] %vm1883, %v1572
  %v1949 = vld [vmem:[%s1134 + $0x98] sm:$0xf]
  %v1950 = vsel %vm1879, %v1579, %v1949
  %1951 = vst [vmem:[%s1134 + $0x98] sm:$0xf] %v1950
  %1952 = vst.msk [vmem:[%s1134 + $0x9c] sm:$0xf] %vm1883, %v1588
  %v1953 = vld [vmem:[%s1134 + $0xa0] sm:$0xf]
  %v1954 = vsel %vm1879, %v1595, %v1953
  %1955 = vst [vmem:[%s1134 + $0xa0] sm:$0xf] %v1954
  %1956 = vst.msk [vmem:[%s1134 + $0xa4] sm:$0xf] %vm1883, %v1604
  %v1957 = vld [vmem:[%s1134 + $0xa8] sm:$0xf]
  %v1958 = vsel %vm1879, %v1611, %v1957
  %1959 = vst [vmem:[%s1134 + $0xa8] sm:$0xf] %v1958
  %1960 = vst.msk [vmem:[%s1134 + $0xac] sm:$0xf] %vm1883, %v1620
  %v1961 = vld [vmem:[%s1134 + $0xb0] sm:$0xf]
  %v1962 = vsel %vm1879, %v1627, %v1961
  %1963 = vst [vmem:[%s1134 + $0xb0] sm:$0xf] %v1962
  %1964 = vst.msk [vmem:[%s1134 + $0xb4] sm:$0xf] %vm1883, %v1636
  %v1965 = vld [vmem:[%s1134 + $0xb8] sm:$0xf]
  %v1966 = vsel %vm1879, %v1643, %v1965
  %1967 = vst [vmem:[%s1134 + $0xb8] sm:$0xf] %v1966
  %1968 = vst.msk [vmem:[%s1134 + $0xbc] sm:$0xf] %vm1883, %v1652
  %v1969 = vld [vmem:[%s1134 + $0xc0] sm:$0xf]
  %v1970 = vsel %vm1879, %v1659, %v1969
  %1971 = vst [vmem:[%s1134 + $0xc0] sm:$0xf] %v1970
  %1972 = vst.msk [vmem:[%s1134 + $0xc4] sm:$0xf] %vm1883, %v1668
  %v1973 = vld [vmem:[%s1134 + $0xc8] sm:$0xf]
  %v1974 = vsel %vm1879, %v1675, %v1973
  %1975 = vst [vmem:[%s1134 + $0xc8] sm:$0xf] %v1974
  %1976 = vst.msk [vmem:[%s1134 + $0xcc] sm:$0xf] %vm1883, %v1684
  %v1977 = vld [vmem:[%s1134 + $0xd0] sm:$0xf]
  %v1978 = vsel %vm1879, %v1691, %v1977
  %1979 = vst [vmem:[%s1134 + $0xd0] sm:$0xf] %v1978
  %1980 = vst.msk [vmem:[%s1134 + $0xd4] sm:$0xf] %vm1883, %v1700
  %v1981 = vld [vmem:[%s1134 + $0xd8] sm:$0xf]
  %v1982 = vsel %vm1879, %v1707, %v1981
  %1983 = vst [vmem:[%s1134 + $0xd8] sm:$0xf] %v1982
  %1984 = vst.msk [vmem:[%s1134 + $0xdc] sm:$0xf] %vm1883, %v1716
  %v1985 = vld [vmem:[%s1134 + $0xe0] sm:$0xf]
  %v1986 = vsel %vm1879, %v1723, %v1985
  %1987 = vst [vmem:[%s1134 + $0xe0] sm:$0xf] %v1986
  %1988 = vst.msk [vmem:[%s1134 + $0xe4] sm:$0xf] %vm1883, %v1732
  %v1989 = vld [vmem:[%s1134 + $0xe8] sm:$0xf]
  %v1990 = vsel %vm1879, %v1739, %v1989
  %1991 = vst [vmem:[%s1134 + $0xe8] sm:$0xf] %v1990
  %1992 = vst.msk [vmem:[%s1134 + $0xec] sm:$0xf] %vm1883, %v1748
  %v1993 = vld [vmem:[%s1134 + $0xf0] sm:$0xf]
  %v1994 = vsel %vm1879, %v1755, %v1993
  %1995 = vst [vmem:[%s1134 + $0xf0] sm:$0xf] %v1994
  %1996 = vst.msk [vmem:[%s1134 + $0xf4] sm:$0xf] %vm1883, %v1764
  %v1997 = vld [vmem:[%s1134 + $0xf8] sm:$0xf]
  %v1998 = vsel %vm1879, %v1771, %v1997
  %1999 = vst [vmem:[%s1134 + $0xf8] sm:$0xf] %v1998
  %2000 = vst.msk [vmem:[%s1134 + $0xfc] sm:$0xf] %vm1883, %v1780
  %v2001 = vld [vmem:[%s1134 + $0x100] sm:$0xf]
  %v2002 = vsel %vm1879, %v1787, %v2001
  %2003 = vst [vmem:[%s1134 + $0x100] sm:$0xf] %v2002
  %2004 = vst.msk [vmem:[%s1134 + $0x104] sm:$0xf] %vm1883, %v1796
  %v2005 = vld [vmem:[%s1134 + $0x108] sm:$0xf]
  %v2006 = vsel %vm1879, %v1803, %v2005
  %2007 = vst [vmem:[%s1134 + $0x108] sm:$0xf] %v2006
  %2008 = vst.msk [vmem:[%s1134 + $0x10c] sm:$0xf] %vm1883, %v1812
  %vm2009 = vsmask.f32 3328
  %vm2010 = vsmask.f32 7440
  %vm2011 = vmor %vm2009, %vm2010
  %v2012 = vrot.slane %v1302, 4
  %v2013 = vrot.slane %v1305, 5
  %v2014 = vor.u32 %v2012, %v2013
  %v2015 = vrot.slane %v2014, 4
  %v2016 = vrot.slane %v1313, 5
  %v2017 = vsel %vm2011, %v2015, %v2016
  %v2018 = vrot.slane %v1310, 4
  %v2019 = vor.u32 %v2018, %v2016
  %v2020 = vrot.slane %v2019, 4
  %v2021 = vrot.slane %v1318, 4
  %v2022 = vrot.slane %v1321, 5
  %v2023 = vor.u32 %v2021, %v2022
  %v2024 = vrot.slane %v2023, 4
  %v2025 = vrot.slane %v1329, 5
  %v2026 = vsel %vm2011, %v2024, %v2025
  %v2027 = vrot.slane %v1326, 4
  %v2028 = vor.u32 %v2027, %v2025
  %v2029 = vrot.slane %v2028, 4
  %v2030 = vrot.slane %v1334, 4
  %v2031 = vrot.slane %v1337, 5
  %v2032 = vor.u32 %v2030, %v2031
  %v2033 = vrot.slane %v2032, 4
  %v2034 = vrot.slane %v1345, 5
  %v2035 = vsel %vm2011, %v2033, %v2034
  %v2036 = vrot.slane %v1342, 4
  %v2037 = vor.u32 %v2036, %v2034
  %v2038 = vrot.slane %v2037, 4
  %v2039 = vrot.slane %v1350, 4
  %v2040 = vrot.slane %v1353, 5
  %v2041 = vor.u32 %v2039, %v2040
  %v2042 = vrot.slane %v2041, 4
  %v2043 = vrot.slane %v1361, 5
  %v2044 = vsel %vm2011, %v2042, %v2043
  %v2045 = vrot.slane %v1358, 4
  %v2046 = vor.u32 %v2045, %v2043
  %v2047 = vrot.slane %v2046, 4
  %v2048 = vrot.slane %v1366, 4
  %v2049 = vrot.slane %v1369, 5
  %v2050 = vor.u32 %v2048, %v2049
  %v2051 = vrot.slane %v2050, 4
  %v2052 = vrot.slane %v1377, 5
  %v2053 = vsel %vm2011, %v2051, %v2052
  %v2054 = vrot.slane %v1374, 4
  %v2055 = vor.u32 %v2054, %v2052
  %v2056 = vrot.slane %v2055, 4
  %v2057 = vrot.slane %v1382, 4
  %v2058 = vrot.slane %v1385, 5
  %v2059 = vor.u32 %v2057, %v2058
  %v2060 = vrot.slane %v2059, 4
  %v2061 = vrot.slane %v1393, 5
  %v2062 = vsel %vm2011, %v2060, %v2061
  %v2063 = vrot.slane %v1390, 4
  %v2064 = vor.u32 %v2063, %v2061
  %v2065 = vrot.slane %v2064, 4
  %v2066 = vrot.slane %v1398, 4
  %v2067 = vrot.slane %v1401, 5
  %v2068 = vor.u32 %v2066, %v2067
  %v2069 = vrot.slane %v2068, 4
  %v2070 = vrot.slane %v1409, 5
  %v2071 = vsel %vm2011, %v2069, %v2070
  %v2072 = vrot.slane %v1406, 4
  %v2073 = vor.u32 %v2072, %v2070
  %v2074 = vrot.slane %v2073, 4
  %v2075 = vrot.slane %v1414, 4
  %v2076 = vrot.slane %v1417, 5
  %v2077 = vor.u32 %v2075, %v2076
  %v2078 = vrot.slane %v2077, 4
  %v2079 = vrot.slane %v1425, 5
  %v2080 = vsel %vm2011, %v2078, %v2079
  %v2081 = vrot.slane %v1422, 4
  %v2082 = vor.u32 %v2081, %v2079
  %v2083 = vrot.slane %v2082, 4
  %v2084 = vrot.slane %v1430, 4
  %v2085 = vrot.slane %v1433, 5
  %v2086 = vor.u32 %v2084, %v2085
  %v2087 = vrot.slane %v2086, 4
  %v2088 = vrot.slane %v1441, 5
  %v2089 = vsel %vm2011, %v2087, %v2088
  %v2090 = vrot.slane %v1438, 4
  %v2091 = vor.u32 %v2090, %v2088
  %v2092 = vrot.slane %v2091, 4
  %v2093 = vrot.slane %v1446, 4
  %v2094 = vrot.slane %v1449, 5
  %v2095 = vor.u32 %v2093, %v2094
  %v2096 = vrot.slane %v2095, 4
  %v2097 = vrot.slane %v1457, 5
  %v2098 = vsel %vm2011, %v2096, %v2097
  %v2099 = vrot.slane %v1454, 4
  %v2100 = vor.u32 %v2099, %v2097
  %v2101 = vrot.slane %v2100, 4
  %v2102 = vrot.slane %v1462, 4
  %v2103 = vrot.slane %v1465, 5
  %v2104 = vor.u32 %v2102, %v2103
  %v2105 = vrot.slane %v2104, 4
  %v2106 = vrot.slane %v1473, 5
  %v2107 = vsel %vm2011, %v2105, %v2106
  %v2108 = vrot.slane %v1470, 4
  %v2109 = vor.u32 %v2108, %v2106
  %v2110 = vrot.slane %v2109, 4
  %v2111 = vrot.slane %v1478, 4
  %v2112 = vrot.slane %v1481, 5
  %v2113 = vor.u32 %v2111, %v2112
  %v2114 = vrot.slane %v2113, 4
  %v2115 = vrot.slane %v1489, 5
  %v2116 = vsel %vm2011, %v2114, %v2115
  %v2117 = vrot.slane %v1486, 4
  %v2118 = vor.u32 %v2117, %v2115
  %v2119 = vrot.slane %v2118, 4
  %v2120 = vrot.slane %v1494, 4
  %v2121 = vrot.slane %v1497, 5
  %v2122 = vor.u32 %v2120, %v2121
  %v2123 = vrot.slane %v2122, 4
  %v2124 = vrot.slane %v1505, 5
  %v2125 = vsel %vm2011, %v2123, %v2124
  %v2126 = vrot.slane %v1502, 4
  %v2127 = vor.u32 %v2126, %v2124
  %v2128 = vrot.slane %v2127, 4
  %v2129 = vrot.slane %v1510, 4
  %v2130 = vrot.slane %v1513, 5
  %v2131 = vor.u32 %v2129, %v2130
  %v2132 = vrot.slane %v2131, 4
  %v2133 = vrot.slane %v1521, 5
  %v2134 = vsel %vm2011, %v2132, %v2133
  %v2135 = vrot.slane %v1518, 4
  %v2136 = vor.u32 %v2135, %v2133
  %v2137 = vrot.slane %v2136, 4
  %v2138 = vrot.slane %v1526, 4
  %v2139 = vrot.slane %v1529, 5
  %v2140 = vor.u32 %v2138, %v2139
  %v2141 = vrot.slane %v2140, 4
  %v2142 = vrot.slane %v1537, 5
  %v2143 = vsel %vm2011, %v2141, %v2142
  %v2144 = vrot.slane %v1534, 4
  %v2145 = vor.u32 %v2144, %v2142
  %v2146 = vrot.slane %v2145, 4
  %v2147 = vrot.slane %v1542, 4
  %v2148 = vrot.slane %v1545, 5
  %v2149 = vor.u32 %v2147, %v2148
  %v2150 = vrot.slane %v2149, 4
  %v2151 = vrot.slane %v1553, 5
  %v2152 = vsel %vm2011, %v2150, %v2151
  %v2153 = vrot.slane %v1550, 4
  %v2154 = vor.u32 %v2153, %v2151
  %v2155 = vrot.slane %v2154, 4
  %v2156 = vrot.slane %v1558, 4
  %v2157 = vrot.slane %v1561, 5
  %v2158 = vor.u32 %v2156, %v2157
  %v2159 = vrot.slane %v2158, 4
  %v2160 = vrot.slane %v1569, 5
  %v2161 = vsel %vm2011, %v2159, %v2160
  %v2162 = vrot.slane %v1566, 4
  %v2163 = vor.u32 %v2162, %v2160
  %v2164 = vrot.slane %v2163, 4
  %v2165 = vrot.slane %v1574, 4
  %v2166 = vrot.slane %v1577, 5
  %v2167 = vor.u32 %v2165, %v2166
  %v2168 = vrot.slane %v2167, 4
  %v2169 = vrot.slane %v1585, 5
  %v2170 = vsel %vm2011, %v2168, %v2169
  %v2171 = vrot.slane %v1582, 4
  %v2172 = vor.u32 %v2171, %v2169
  %v2173 = vrot.slane %v2172, 4
  %v2174 = vrot.slane %v1590, 4
  %v2175 = vrot.slane %v1593, 5
  %v2176 = vor.u32 %v2174, %v2175
  %v2177 = vrot.slane %v2176, 4
  %v2178 = vrot.slane %v1601, 5
  %v2179 = vsel %vm2011, %v2177, %v2178
  %v2180 = vrot.slane %v1598, 4
  %v2181 = vor.u32 %v2180, %v2178
  %v2182 = vrot.slane %v2181, 4
  %v2183 = vrot.slane %v1606, 4
  %v2184 = vrot.slane %v1609, 5
  %v2185 = vor.u32 %v2183, %v2184
  %v2186 = vrot.slane %v2185, 4
  %v2187 = vrot.slane %v1617, 5
  %v2188 = vsel %vm2011, %v2186, %v2187
  %v2189 = vrot.slane %v1614, 4
  %v2190 = vor.u32 %v2189, %v2187
  %v2191 = vrot.slane %v2190, 4
  %v2192 = vrot.slane %v1622, 4
  %v2193 = vrot.slane %v1625, 5
  %v2194 = vor.u32 %v2192, %v2193
  %v2195 = vrot.slane %v2194, 4
  %v2196 = vrot.slane %v1633, 5
  %v2197 = vsel %vm2011, %v2195, %v2196
  %v2198 = vrot.slane %v1630, 4
  %v2199 = vor.u32 %v2198, %v2196
  %v2200 = vrot.slane %v2199, 4
  %v2201 = vrot.slane %v1638, 4
  %v2202 = vrot.slane %v1641, 5
  %v2203 = vor.u32 %v2201, %v2202
  %v2204 = vrot.slane %v2203, 4
  %v2205 = vrot.slane %v1649, 5
  %v2206 = vsel %vm2011, %v2204, %v2205
  %v2207 = vrot.slane %v1646, 4
  %v2208 = vor.u32 %v2207, %v2205
  %v2209 = vrot.slane %v2208, 4
  %v2210 = vrot.slane %v1654, 4
  %v2211 = vrot.slane %v1657, 5
  %v2212 = vor.u32 %v2210, %v2211
  %v2213 = vrot.slane %v2212, 4
  %v2214 = vrot.slane %v1665, 5
  %v2215 = vsel %vm2011, %v2213, %v2214
  %v2216 = vrot.slane %v1662, 4
  %v2217 = vor.u32 %v2216, %v2214
  %v2218 = vrot.slane %v2217, 4
  %v2219 = vrot.slane %v1670, 4
  %v2220 = vrot.slane %v1673, 5
  %v2221 = vor.u32 %v2219, %v2220
  %v2222 = vrot.slane %v2221, 4
  %v2223 = vrot.slane %v1681, 5
  %v2224 = vsel %vm2011, %v2222, %v2223
  %v2225 = vrot.slane %v1678, 4
  %v2226 = vor.u32 %v2225, %v2223
  %v2227 = vrot.slane %v2226, 4
  %v2228 = vrot.slane %v1686, 4
  %v2229 = vrot.slane %v1689, 5
  %v2230 = vor.u32 %v2228, %v2229
  %v2231 = vrot.slane %v2230, 4
  %v2232 = vrot.slane %v1697, 5
  %v2233 = vsel %vm2011, %v2231, %v2232
  %v2234 = vrot.slane %v1694, 4
  %v2235 = vor.u32 %v2234, %v2232
  %v2236 = vrot.slane %v2235, 4
  %v2237 = vrot.slane %v1702, 4
  %v2238 = vrot.slane %v1705, 5
  %v2239 = vor.u32 %v2237, %v2238
  %v2240 = vrot.slane %v2239, 4
  %v2241 = vrot.slane %v1713, 5
  %v2242 = vsel %vm2011, %v2240, %v2241
  %v2243 = vrot.slane %v1710, 4
  %v2244 = vor.u32 %v2243, %v2241
  %v2245 = vrot.slane %v2244, 4
  %v2246 = vrot.slane %v1718, 4
  %v2247 = vrot.slane %v1721, 5
  %v2248 = vor.u32 %v2246, %v2247
  %v2249 = vrot.slane %v2248, 4
  %v2250 = vrot.slane %v1729, 5
  %v2251 = vsel %vm2011, %v2249, %v2250
  %v2252 = vrot.slane %v1726, 4
  %v2253 = vor.u32 %v2252, %v2250
  %v2254 = vrot.slane %v2253, 4
  %v2255 = vrot.slane %v1734, 4
  %v2256 = vrot.slane %v1737, 5
  %v2257 = vor.u32 %v2255, %v2256
  %v2258 = vrot.slane %v2257, 4
  %v2259 = vrot.slane %v1745, 5
  %v2260 = vsel %vm2011, %v2258, %v2259
  %v2261 = vrot.slane %v1742, 4
  %v2262 = vor.u32 %v2261, %v2259
  %v2263 = vrot.slane %v2262, 4
  %v2264 = vrot.slane %v1750, 4
  %v2265 = vrot.slane %v1753, 5
  %v2266 = vor.u32 %v2264, %v2265
  %v2267 = vrot.slane %v2266, 4
  %v2268 = vrot.slane %v1761, 5
  %v2269 = vsel %vm2011, %v2267, %v2268
  %v2270 = vrot.slane %v1758, 4
  %v2271 = vor.u32 %v2270, %v2268
  %v2272 = vrot.slane %v2271, 4
  %v2273 = vrot.slane %v1766, 4
  %v2274 = vrot.slane %v1769, 5
  %v2275 = vor.u32 %v2273, %v2274
  %v2276 = vrot.slane %v2275, 4
  %v2277 = vrot.slane %v1777, 5
  %v2278 = vsel %vm2011, %v2276, %v2277
  %v2279 = vrot.slane %v1774, 4
  %v2280 = vor.u32 %v2279, %v2277
  %v2281 = vrot.slane %v2280, 4
  %v2282 = vrot.slane %v1782, 4
  %v2283 = vrot.slane %v1785, 5
  %v2284 = vor.u32 %v2282, %v2283
  %v2285 = vrot.slane %v2284, 4
  %v2286 = vrot.slane %v1793, 5
  %v2287 = vsel %vm2011, %v2285, %v2286
  %v2288 = vrot.slane %v1790, 4
  %v2289 = vor.u32 %v2288, %v2286
  %v2290 = vrot.slane %v2289, 4
  %v2291 = vrot.slane %v1798, 4
  %v2292 = vrot.slane %v1801, 5
  %v2293 = vor.u32 %v2291, %v2292
  %v2294 = vrot.slane %v2293, 4
  %v2295 = vrot.slane %v1809, 5
  %v2296 = vsel %vm2011, %v2294, %v2295
  %v2297 = vrot.slane %v1806, 4
  %v2298 = vor.u32 %v2297, %v2295
  %v2299 = vrot.slane %v2298, 4
  %2300 = vrot.lane.b32.xlu0 %v2017, 32
  %v2301 = vpop.permute.xlu0 %2300
  %2302 = vrot.lane.b32.xlu0 %v2020, 32
  %v2303 = vpop.permute.xlu0 %2302
  %2304 = vrot.lane.b32.xlu0 %v2026, 32
  %v2305 = vpop.permute.xlu0 %2304
  %2306 = vrot.lane.b32.xlu0 %v2029, 32
  %v2307 = vpop.permute.xlu0 %2306
  %2308 = vrot.lane.b32.xlu0 %v2035, 32
  %v2309 = vpop.permute.xlu0 %2308
  %2310 = vrot.lane.b32.xlu0 %v2038, 32
  %v2311 = vpop.permute.xlu0 %2310
  %2312 = vrot.lane.b32.xlu0 %v2044, 32
  %v2313 = vpop.permute.xlu0 %2312
  %2314 = vrot.lane.b32.xlu0 %v2047, 32
  %v2315 = vpop.permute.xlu0 %2314
  %2316 = vrot.lane.b32.xlu0 %v2053, 32
  %v2317 = vpop.permute.xlu0 %2316
  %2318 = vrot.lane.b32.xlu0 %v2056, 32
  %v2319 = vpop.permute.xlu0 %2318
  %2320 = vrot.lane.b32.xlu0 %v2062, 32
  %v2321 = vpop.permute.xlu0 %2320
  %2322 = vrot.lane.b32.xlu0 %v2065, 32
  %v2323 = vpop.permute.xlu0 %2322
  %2324 = vrot.lane.b32.xlu0 %v2071, 32
  %v2325 = vpop.permute.xlu0 %2324
  %2326 = vrot.lane.b32.xlu0 %v2074, 32
  %v2327 = vpop.permute.xlu0 %2326
  %2328 = vrot.lane.b32.xlu0 %v2080, 32
  %v2329 = vpop.permute.xlu0 %2328
  %2330 = vrot.lane.b32.xlu0 %v2083, 32
  %v2331 = vpop.permute.xlu0 %2330
  %2332 = vrot.lane.b32.xlu0 %v2089, 32
  %v2333 = vpop.permute.xlu0 %2332
  %2334 = vrot.lane.b32.xlu0 %v2092, 32
  %v2335 = vpop.permute.xlu0 %2334
  %2336 = vrot.lane.b32.xlu0 %v2098, 32
  %v2337 = vpop.permute.xlu0 %2336
  %2338 = vrot.lane.b32.xlu0 %v2101, 32
  %v2339 = vpop.permute.xlu0 %2338
  %2340 = vrot.lane.b32.xlu0 %v2107, 32
  %v2341 = vpop.permute.xlu0 %2340
  %2342 = vrot.lane.b32.xlu0 %v2110, 32
  %v2343 = vpop.permute.xlu0 %2342
  %2344 = vrot.lane.b32.xlu0 %v2116, 32
  %v2345 = vpop.permute.xlu0 %2344
  %2346 = vrot.lane.b32.xlu0 %v2119, 32
  %v2347 = vpop.permute.xlu0 %2346
  %2348 = vrot.lane.b32.xlu0 %v2125, 32
  %v2349 = vpop.permute.xlu0 %2348
  %2350 = vrot.lane.b32.xlu0 %v2128, 32
  %v2351 = vpop.permute.xlu0 %2350
  %2352 = vrot.lane.b32.xlu0 %v2134, 32
  %v2353 = vpop.permute.xlu0 %2352
  %2354 = vrot.lane.b32.xlu0 %v2137, 32
  %v2355 = vpop.permute.xlu0 %2354
  %2356 = vrot.lane.b32.xlu0 %v2143, 32
  %v2357 = vpop.permute.xlu0 %2356
  %2358 = vrot.lane.b32.xlu0 %v2146, 32
  %v2359 = vpop.permute.xlu0 %2358
  %2360 = vrot.lane.b32.xlu0 %v2152, 32
  %v2361 = vpop.permute.xlu0 %2360
  %2362 = vrot.lane.b32.xlu0 %v2155, 32
  %v2363 = vpop.permute.xlu0 %2362
  %2364 = vrot.lane.b32.xlu0 %v2161, 32
  %v2365 = vpop.permute.xlu0 %2364
  %2366 = vrot.lane.b32.xlu0 %v2164, 32
  %v2367 = vpop.permute.xlu0 %2366
  %2368 = vrot.lane.b32.xlu0 %v2170, 32
  %v2369 = vpop.permute.xlu0 %2368
  %2370 = vrot.lane.b32.xlu0 %v2173, 32
  %v2371 = vpop.permute.xlu0 %2370
  %2372 = vrot.lane.b32.xlu0 %v2179, 32
  %v2373 = vpop.permute.xlu0 %2372
  %2374 = vrot.lane.b32.xlu0 %v2182, 32
  %v2375 = vpop.permute.xlu0 %2374
  %2376 = vrot.lane.b32.xlu0 %v2188, 32
  %v2377 = vpop.permute.xlu0 %2376
  %2378 = vrot.lane.b32.xlu0 %v2191, 32
  %v2379 = vpop.permute.xlu0 %2378
  %2380 = vrot.lane.b32.xlu0 %v2197, 32
  %v2381 = vpop.permute.xlu0 %2380
  %2382 = vrot.lane.b32.xlu0 %v2200, 32
  %v2383 = vpop.permute.xlu0 %2382
  %2384 = vrot.lane.b32.xlu0 %v2206, 32
  %v2385 = vpop.permute.xlu0 %2384
  %2386 = vrot.lane.b32.xlu0 %v2209, 32
  %v2387 = vpop.permute.xlu0 %2386
  %2388 = vrot.lane.b32.xlu0 %v2215, 32
  %v2389 = vpop.permute.xlu0 %2388
  %2390 = vrot.lane.b32.xlu0 %v2218, 32
  %v2391 = vpop.permute.xlu0 %2390
  %2392 = vrot.lane.b32.xlu0 %v2224, 32
  %v2393 = vpop.permute.xlu0 %2392
  %2394 = vrot.lane.b32.xlu0 %v2227, 32
  %v2395 = vpop.permute.xlu0 %2394
  %2396 = vrot.lane.b32.xlu0 %v2233, 32
  %v2397 = vpop.permute.xlu0 %2396
  %2398 = vrot.lane.b32.xlu0 %v2236, 32
  %v2399 = vpop.permute.xlu0 %2398
  %2400 = vrot.lane.b32.xlu0 %v2242, 32
  %v2401 = vpop.permute.xlu0 %2400
  %2402 = vrot.lane.b32.xlu0 %v2245, 32
  %v2403 = vpop.permute.xlu0 %2402
  %2404 = vrot.lane.b32.xlu0 %v2251, 32
  %v2405 = vpop.permute.xlu0 %2404
  %2406 = vrot.lane.b32.xlu0 %v2254, 32
  %v2407 = vpop.permute.xlu0 %2406
  %2408 = vrot.lane.b32.xlu0 %v2260, 32
  %v2409 = vpop.permute.xlu0 %2408
  %2410 = vrot.lane.b32.xlu0 %v2263, 32
  %v2411 = vpop.permute.xlu0 %2410
  %2412 = vrot.lane.b32.xlu0 %v2269, 32
  %v2413 = vpop.permute.xlu0 %2412
  %2414 = vrot.lane.b32.xlu0 %v2272, 32
  %v2415 = vpop.permute.xlu0 %2414
  %2416 = vrot.lane.b32.xlu0 %v2278, 32
  %v2417 = vpop.permute.xlu0 %2416
  %2418 = vrot.lane.b32.xlu0 %v2281, 32
  %v2419 = vpop.permute.xlu0 %2418
  %2420 = vrot.lane.b32.xlu0 %v2287, 32
  %v2421 = vpop.permute.xlu0 %2420
  %2422 = vrot.lane.b32.xlu0 %v2290, 32
  %v2423 = vpop.permute.xlu0 %2422
  %2424 = vrot.lane.b32.xlu0 %v2296, 32
  %v2425 = vpop.permute.xlu0 %2424
  %2426 = vrot.lane.b32.xlu0 %v2299, 32
  %v2427 = vpop.permute.xlu0 %2426
  %vm2492 = vcmask 388352
  %2493 = vst.msk [vmem:[%s1134] sm:$0xf] %vm2492, %v2301
  %vm2494 = vcmask 388352
  %vm2495 = vmand %vm2494, %vm2009
  %v2496 = vld [vmem:[%s1134 + $0x4] sm:$0xf]
  %v2497 = vsel %vm2495, %v2303, %v2496
  %2498 = vst [vmem:[%s1134 + $0x4] sm:$0xf] %v2497
  %2499 = vst.msk [vmem:[%s1134 + $0x8] sm:$0xf] %vm2492, %v2305
  %v2500 = vld [vmem:[%s1134 + $0xc] sm:$0xf]
  %v2501 = vsel %vm2495, %v2307, %v2500
  %2502 = vst [vmem:[%s1134 + $0xc] sm:$0xf] %v2501
  %2503 = vst.msk [vmem:[%s1134 + $0x10] sm:$0xf] %vm2492, %v2309
  %v2504 = vld [vmem:[%s1134 + $0x14] sm:$0xf]
  %v2505 = vsel %vm2495, %v2311, %v2504
  %2506 = vst [vmem:[%s1134 + $0x14] sm:$0xf] %v2505
  %2507 = vst.msk [vmem:[%s1134 + $0x18] sm:$0xf] %vm2492, %v2313
  %v2508 = vld [vmem:[%s1134 + $0x1c] sm:$0xf]
  %v2509 = vsel %vm2495, %v2315, %v2508
  %2510 = vst [vmem:[%s1134 + $0x1c] sm:$0xf] %v2509
  %2511 = vst.msk [vmem:[%s1134 + $0x20] sm:$0xf] %vm2492, %v2317
  %v2512 = vld [vmem:[%s1134 + $0x24] sm:$0xf]
  %v2513 = vsel %vm2495, %v2319, %v2512
  %2514 = vst [vmem:[%s1134 + $0x24] sm:$0xf] %v2513
  %2515 = vst.msk [vmem:[%s1134 + $0x28] sm:$0xf] %vm2492, %v2321
  %v2516 = vld [vmem:[%s1134 + $0x2c] sm:$0xf]
  %v2517 = vsel %vm2495, %v2323, %v2516
  %2518 = vst [vmem:[%s1134 + $0x2c] sm:$0xf] %v2517
  %2519 = vst.msk [vmem:[%s1134 + $0x30] sm:$0xf] %vm2492, %v2325
  %v2520 = vld [vmem:[%s1134 + $0x34] sm:$0xf]
  %v2521 = vsel %vm2495, %v2327, %v2520
  %2522 = vst [vmem:[%s1134 + $0x34] sm:$0xf] %v2521
  %2523 = vst.msk [vmem:[%s1134 + $0x38] sm:$0xf] %vm2492, %v2329
  %v2524 = vld [vmem:[%s1134 + $0x3c] sm:$0xf]
  %v2525 = vsel %vm2495, %v2331, %v2524
  %2526 = vst [vmem:[%s1134 + $0x3c] sm:$0xf] %v2525
  %2527 = vst.msk [vmem:[%s1134 + $0x40] sm:$0xf] %vm2492, %v2333
  %v2528 = vld [vmem:[%s1134 + $0x44] sm:$0xf]
  %v2529 = vsel %vm2495, %v2335, %v2528
  %2530 = vst [vmem:[%s1134 + $0x44] sm:$0xf] %v2529
  %2531 = vst.msk [vmem:[%s1134 + $0x48] sm:$0xf] %vm2492, %v2337
  %v2532 = vld [vmem:[%s1134 + $0x4c] sm:$0xf]
  %v2533 = vsel %vm2495, %v2339, %v2532
  %2534 = vst [vmem:[%s1134 + $0x4c] sm:$0xf] %v2533
  %2535 = vst.msk [vmem:[%s1134 + $0x50] sm:$0xf] %vm2492, %v2341
  %v2536 = vld [vmem:[%s1134 + $0x54] sm:$0xf]
  %v2537 = vsel %vm2495, %v2343, %v2536
  %2538 = vst [vmem:[%s1134 + $0x54] sm:$0xf] %v2537
  %2539 = vst.msk [vmem:[%s1134 + $0x58] sm:$0xf] %vm2492, %v2345
  %v2540 = vld [vmem:[%s1134 + $0x5c] sm:$0xf]
  %v2541 = vsel %vm2495, %v2347, %v2540
  %2542 = vst [vmem:[%s1134 + $0x5c] sm:$0xf] %v2541
  %2543 = vst.msk [vmem:[%s1134 + $0x60] sm:$0xf] %vm2492, %v2349
  %v2544 = vld [vmem:[%s1134 + $0x64] sm:$0xf]
  %v2545 = vsel %vm2495, %v2351, %v2544
  %2546 = vst [vmem:[%s1134 + $0x64] sm:$0xf] %v2545
  %2547 = vst.msk [vmem:[%s1134 + $0x68] sm:$0xf] %vm2492, %v2353
  %v2548 = vld [vmem:[%s1134 + $0x6c] sm:$0xf]
  %v2549 = vsel %vm2495, %v2355, %v2548
  %2550 = vst [vmem:[%s1134 + $0x6c] sm:$0xf] %v2549
  %2551 = vst.msk [vmem:[%s1134 + $0x70] sm:$0xf] %vm2492, %v2357
  %v2552 = vld [vmem:[%s1134 + $0x74] sm:$0xf]
  %v2553 = vsel %vm2495, %v2359, %v2552
  %2554 = vst [vmem:[%s1134 + $0x74] sm:$0xf] %v2553
  %2555 = vst.msk [vmem:[%s1134 + $0x78] sm:$0xf] %vm2492, %v2361
  %v2556 = vld [vmem:[%s1134 + $0x7c] sm:$0xf]
  %v2557 = vsel %vm2495, %v2363, %v2556
  %2558 = vst [vmem:[%s1134 + $0x7c] sm:$0xf] %v2557
  %2559 = vst.msk [vmem:[%s1134 + $0x90] sm:$0xf] %vm2492, %v2365
  %v2560 = vld [vmem:[%s1134 + $0x94] sm:$0xf]
  %v2561 = vsel %vm2495, %v2367, %v2560
  %2562 = vst [vmem:[%s1134 + $0x94] sm:$0xf] %v2561
  %2563 = vst.msk [vmem:[%s1134 + $0x98] sm:$0xf] %vm2492, %v2369
  %v2564 = vld [vmem:[%s1134 + $0x9c] sm:$0xf]
  %v2565 = vsel %vm2495, %v2371, %v2564
  %2566 = vst [vmem:[%s1134 + $0x9c] sm:$0xf] %v2565
  %2567 = vst.msk [vmem:[%s1134 + $0xa0] sm:$0xf] %vm2492, %v2373
  %v2568 = vld [vmem:[%s1134 + $0xa4] sm:$0xf]
  %v2569 = vsel %vm2495, %v2375, %v2568
  %2570 = vst [vmem:[%s1134 + $0xa4] sm:$0xf] %v2569
  %2571 = vst.msk [vmem:[%s1134 + $0xa8] sm:$0xf] %vm2492, %v2377
  %v2572 = vld [vmem:[%s1134 + $0xac] sm:$0xf]
  %v2573 = vsel %vm2495, %v2379, %v2572
  %2574 = vst [vmem:[%s1134 + $0xac] sm:$0xf] %v2573
  %2575 = vst.msk [vmem:[%s1134 + $0xb0] sm:$0xf] %vm2492, %v2381
  %v2576 = vld [vmem:[%s1134 + $0xb4] sm:$0xf]
  %v2577 = vsel %vm2495, %v2383, %v2576
  %2578 = vst [vmem:[%s1134 + $0xb4] sm:$0xf] %v2577
  %2579 = vst.msk [vmem:[%s1134 + $0xb8] sm:$0xf] %vm2492, %v2385
  %v2580 = vld [vmem:[%s1134 + $0xbc] sm:$0xf]
  %v2581 = vsel %vm2495, %v2387, %v2580
  %2582 = vst [vmem:[%s1134 + $0xbc] sm:$0xf] %v2581
  %2583 = vst.msk [vmem:[%s1134 + $0xc0] sm:$0xf] %vm2492, %v2389
  %v2584 = vld [vmem:[%s1134 + $0xc4] sm:$0xf]
  %v2585 = vsel %vm2495, %v2391, %v2584
  %2586 = vst [vmem:[%s1134 + $0xc4] sm:$0xf] %v2585
  %2587 = vst.msk [vmem:[%s1134 + $0xc8] sm:$0xf] %vm2492, %v2393
  %v2588 = vld [vmem:[%s1134 + $0xcc] sm:$0xf]
  %v2589 = vsel %vm2495, %v2395, %v2588
  %2590 = vst [vmem:[%s1134 + $0xcc] sm:$0xf] %v2589
  %2591 = vst.msk [vmem:[%s1134 + $0xd0] sm:$0xf] %vm2492, %v2397
  %v2592 = vld [vmem:[%s1134 + $0xd4] sm:$0xf]
  %v2593 = vsel %vm2495, %v2399, %v2592
  %2594 = vst [vmem:[%s1134 + $0xd4] sm:$0xf] %v2593
  %2595 = vst.msk [vmem:[%s1134 + $0xd8] sm:$0xf] %vm2492, %v2401
  %v2596 = vld [vmem:[%s1134 + $0xdc] sm:$0xf]
  %v2597 = vsel %vm2495, %v2403, %v2596
  %2598 = vst [vmem:[%s1134 + $0xdc] sm:$0xf] %v2597
  %2599 = vst.msk [vmem:[%s1134 + $0xe0] sm:$0xf] %vm2492, %v2405
  %v2600 = vld [vmem:[%s1134 + $0xe4] sm:$0xf]
  %v2601 = vsel %vm2495, %v2407, %v2600
  %2602 = vst [vmem:[%s1134 + $0xe4] sm:$0xf] %v2601
  %2603 = vst.msk [vmem:[%s1134 + $0xe8] sm:$0xf] %vm2492, %v2409
  %v2604 = vld [vmem:[%s1134 + $0xec] sm:$0xf]
  %v2605 = vsel %vm2495, %v2411, %v2604
  %2606 = vst [vmem:[%s1134 + $0xec] sm:$0xf] %v2605
  %2607 = vst.msk [vmem:[%s1134 + $0xf0] sm:$0xf] %vm2492, %v2413
  %v2608 = vld [vmem:[%s1134 + $0xf4] sm:$0xf]
  %v2609 = vsel %vm2495, %v2415, %v2608
  %2610 = vst [vmem:[%s1134 + $0xf4] sm:$0xf] %v2609
  %2611 = vst.msk [vmem:[%s1134 + $0xf8] sm:$0xf] %vm2492, %v2417
  %v2612 = vld [vmem:[%s1134 + $0xfc] sm:$0xf]
  %v2613 = vsel %vm2495, %v2419, %v2612
  %2614 = vst [vmem:[%s1134 + $0xfc] sm:$0xf] %v2613
  %2615 = vst.msk [vmem:[%s1134 + $0x100] sm:$0xf] %vm2492, %v2421
  %v2616 = vld [vmem:[%s1134 + $0x104] sm:$0xf]
  %v2617 = vsel %vm2495, %v2423, %v2616
  %2618 = vst [vmem:[%s1134 + $0x104] sm:$0xf] %v2617
  %2619 = vst.msk [vmem:[%s1134 + $0x108] sm:$0xf] %vm2492, %v2425
  %v2620 = vld [vmem:[%s1134 + $0x10c] sm:$0xf]
  %v2621 = vsel %vm2495, %v2427, %v2620
  %2622 = vst [vmem:[%s1134 + $0x10c] sm:$0xf] %v2621
  %vm2623 = vcmask 388355
  %vm2624 = vsmask.f32 7950
  %vm2625 = vmand %vm2623, %vm2624
  %v2626 = vld [vmem:[%s1134 + $0x4] sm:$0x8]
  %v2627 = vsel %vm2625, 0, %v2626
  %2628 = vst [vmem:[%s1134 + $0x4] sm:$0x8] %v2627
  %v2629 = vld [vmem:[%s1134 + $0xc] sm:$0x8]
  %v2630 = vsel %vm2625, 0, %v2629
  %2631 = vst [vmem:[%s1134 + $0xc] sm:$0x8] %v2630
  %v2632 = vld [vmem:[%s1134 + $0x14] sm:$0x8]
  %v2633 = vsel %vm2625, 0, %v2632
  %2634 = vst [vmem:[%s1134 + $0x14] sm:$0x8] %v2633
  %v2635 = vld [vmem:[%s1134 + $0x1c] sm:$0x8]
  %v2636 = vsel %vm2625, 0, %v2635
  %2637 = vst [vmem:[%s1134 + $0x1c] sm:$0x8] %v2636
  %v2638 = vld [vmem:[%s1134 + $0x24] sm:$0x8]
  %v2639 = vsel %vm2625, 0, %v2638
  %2640 = vst [vmem:[%s1134 + $0x24] sm:$0x8] %v2639
  %v2641 = vld [vmem:[%s1134 + $0x2c] sm:$0x8]
  %v2642 = vsel %vm2625, 0, %v2641
  %2643 = vst [vmem:[%s1134 + $0x2c] sm:$0x8] %v2642
  %v2644 = vld [vmem:[%s1134 + $0x34] sm:$0x8]
  %v2645 = vsel %vm2625, 0, %v2644
  %2646 = vst [vmem:[%s1134 + $0x34] sm:$0x8] %v2645
  %v2647 = vld [vmem:[%s1134 + $0x3c] sm:$0x8]
  %v2648 = vsel %vm2625, 0, %v2647
  %2649 = vst [vmem:[%s1134 + $0x3c] sm:$0x8] %v2648
  %v2650 = vld [vmem:[%s1134 + $0x44] sm:$0x8]
  %v2651 = vsel %vm2625, 0, %v2650
  %2652 = vst [vmem:[%s1134 + $0x44] sm:$0x8] %v2651
  %v2653 = vld [vmem:[%s1134 + $0x4c] sm:$0x8]
  %v2654 = vsel %vm2625, 0, %v2653
  %2655 = vst [vmem:[%s1134 + $0x4c] sm:$0x8] %v2654
  %v2656 = vld [vmem:[%s1134 + $0x54] sm:$0x8]
  %v2657 = vsel %vm2625, 0, %v2656
  %2658 = vst [vmem:[%s1134 + $0x54] sm:$0x8] %v2657
  %v2659 = vld [vmem:[%s1134 + $0x5c] sm:$0x8]
  %v2660 = vsel %vm2625, 0, %v2659
  %2661 = vst [vmem:[%s1134 + $0x5c] sm:$0x8] %v2660
  %v2662 = vld [vmem:[%s1134 + $0x64] sm:$0x8]
  %v2663 = vsel %vm2625, 0, %v2662
  %2664 = vst [vmem:[%s1134 + $0x64] sm:$0x8] %v2663
  %v2665 = vld [vmem:[%s1134 + $0x6c] sm:$0x8]
  %v2666 = vsel %vm2625, 0, %v2665
  %2667 = vst [vmem:[%s1134 + $0x6c] sm:$0x8] %v2666
  %v2668 = vld [vmem:[%s1134 + $0x74] sm:$0x8]
  %v2669 = vsel %vm2625, 0, %v2668
  %2670 = vst [vmem:[%s1134 + $0x74] sm:$0x8] %v2669
  %v2671 = vld [vmem:[%s1134 + $0x7c] sm:$0x8]
  %v2672 = vsel %vm2625, 0, %v2671
  %2673 = vst [vmem:[%s1134 + $0x7c] sm:$0x8] %v2672
  %v2674 = vld [vmem:[%s1134 + $0x94] sm:$0x8]
  %v2675 = vsel %vm2625, 0, %v2674
  %2676 = vst [vmem:[%s1134 + $0x94] sm:$0x8] %v2675
  %v2677 = vld [vmem:[%s1134 + $0x9c] sm:$0x8]
  %v2678 = vsel %vm2625, 0, %v2677
  %2679 = vst [vmem:[%s1134 + $0x9c] sm:$0x8] %v2678
  %v2680 = vld [vmem:[%s1134 + $0xa4] sm:$0x8]
  %v2681 = vsel %vm2625, 0, %v2680
  %2682 = vst [vmem:[%s1134 + $0xa4] sm:$0x8] %v2681
  %v2683 = vld [vmem:[%s1134 + $0xac] sm:$0x8]
  %v2684 = vsel %vm2625, 0, %v2683
  %2685 = vst [vmem:[%s1134 + $0xac] sm:$0x8] %v2684
  %v2686 = vld [vmem:[%s1134 + $0xb4] sm:$0x8]
  %v2687 = vsel %vm2625, 0, %v2686
  %2688 = vst [vmem:[%s1134 + $0xb4] sm:$0x8] %v2687
  %v2689 = vld [vmem:[%s1134 + $0xbc] sm:$0x8]
  %v2690 = vsel %vm2625, 0, %v2689
  %2691 = vst [vmem:[%s1134 + $0xbc] sm:$0x8] %v2690
  %v2692 = vld [vmem:[%s1134 + $0xc4] sm:$0x8]
  %v2693 = vsel %vm2625, 0, %v2692
  %2694 = vst [vmem:[%s1134 + $0xc4] sm:$0x8] %v2693
  %v2695 = vld [vmem:[%s1134 + $0xcc] sm:$0x8]
  %v2696 = vsel %vm2625, 0, %v2695
  %2697 = vst [vmem:[%s1134 + $0xcc] sm:$0x8] %v2696
  %v2698 = vld [vmem:[%s1134 + $0xd4] sm:$0x8]
  %v2699 = vsel %vm2625, 0, %v2698
  %2700 = vst [vmem:[%s1134 + $0xd4] sm:$0x8] %v2699
  %v2701 = vld [vmem:[%s1134 + $0xdc] sm:$0x8]
  %v2702 = vsel %vm2625, 0, %v2701
  %2703 = vst [vmem:[%s1134 + $0xdc] sm:$0x8] %v2702
  %v2704 = vld [vmem:[%s1134 + $0xe4] sm:$0x8]
  %v2705 = vsel %vm2625, 0, %v2704
  %2706 = vst [vmem:[%s1134 + $0xe4] sm:$0x8] %v2705
  %v2707 = vld [vmem:[%s1134 + $0xec] sm:$0x8]
  %v2708 = vsel %vm2625, 0, %v2707
  %2709 = vst [vmem:[%s1134 + $0xec] sm:$0x8] %v2708
  %v2710 = vld [vmem:[%s1134 + $0xf4] sm:$0x8]
  %v2711 = vsel %vm2625, 0, %v2710
  %2712 = vst [vmem:[%s1134 + $0xf4] sm:$0x8] %v2711
  %v2713 = vld [vmem:[%s1134 + $0xfc] sm:$0x8]
  %v2714 = vsel %vm2625, 0, %v2713
  %2715 = vst [vmem:[%s1134 + $0xfc] sm:$0x8] %v2714
  %v2716 = vld [vmem:[%s1134 + $0x104] sm:$0x8]
  %v2717 = vsel %vm2625, 0, %v2716
  %2718 = vst [vmem:[%s1134 + $0x104] sm:$0x8] %v2717
  %v2719 = vld [vmem:[%s1134 + $0x10c] sm:$0x8]
  %v2720 = vsel %vm2625, 0, %v2719
  %2721 = vst [vmem:[%s1134 + $0x10c] sm:$0x8] %v2720
  %v2722 = vld [vmem:[#allocation2] sm:$0xf]
  %v2723 = vld [vmem:[#allocation2 + $0x4] sm:$0xf]
  %v2724 = vld [vmem:[#allocation2 + $0x8] sm:$0xf]
  %v2725 = vld [vmem:[#allocation2 + $0xc] sm:$0xf]
  %v2726 = vld [vmem:[#allocation2 + $0x10] sm:$0xf]
  %v2727 = vld [vmem:[#allocation2 + $0x14] sm:$0xf]
  %v2728 = vld [vmem:[#allocation2 + $0x18] sm:$0xf]
  %v2729 = vld [vmem:[#allocation2 + $0x1c] sm:$0xf]
  %v2730 = vld [vmem:[#allocation2 + $0x20] sm:$0xf]
  %v2731 = vld [vmem:[#allocation2 + $0x24] sm:$0xf]
  %v2732 = vld [vmem:[#allocation2 + $0x28] sm:$0xf]
  %v2733 = vld [vmem:[#allocation2 + $0x2c] sm:$0xf]
  %v2734 = vld [vmem:[#allocation2 + $0x30] sm:$0xf]
  %v2735 = vld [vmem:[#allocation2 + $0x34] sm:$0xf]
  %v2736 = vld [vmem:[#allocation2 + $0x38] sm:$0xf]
  %v2737 = vld [vmem:[#allocation2 + $0x3c] sm:$0xf]
  %v2738 = vld [vmem:[#allocation2 + $0x40] sm:$0xf]
  %v2739 = vld [vmem:[#allocation2 + $0x44] sm:$0xf]
  %v2740 = vld [vmem:[#allocation2 + $0x48] sm:$0xf]
  %v2741 = vld [vmem:[#allocation2 + $0x4c] sm:$0xf]
  %v2742 = vld [vmem:[#allocation2 + $0x50] sm:$0xf]
  %v2743 = vld [vmem:[#allocation2 + $0x54] sm:$0xf]
  %v2744 = vld [vmem:[#allocation2 + $0x58] sm:$0xf]
  %v2745 = vld [vmem:[#allocation2 + $0x5c] sm:$0xf]
  %v2746 = vld [vmem:[#allocation2 + $0x60] sm:$0xf]
  %v2747 = vld [vmem:[#allocation2 + $0x64] sm:$0xf]
  %v2748 = vld [vmem:[#allocation2 + $0x68] sm:$0xf]
  %v2749 = vld [vmem:[#allocation2 + $0x6c] sm:$0xf]
  %v2750 = vld [vmem:[#allocation2 + $0x70] sm:$0xf]
  %v2751 = vld [vmem:[#allocation2 + $0x74] sm:$0xf]
  %v2752 = vld [vmem:[#allocation2 + $0x78] sm:$0xf]
  %v2753 = vld [vmem:[#allocation2 + $0x7c] sm:$0xf]
  %v2754 = vld [vmem:[#allocation2 + $0x90] sm:$0xf]
  %v2755 = vld [vmem:[#allocation2 + $0x94] sm:$0xf]
  %v2756 = vld [vmem:[#allocation2 + $0x98] sm:$0xf]
  %v2757 = vld [vmem:[#allocation2 + $0x9c] sm:$0xf]
  %v2758 = vld [vmem:[#allocation2 + $0xa0] sm:$0xf]
  %v2759 = vld [vmem:[#allocation2 + $0xa4] sm:$0xf]
  %v2760 = vld [vmem:[#allocation2 + $0xa8] sm:$0xf]
  %v2761 = vld [vmem:[#allocation2 + $0xac] sm:$0xf]
  %v2762 = vld [vmem:[#allocation2 + $0xb0] sm:$0xf]
  %v2763 = vld [vmem:[#allocation2 + $0xb4] sm:$0xf]
  %v2764 = vld [vmem:[#allocation2 + $0xb8] sm:$0xf]
  %v2765 = vld [vmem:[#allocation2 + $0xbc] sm:$0xf]
  %v2766 = vld [vmem:[#allocation2 + $0xc0] sm:$0xf]
  %v2767 = vld [vmem:[#allocation2 + $0xc4] sm:$0xf]
  %v2768 = vld [vmem:[#allocation2 + $0xc8] sm:$0xf]
  %v2769 = vld [vmem:[#allocation2 + $0xcc] sm:$0xf]
  %v2770 = vld [vmem:[#allocation2 + $0xd0] sm:$0xf]
  %v2771 = vld [vmem:[#allocation2 + $0xd4] sm:$0xf]
  %v2772 = vld [vmem:[#allocation2 + $0xd8] sm:$0xf]
  %v2773 = vld [vmem:[#allocation2 + $0xdc] sm:$0xf]
  %v2774 = vld [vmem:[#allocation2 + $0xe0] sm:$0xf]
  %v2775 = vld [vmem:[#allocation2 + $0xe4] sm:$0xf]
  %v2776 = vld [vmem:[#allocation2 + $0xe8] sm:$0xf]
  %v2777 = vld [vmem:[#allocation2 + $0xec] sm:$0xf]
  %v2778 = vld [vmem:[#allocation2 + $0xf0] sm:$0xf]
  %v2779 = vld [vmem:[#allocation2 + $0xf4] sm:$0xf]
  %v2780 = vld [vmem:[#allocation2 + $0xf8] sm:$0xf]
  %v2781 = vld [vmem:[#allocation2 + $0xfc] sm:$0xf]
  %v2782 = vld [vmem:[#allocation2 + $0x100] sm:$0xf]
  %v2783 = vld [vmem:[#allocation2 + $0x104] sm:$0xf]
  %v2784 = vld [vmem:[#allocation2 + $0x108] sm:$0xf]
  %v2785 = vld [vmem:[#allocation2 + $0x10c] sm:$0xf]
  %v2786 = vld [vmem:[%s3] sm:$0xf]
  %v2787 = vld [vmem:[%s3 + $0x4] sm:$0xf]
  %v2788 = vld [vmem:[%s3 + $0x8] sm:$0xf]
  %v2789 = vld [vmem:[%s3 + $0xc] sm:$0xf]
  %v2790 = vld [vmem:[%s3 + $0x10] sm:$0xf]
  %v2791 = vld [vmem:[%s3 + $0x14] sm:$0xf]
  %v2792 = vld [vmem:[%s1134] sm:$0xf]
  %v2793 = vld [vmem:[%s1134 + $0x4] sm:$0xf]
  %v2794 = vld [vmem:[%s1134 + $0x8] sm:$0xf]
  %v2795 = vld [vmem:[%s1134 + $0xc] sm:$0xf]
  %v2796 = vld [vmem:[%s1134 + $0x10] sm:$0xf]
  %v2797 = vld [vmem:[%s1134 + $0x14] sm:$0xf]
  %v2798 = vld [vmem:[%s1134 + $0x18] sm:$0xf]
  %v2799 = vld [vmem:[%s1134 + $0x1c] sm:$0xf]
  %v2800 = vld [vmem:[%s1134 + $0x20] sm:$0xf]
  %v2801 = vld [vmem:[%s1134 + $0x24] sm:$0xf]
  %v2802 = vld [vmem:[%s1134 + $0x28] sm:$0xf]
  %v2803 = vld [vmem:[%s1134 + $0x2c] sm:$0xf]
  %v2804 = vld [vmem:[%s1134 + $0x30] sm:$0xf]
  %v2805 = vld [vmem:[%s1134 + $0x34] sm:$0xf]
  %v2806 = vld [vmem:[%s1134 + $0x38] sm:$0xf]
  %v2807 = vld [vmem:[%s1134 + $0x3c] sm:$0xf]
  %v2808 = vld [vmem:[%s1134 + $0x40] sm:$0xf]
  %v2809 = vld [vmem:[%s1134 + $0x44] sm:$0xf]
  %v2810 = vld [vmem:[%s1134 + $0x48] sm:$0xf]
  %v2811 = vld [vmem:[%s1134 + $0x4c] sm:$0xf]
  %v2812 = vld [vmem:[%s1134 + $0x50] sm:$0xf]
  %v2813 = vld [vmem:[%s1134 + $0x54] sm:$0xf]
  %v2814 = vld [vmem:[%s1134 + $0x58] sm:$0xf]
  %v2815 = vld [vmem:[%s1134 + $0x5c] sm:$0xf]
  %v2816 = vld [vmem:[%s1134 + $0x60] sm:$0xf]
  %v2817 = vld [vmem:[%s1134 + $0x64] sm:$0xf]
  %v2818 = vld [vmem:[%s1134 + $0x68] sm:$0xf]
  %v2819 = vld [vmem:[%s1134 + $0x6c] sm:$0xf]
  %v2820 = vld [vmem:[%s1134 + $0x70] sm:$0xf]
  %v2821 = vld [vmem:[%s1134 + $0x74] sm:$0xf]
  %v2822 = vld [vmem:[%s1134 + $0x78] sm:$0xf]
  %v2823 = vld [vmem:[%s1134 + $0x7c] sm:$0xf]
  %v2824 = vld [vmem:[%s1134 + $0x90] sm:$0xf]
  %v2825 = vld [vmem:[%s1134 + $0x94] sm:$0xf]
  %v2826 = vld [vmem:[%s1134 + $0x98] sm:$0xf]
  %v2827 = vld [vmem:[%s1134 + $0x9c] sm:$0xf]
  %v2828 = vld [vmem:[%s1134 + $0xa0] sm:$0xf]
  %v2829 = vld [vmem:[%s1134 + $0xa4] sm:$0xf]
  %v2830 = vld [vmem:[%s1134 + $0xa8] sm:$0xf]
  %v2831 = vld [vmem:[%s1134 + $0xac] sm:$0xf]
  %v2832 = vld [vmem:[%s1134 + $0xb0] sm:$0xf]
  %v2833 = vld [vmem:[%s1134 + $0xb4] sm:$0xf]
  %v2834 = vld [vmem:[%s1134 + $0xb8] sm:$0xf]
  %v2835 = vld [vmem:[%s1134 + $0xbc] sm:$0xf]
  %v2836 = vld [vmem:[%s1134 + $0xc0] sm:$0xf]
  %v2837 = vld [vmem:[%s1134 + $0xc4] sm:$0xf]
  %v2838 = vld [vmem:[%s1134 + $0xc8] sm:$0xf]
  %v2839 = vld [vmem:[%s1134 + $0xcc] sm:$0xf]
  %v2840 = vld [vmem:[%s1134 + $0xd0] sm:$0xf]
  %v2841 = vld [vmem:[%s1134 + $0xd4] sm:$0xf]
  %v2842 = vld [vmem:[%s1134 + $0xd8] sm:$0xf]
  %v2843 = vld [vmem:[%s1134 + $0xdc] sm:$0xf]
  %v2844 = vld [vmem:[%s1134 + $0xe0] sm:$0xf]
  %v2845 = vld [vmem:[%s1134 + $0xe4] sm:$0xf]
  %v2846 = vld [vmem:[%s1134 + $0xe8] sm:$0xf]
  %v2847 = vld [vmem:[%s1134 + $0xec] sm:$0xf]
  %v2848 = vld [vmem:[%s1134 + $0xf0] sm:$0xf]
  %v2849 = vld [vmem:[%s1134 + $0xf4] sm:$0xf]
  %v2850 = vld [vmem:[%s1134 + $0xf8] sm:$0xf]
  %v2851 = vld [vmem:[%s1134 + $0xfc] sm:$0xf]
  %v2852 = vld [vmem:[%s1134 + $0x100] sm:$0xf]
  %v2853 = vld [vmem:[%s1134 + $0x104] sm:$0xf]
  %v2854 = vld [vmem:[%s1134 + $0x108] sm:$0xf]
  %v2855 = vld [vmem:[%s1134 + $0x10c] sm:$0xf]
  %s2856 = scalar_lea.vmem %s3, 24
  %v2857 = vld [vmem:[%s2856] sm:$0xf]
  %v2858 = vld [vmem:[%s2856 + $0x4] sm:$0xf]
  %v2859 = vld [vmem:[%s2856 + $0x8] sm:$0xf]
  %v2860 = vld [vmem:[%s2856 + $0xc] sm:$0xf]
  %v2861 = vld [vmem:[%s2856 + $0x10] sm:$0xf]
  %v2862 = vld [vmem:[%s2856 + $0x14] sm:$0xf]
  %v2927 = vunpack.c.l.b16 %v2792
  %v2928 = vunpack.c.l.b16 %v2793
  %v2929 = vunpack.c.l.b16 %v2794
  %v2930 = vunpack.c.l.b16 %v2795
  %v2931 = vunpack.c.l.b16 %v2796
  %v2932 = vunpack.c.l.b16 %v2797
  %v2933 = vunpack.c.l.b16 %v2798
  %v2934 = vunpack.c.l.b16 %v2799
  %v2935 = vunpack.c.l.b16 %v2800
  %v2936 = vunpack.c.l.b16 %v2801
  %v2937 = vunpack.c.l.b16 %v2802
  %v2938 = vunpack.c.l.b16 %v2803
  %v2939 = vunpack.c.l.b16 %v2804
  %v2940 = vunpack.c.l.b16 %v2805
  %v2941 = vunpack.c.l.b16 %v2806
  %v2942 = vunpack.c.l.b16 %v2807
  %v2943 = vunpack.c.l.b16 %v2808
  %v2944 = vunpack.c.l.b16 %v2809
  %v2945 = vunpack.c.l.b16 %v2810
  %v2946 = vunpack.c.l.b16 %v2811
  %v2947 = vunpack.c.l.b16 %v2812
  %v2948 = vunpack.c.l.b16 %v2813
  %v2949 = vunpack.c.l.b16 %v2814
  %v2950 = vunpack.c.l.b16 %v2815
  %v2951 = vunpack.c.l.b16 %v2816
  %v2952 = vunpack.c.l.b16 %v2817
  %v2953 = vunpack.c.l.b16 %v2818
  %v2954 = vunpack.c.l.b16 %v2819
  %v2955 = vunpack.c.l.b16 %v2820
  %v2956 = vunpack.c.l.b16 %v2821
  %v2957 = vunpack.c.l.b16 %v2822
  %v2958 = vunpack.c.l.b16 %v2823
  %v2959 = vunpack.c.l.b16 %v2824
  %v2960 = vunpack.c.l.b16 %v2825
  %v2961 = vunpack.c.l.b16 %v2826
  %v2962 = vunpack.c.l.b16 %v2827
  %v2963 = vunpack.c.l.b16 %v2828
  %v2964 = vunpack.c.l.b16 %v2829
  %v2965 = vunpack.c.l.b16 %v2830
  %v2966 = vunpack.c.l.b16 %v2831
  %v2967 = vunpack.c.l.b16 %v2832
  %v2968 = vunpack.c.l.b16 %v2833
  %v2969 = vunpack.c.l.b16 %v2834
  %v2970 = vunpack.c.l.b16 %v2835
  %v2971 = vunpack.c.l.b16 %v2836
  %v2972 = vunpack.c.l.b16 %v2837
  %v2973 = vunpack.c.l.b16 %v2838
  %v2974 = vunpack.c.l.b16 %v2839
  %v2975 = vunpack.c.l.b16 %v2840
  %v2976 = vunpack.c.l.b16 %v2841
  %v2977 = vunpack.c.l.b16 %v2842
  %v2978 = vunpack.c.l.b16 %v2843
  %v2979 = vunpack.c.l.b16 %v2844
  %v2980 = vunpack.c.l.b16 %v2845
  %v2981 = vunpack.c.l.b16 %v2846
  %v2982 = vunpack.c.l.b16 %v2847
  %v2983 = vunpack.c.l.b16 %v2848
  %v2984 = vunpack.c.l.b16 %v2849
  %v2985 = vunpack.c.l.b16 %v2850
  %v2986 = vunpack.c.l.b16 %v2851
  %v2987 = vunpack.c.l.b16 %v2852
  %v2988 = vunpack.c.l.b16 %v2853
  %v2989 = vunpack.c.l.b16 %v2854
  %v2990 = vunpack.c.l.b16 %v2855
  %v2991 = vpack.c.b16 %v2928, %v2927
  %v2992 = vpack.c.b16 %v2930, %v2929
  %v2993 = vpack.c.b16 %v2932, %v2931
  %v2994 = vpack.c.b16 %v2934, %v2933
  %v2995 = vpack.c.b16 %v2936, %v2935
  %v2996 = vpack.c.b16 %v2938, %v2937
  %v2997 = vpack.c.b16 %v2940, %v2939
  %v2998 = vpack.c.b16 %v2942, %v2941
  %v2999 = vpack.c.b16 %v2944, %v2943
  %v3000 = vpack.c.b16 %v2946, %v2945
  %v3001 = vpack.c.b16 %v2948, %v2947
  %v3002 = vpack.c.b16 %v2950, %v2949
  %v3003 = vpack.c.b16 %v2952, %v2951
  %v3004 = vpack.c.b16 %v2954, %v2953
  %v3005 = vpack.c.b16 %v2956, %v2955
  %v3006 = vpack.c.b16 %v2958, %v2957
  %v3007 = vpack.c.b16 %v2960, %v2959
  %v3008 = vpack.c.b16 %v2962, %v2961
  %v3009 = vpack.c.b16 %v2964, %v2963
  %v3010 = vpack.c.b16 %v2966, %v2965
  %v3011 = vpack.c.b16 %v2968, %v2967
  %v3012 = vpack.c.b16 %v2970, %v2969
  %v3013 = vpack.c.b16 %v2972, %v2971
  %v3014 = vpack.c.b16 %v2974, %v2973
  %v3015 = vpack.c.b16 %v2976, %v2975
  %v3016 = vpack.c.b16 %v2978, %v2977
  %v3017 = vpack.c.b16 %v2980, %v2979
  %v3018 = vpack.c.b16 %v2982, %v2981
  %v3019 = vpack.c.b16 %v2984, %v2983
  %v3020 = vpack.c.b16 %v2986, %v2985
  %v3021 = vpack.c.b16 %v2988, %v2987
  %v3022 = vpack.c.b16 %v2990, %v2989
  %v3029 = vunpack.c.l.b16 %v2857
  %v3030 = vunpack.c.l.b16 %v2858
  %v3031 = vunpack.c.l.b16 %v2859
  %v3032 = vunpack.c.l.b16 %v2860
  %v3033 = vunpack.c.l.b16 %v2861
  %v3034 = vunpack.c.l.b16 %v2862
  %v3035 = vpack.c.b16 %v3030, %v3029
  %v3036 = vpack.c.b16 %v3032, %v3031
  %v3037 = vpack.c.b16 %v3034, %v3033
  %vm3041 = vcmask 392192
  %v3043 = vsel %vm3041, %v2991, 0
  %v3046 = vsel %vm3041, %v2992, 0
  %v3049 = vsel %vm3041, %v2993, 0
  %v3052 = vsel %vm3041, %v2994, 0
  %v3055 = vsel %vm3041, %v2995, 0
  %v3058 = vsel %vm3041, %v2996, 0
  %v3061 = vsel %vm3041, %v2997, 0
  %v3064 = vsel %vm3041, %v2998, 0
  %v3067 = vsel %vm3041, %v2999, 0
  %v3070 = vsel %vm3041, %v3000, 0
  %v3073 = vsel %vm3041, %v3001, 0
  %v3076 = vsel %vm3041, %v3002, 0
  %v3079 = vsel %vm3041, %v3003, 0
  %v3082 = vsel %vm3041, %v3004, 0
  %v3085 = vsel %vm3041, %v3005, 0
  %v3088 = vsel %vm3041, %v3006, 0
  %v3091 = vsel %vm3041, %v3007, 0
  %v3094 = vsel %vm3041, %v3008, 0
  %v3097 = vsel %vm3041, %v3009, 0
  %v3100 = vsel %vm3041, %v3010, 0
  %v3103 = vsel %vm3041, %v3011, 0
  %v3106 = vsel %vm3041, %v3012, 0
  %v3109 = vsel %vm3041, %v3013, 0
  %v3112 = vsel %vm3041, %v3014, 0
  %v3115 = vsel %vm3041, %v3015, 0
  %v3118 = vsel %vm3041, %v3016, 0
  %v3121 = vsel %vm3041, %v3017, 0
  %v3124 = vsel %vm3041, %v3018, 0
  %v3127 = vsel %vm3041, %v3019, 0
  %v3130 = vsel %vm3041, %v3020, 0
  %v3133 = vsel %vm3041, %v3021, 0
  %v3136 = vsel %vm3041, %v3022, 0
  %3138 = vmatprep.subr.bf16.mxu0 0
  %3139 = vmatpush1.bf16.msra.mxu0 0
  %3140 = vmatprep.subr.bf16.mxu0 0
  %3141 = vmatpush1.bf16.msra.mxu0 0
  %3142 = vmatprep.subr.bf16.mxu0 0
  %3143 = vmatpush1.bf16.msra.mxu0 0
  %3144 = vmatprep.subr.bf16.mxu0 0
  %3145 = vmatpush1.bf16.msra.mxu0 0
  %3146 = vmatprep.subr.bf16.mxu0 0
  %3147 = vmatpush1.bf16.msra.mxu0 0
  %3148 = vmatprep.subr.bf16.mxu0 0
  %3149 = vmatpush1.bf16.msra.mxu0 %v3037
  %3150 = vmatprep.subr.bf16.mxu0 0
  %3151 = vmatpush1.bf16.msra.mxu0 %v3036
  %3152 = vmatprep.subr.bf16.mxu0 0
  %3153 = vmatpush1.bf16.msra.mxu0 %v3035
  %3154 = vmatprep.subr.bf16.mxu0 0
  %3155 = vmatpush2.bf16.msra.mxu0 0
  %3156 = vmatprep.subr.bf16.mxu0 0
  %3157 = vmatpush2.bf16.msra.mxu0 0
  %3158 = vmatprep.subr.bf16.mxu0 0
  %3159 = vmatpush2.bf16.msra.mxu0 0
  %3160 = vmatprep.subr.bf16.mxu0 0
  %3161 = vmatpush2.bf16.msra.mxu0 0
  %3162 = vmatprep.subr.bf16.mxu0 0
  %3163 = vmatpush2.bf16.msra.mxu0 0
  %3164 = vmatprep.subr.bf16.mxu0 0
  %3165 = vmatpush2.bf16.msra.mxu0 0
  %3166 = vmatprep.subr.bf16.mxu0 0
  %3167 = vmatpush2.bf16.msra.mxu0 0
  %3168 = vmatprep.subr.bf16.mxu0 0
  %3169 = vmatpush2.bf16.msra.mxu0 0
  %3170 = vmatprep.mubr.bf16.mxu0 0
  %3171 = vmatmul.mubr.bf16.gmra.mxu0 %v3043
  %v3172 = vpop.f32.mrf.mxu0
  %v3173 = vadd.f32 0.0, %v3172
  %v3174 = vpop.f32.mrf.mxu0
  %v3175 = vpop.f32.mrf.mxu0
  %v3176 = vadd.f32 0.0, %v3175
  %v3177 = vpop.f32.mrf.mxu0
  %3178 = vmatprep.mubr.bf16.mxu0 0
  %3179 = vmatmul.mubr.bf16.gmra.mxu0 %v3046
  %v3180 = vpop.f32.mrf.mxu0
  %v3181 = vadd.f32 0.0, %v3180
  %v3182 = vpop.f32.mrf.mxu0
  %v3183 = vpop.f32.mrf.mxu0
  %v3184 = vadd.f32 0.0, %v3183
  %v3185 = vpop.f32.mrf.mxu0
  %3186 = vmatprep.mubr.bf16.mxu0 0
  %3187 = vmatmul.mubr.bf16.gmra.mxu0 %v3049
  %v3188 = vpop.f32.mrf.mxu0
  %v3189 = vadd.f32 0.0, %v3188
  %v3190 = vpop.f32.mrf.mxu0
  %v3191 = vpop.f32.mrf.mxu0
  %v3192 = vadd.f32 0.0, %v3191
  %v3193 = vpop.f32.mrf.mxu0
  %3194 = vmatprep.mubr.bf16.mxu0 0
  %3195 = vmatmul.mubr.bf16.gmra.mxu0 %v3052
  %v3196 = vpop.f32.mrf.mxu0
  %v3197 = vadd.f32 0.0, %v3196
  %v3198 = vpop.f32.mrf.mxu0
  %v3199 = vpop.f32.mrf.mxu0
  %v3200 = vadd.f32 0.0, %v3199
  %v3201 = vpop.f32.mrf.mxu0
  %3202 = vmatprep.mubr.bf16.mxu0 0
  %3203 = vmatmul.mubr.bf16.gmra.mxu0 %v3055
  %v3204 = vpop.f32.mrf.mxu0
  %v3205 = vadd.f32 0.0, %v3204
  %v3206 = vpop.f32.mrf.mxu0
  %v3207 = vpop.f32.mrf.mxu0
  %v3208 = vadd.f32 0.0, %v3207
  %v3209 = vpop.f32.mrf.mxu0
  %3210 = vmatprep.mubr.bf16.mxu0 0
  %3211 = vmatmul.mubr.bf16.gmra.mxu0 %v3058
  %v3212 = vpop.f32.mrf.mxu0
  %v3213 = vadd.f32 0.0, %v3212
  %v3214 = vpop.f32.mrf.mxu0
  %v3215 = vpop.f32.mrf.mxu0
  %v3216 = vadd.f32 0.0, %v3215
  %v3217 = vpop.f32.mrf.mxu0
  %3218 = vmatprep.mubr.bf16.mxu0 0
  %3219 = vmatmul.mubr.bf16.gmra.mxu0 %v3061
  %v3220 = vpop.f32.mrf.mxu0
  %v3221 = vadd.f32 0.0, %v3220
  %v3222 = vpop.f32.mrf.mxu0
  %v3223 = vpop.f32.mrf.mxu0
  %v3224 = vadd.f32 0.0, %v3223
  %v3225 = vpop.f32.mrf.mxu0
  %3226 = vmatprep.mubr.bf16.mxu0 0
  %3227 = vmatmul.mubr.bf16.gmra.mxu0 %v3064
  %v3228 = vpop.f32.mrf.mxu0
  %v3229 = vadd.f32 0.0, %v3228
  %v3230 = vpop.f32.mrf.mxu0
  %v3231 = vpop.f32.mrf.mxu0
  %v3232 = vadd.f32 0.0, %v3231
  %v3233 = vpop.f32.mrf.mxu0
  %3234 = vmatprep.mubr.bf16.mxu0 0
  %3235 = vmatmul.mubr.bf16.gmra.mxu0 %v3067
  %v3236 = vpop.f32.mrf.mxu0
  %v3237 = vadd.f32 0.0, %v3236
  %v3238 = vpop.f32.mrf.mxu0
  %v3239 = vpop.f32.mrf.mxu0
  %v3240 = vadd.f32 0.0, %v3239
  %v3241 = vpop.f32.mrf.mxu0
  %3242 = vmatprep.mubr.bf16.mxu0 0
  %3243 = vmatmul.mubr.bf16.gmra.mxu0 %v3070
  %v3244 = vpop.f32.mrf.mxu0
  %v3245 = vadd.f32 0.0, %v3244
  %v3246 = vpop.f32.mrf.mxu0
  %v3247 = vpop.f32.mrf.mxu0
  %v3248 = vadd.f32 0.0, %v3247
  %v3249 = vpop.f32.mrf.mxu0
  %3250 = vmatprep.mubr.bf16.mxu0 0
  %3251 = vmatmul.mubr.bf16.gmra.mxu0 %v3073
  %v3252 = vpop.f32.mrf.mxu0
  %v3253 = vadd.f32 0.0, %v3252
  %v3254 = vpop.f32.mrf.mxu0
  %v3255 = vpop.f32.mrf.mxu0
  %v3256 = vadd.f32 0.0, %v3255
  %v3257 = vpop.f32.mrf.mxu0
  %3258 = vmatprep.mubr.bf16.mxu0 0
  %3259 = vmatmul.mubr.bf16.gmra.mxu0 %v3076
  %v3260 = vpop.f32.mrf.mxu0
  %v3261 = vadd.f32 0.0, %v3260
  %v3262 = vpop.f32.mrf.mxu0
  %v3263 = vpop.f32.mrf.mxu0
  %v3264 = vadd.f32 0.0, %v3263
  %v3265 = vpop.f32.mrf.mxu0
  %3266 = vmatprep.mubr.bf16.mxu0 0
  %3267 = vmatmul.mubr.bf16.gmra.mxu0 %v3079
  %v3268 = vpop.f32.mrf.mxu0
  %v3269 = vadd.f32 0.0, %v3268
  %v3270 = vpop.f32.mrf.mxu0
  %v3271 = vpop.f32.mrf.mxu0
  %v3272 = vadd.f32 0.0, %v3271
  %v3273 = vpop.f32.mrf.mxu0
  %3274 = vmatprep.mubr.bf16.mxu0 0
  %3275 = vmatmul.mubr.bf16.gmra.mxu0 %v3082
  %v3276 = vpop.f32.mrf.mxu0
  %v3277 = vadd.f32 0.0, %v3276
  %v3278 = vpop.f32.mrf.mxu0
  %v3279 = vpop.f32.mrf.mxu0
  %v3280 = vadd.f32 0.0, %v3279
  %v3281 = vpop.f32.mrf.mxu0
  %3282 = vmatprep.mubr.bf16.mxu0 0
  %3283 = vmatmul.mubr.bf16.gmra.mxu0 %v3085
  %v3284 = vpop.f32.mrf.mxu0
  %v3285 = vadd.f32 0.0, %v3284
  %v3286 = vpop.f32.mrf.mxu0
  %v3287 = vpop.f32.mrf.mxu0
  %v3288 = vadd.f32 0.0, %v3287
  %v3289 = vpop.f32.mrf.mxu0
  %3290 = vmatprep.mubr.bf16.mxu0 0
  %3291 = vmatmul.mubr.bf16.gmra.mxu0 %v3088
  %v3292 = vpop.f32.mrf.mxu0
  %v3293 = vadd.f32 0.0, %v3292
  %v3294 = vpop.f32.mrf.mxu0
  %v3295 = vpop.f32.mrf.mxu0
  %v3296 = vadd.f32 0.0, %v3295
  %v3297 = vpop.f32.mrf.mxu0
  %3298 = vmatprep.mubr.bf16.mxu0 0
  %3299 = vmatmul.mubr.bf16.gmra.mxu0 %v3091
  %v3300 = vpop.f32.mrf.mxu0
  %v3301 = vadd.f32 0.0, %v3300
  %v3302 = vpop.f32.mrf.mxu0
  %v3303 = vpop.f32.mrf.mxu0
  %v3304 = vadd.f32 0.0, %v3303
  %v3305 = vpop.f32.mrf.mxu0
  %3306 = vmatprep.mubr.bf16.mxu0 0
  %3307 = vmatmul.mubr.bf16.gmra.mxu0 %v3094
  %v3308 = vpop.f32.mrf.mxu0
  %v3309 = vadd.f32 0.0, %v3308
  %v3310 = vpop.f32.mrf.mxu0
  %v3311 = vpop.f32.mrf.mxu0
  %v3312 = vadd.f32 0.0, %v3311
  %v3313 = vpop.f32.mrf.mxu0
  %3314 = vmatprep.mubr.bf16.mxu0 0
  %3315 = vmatmul.mubr.bf16.gmra.mxu0 %v3097
  %v3316 = vpop.f32.mrf.mxu0
  %v3317 = vadd.f32 0.0, %v3316
  %v3318 = vpop.f32.mrf.mxu0
  %v3319 = vpop.f32.mrf.mxu0
  %v3320 = vadd.f32 0.0, %v3319
  %v3321 = vpop.f32.mrf.mxu0
  %3322 = vmatprep.mubr.bf16.mxu0 0
  %3323 = vmatmul.mubr.bf16.gmra.mxu0 %v3100
  %v3324 = vpop.f32.mrf.mxu0
  %v3325 = vadd.f32 0.0, %v3324
  %v3326 = vpop.f32.mrf.mxu0
  %v3327 = vpop.f32.mrf.mxu0
  %v3328 = vadd.f32 0.0, %v3327
  %v3329 = vpop.f32.mrf.mxu0
  %3330 = vmatprep.mubr.bf16.mxu0 0
  %3331 = vmatmul.mubr.bf16.gmra.mxu0 %v3103
  %v3332 = vpop.f32.mrf.mxu0
  %v3333 = vadd.f32 0.0, %v3332
  %v3334 = vpop.f32.mrf.mxu0
  %v3335 = vpop.f32.mrf.mxu0
  %v3336 = vadd.f32 0.0, %v3335
  %v3337 = vpop.f32.mrf.mxu0
  %3338 = vmatprep.mubr.bf16.mxu0 0
  %3339 = vmatmul.mubr.bf16.gmra.mxu0 %v3106
  %v3340 = vpop.f32.mrf.mxu0
  %v3341 = vadd.f32 0.0, %v3340
  %v3342 = vpop.f32.mrf.mxu0
  %v3343 = vpop.f32.mrf.mxu0
  %v3344 = vadd.f32 0.0, %v3343
  %v3345 = vpop.f32.mrf.mxu0
  %3346 = vmatprep.mubr.bf16.mxu0 0
  %3347 = vmatmul.mubr.bf16.gmra.mxu0 %v3109
  %v3348 = vpop.f32.mrf.mxu0
  %v3349 = vadd.f32 0.0, %v3348
  %v3350 = vpop.f32.mrf.mxu0
  %v3351 = vpop.f32.mrf.mxu0
  %v3352 = vadd.f32 0.0, %v3351
  %v3353 = vpop.f32.mrf.mxu0
  %3354 = vmatprep.mubr.bf16.mxu0 0
  %3355 = vmatmul.mubr.bf16.gmra.mxu0 %v3112
  %v3356 = vpop.f32.mrf.mxu0
  %v3357 = vadd.f32 0.0, %v3356
  %v3358 = vpop.f32.mrf.mxu0
  %v3359 = vpop.f32.mrf.mxu0
  %v3360 = vadd.f32 0.0, %v3359
  %v3361 = vpop.f32.mrf.mxu0
  %3362 = vmatprep.mubr.bf16.mxu0 0
  %3363 = vmatmul.mubr.bf16.gmra.mxu0 %v3115
  %v3364 = vpop.f32.mrf.mxu0
  %v3365 = vadd.f32 0.0, %v3364
  %v3366 = vpop.f32.mrf.mxu0
  %v3367 = vpop.f32.mrf.mxu0
  %v3368 = vadd.f32 0.0, %v3367
  %v3369 = vpop.f32.mrf.mxu0
  %3370 = vmatprep.mubr.bf16.mxu0 0
  %3371 = vmatmul.mubr.bf16.gmra.mxu0 %v3118
  %v3372 = vpop.f32.mrf.mxu0
  %v3373 = vadd.f32 0.0, %v3372
  %v3374 = vpop.f32.mrf.mxu0
  %v3375 = vpop.f32.mrf.mxu0
  %v3376 = vadd.f32 0.0, %v3375
  %v3377 = vpop.f32.mrf.mxu0
  %3378 = vmatprep.mubr.bf16.mxu0 0
  %3379 = vmatmul.mubr.bf16.gmra.mxu0 %v3121
  %v3380 = vpop.f32.mrf.mxu0
  %v3381 = vadd.f32 0.0, %v3380
  %v3382 = vpop.f32.mrf.mxu0
  %v3383 = vpop.f32.mrf.mxu0
  %v3384 = vadd.f32 0.0, %v3383
  %v3385 = vpop.f32.mrf.mxu0
  %3386 = vmatprep.mubr.bf16.mxu0 0
  %3387 = vmatmul.mubr.bf16.gmra.mxu0 %v3124
  %v3388 = vpop.f32.mrf.mxu0
  %v3389 = vadd.f32 0.0, %v3388
  %v3390 = vpop.f32.mrf.mxu0
  %v3391 = vpop.f32.mrf.mxu0
  %v3392 = vadd.f32 0.0, %v3391
  %v3393 = vpop.f32.mrf.mxu0
  %3394 = vmatprep.mubr.bf16.mxu0 0
  %3395 = vmatmul.mubr.bf16.gmra.mxu0 %v3127
  %v3396 = vpop.f32.mrf.mxu0
  %v3397 = vadd.f32 0.0, %v3396
  %v3398 = vpop.f32.mrf.mxu0
  %v3399 = vpop.f32.mrf.mxu0
  %v3400 = vadd.f32 0.0, %v3399
  %v3401 = vpop.f32.mrf.mxu0
  %3402 = vmatprep.mubr.bf16.mxu0 0
  %3403 = vmatmul.mubr.bf16.gmra.mxu0 %v3130
  %v3404 = vpop.f32.mrf.mxu0
  %v3405 = vadd.f32 0.0, %v3404
  %v3406 = vpop.f32.mrf.mxu0
  %v3407 = vpop.f32.mrf.mxu0
  %v3408 = vadd.f32 0.0, %v3407
  %v3409 = vpop.f32.mrf.mxu0
  %3410 = vmatprep.mubr.bf16.mxu0 0
  %3411 = vmatmul.mubr.bf16.gmra.mxu0 %v3133
  %v3412 = vpop.f32.mrf.mxu0
  %v3413 = vadd.f32 0.0, %v3412
  %v3414 = vpop.f32.mrf.mxu0
  %v3415 = vpop.f32.mrf.mxu0
  %v3416 = vadd.f32 0.0, %v3415
  %v3417 = vpop.f32.mrf.mxu0
  %3418 = vmatprep.mubr.bf16.mxu0 0
  %3419 = vmatmul.mubr.bf16.gmra.mxu0 %v3136
  %v3420 = vpop.f32.mrf.mxu0
  %v3421 = vadd.f32 0.0, %v3420
  %v3422 = vpop.f32.mrf.mxu0
  %v3423 = vpop.f32.mrf.mxu0
  %v3424 = vadd.f32 0.0, %v3423
  %v3425 = vpop.f32.mrf.mxu0
  %3426 = vdwg.mxu0
  %v3491 = vunpack.c.l.b16 %v2722
  %v3492 = vunpack.c.l.b16 %v2723
  %v3493 = vunpack.c.l.b16 %v2724
  %v3494 = vunpack.c.l.b16 %v2725
  %v3495 = vunpack.c.l.b16 %v2726
  %v3496 = vunpack.c.l.b16 %v2727
  %v3497 = vunpack.c.l.b16 %v2728
  %v3498 = vunpack.c.l.b16 %v2729
  %v3499 = vunpack.c.l.b16 %v2730
  %v3500 = vunpack.c.l.b16 %v2731
  %v3501 = vunpack.c.l.b16 %v2732
  %v3502 = vunpack.c.l.b16 %v2733
  %v3503 = vunpack.c.l.b16 %v2734
  %v3504 = vunpack.c.l.b16 %v2735
  %v3505 = vunpack.c.l.b16 %v2736
  %v3506 = vunpack.c.l.b16 %v2737
  %v3507 = vunpack.c.l.b16 %v2738
  %v3508 = vunpack.c.l.b16 %v2739
  %v3509 = vunpack.c.l.b16 %v2740
  %v3510 = vunpack.c.l.b16 %v2741
  %v3511 = vunpack.c.l.b16 %v2742
  %v3512 = vunpack.c.l.b16 %v2743
  %v3513 = vunpack.c.l.b16 %v2744
  %v3514 = vunpack.c.l.b16 %v2745
  %v3515 = vunpack.c.l.b16 %v2746
  %v3516 = vunpack.c.l.b16 %v2747
  %v3517 = vunpack.c.l.b16 %v2748
  %v3518 = vunpack.c.l.b16 %v2749
  %v3519 = vunpack.c.l.b16 %v2750
  %v3520 = vunpack.c.l.b16 %v2751
  %v3521 = vunpack.c.l.b16 %v2752
  %v3522 = vunpack.c.l.b16 %v2753
  %v3523 = vunpack.c.l.b16 %v2754
  %v3524 = vunpack.c.l.b16 %v2755
  %v3525 = vunpack.c.l.b16 %v2756
  %v3526 = vunpack.c.l.b16 %v2757
  %v3527 = vunpack.c.l.b16 %v2758
  %v3528 = vunpack.c.l.b16 %v2759
  %v3529 = vunpack.c.l.b16 %v2760
  %v3530 = vunpack.c.l.b16 %v2761
  %v3531 = vunpack.c.l.b16 %v2762
  %v3532 = vunpack.c.l.b16 %v2763
  %v3533 = vunpack.c.l.b16 %v2764
  %v3534 = vunpack.c.l.b16 %v2765
  %v3535 = vunpack.c.l.b16 %v2766
  %v3536 = vunpack.c.l.b16 %v2767
  %v3537 = vunpack.c.l.b16 %v2768
  %v3538 = vunpack.c.l.b16 %v2769
  %v3539 = vunpack.c.l.b16 %v2770
  %v3540 = vunpack.c.l.b16 %v2771
  %v3541 = vunpack.c.l.b16 %v2772
  %v3542 = vunpack.c.l.b16 %v2773
  %v3543 = vunpack.c.l.b16 %v2774
  %v3544 = vunpack.c.l.b16 %v2775
  %v3545 = vunpack.c.l.b16 %v2776
  %v3546 = vunpack.c.l.b16 %v2777
  %v3547 = vunpack.c.l.b16 %v2778
  %v3548 = vunpack.c.l.b16 %v2779
  %v3549 = vunpack.c.l.b16 %v2780
  %v3550 = vunpack.c.l.b16 %v2781
  %v3551 = vunpack.c.l.b16 %v2782
  %v3552 = vunpack.c.l.b16 %v2783
  %v3553 = vunpack.c.l.b16 %v2784
  %v3554 = vunpack.c.l.b16 %v2785
  %v3555 = vpack.c.b16 %v3492, %v3491
  %v3556 = vpack.c.b16 %v3494, %v3493
  %v3557 = vpack.c.b16 %v3496, %v3495
  %v3558 = vpack.c.b16 %v3498, %v3497
  %v3559 = vpack.c.b16 %v3500, %v3499
  %v3560 = vpack.c.b16 %v3502, %v3501
  %v3561 = vpack.c.b16 %v3504, %v3503
  %v3562 = vpack.c.b16 %v3506, %v3505
  %v3563 = vpack.c.b16 %v3508, %v3507
  %v3564 = vpack.c.b16 %v3510, %v3509
  %v3565 = vpack.c.b16 %v3512, %v3511
  %v3566 = vpack.c.b16 %v3514, %v3513
  %v3567 = vpack.c.b16 %v3516, %v3515
  %v3568 = vpack.c.b16 %v3518, %v3517
  %v3569 = vpack.c.b16 %v3520, %v3519
  %v3570 = vpack.c.b16 %v3522, %v3521
  %v3571 = vpack.c.b16 %v3524, %v3523
  %v3572 = vpack.c.b16 %v3526, %v3525
  %v3573 = vpack.c.b16 %v3528, %v3527
  %v3574 = vpack.c.b16 %v3530, %v3529
  %v3575 = vpack.c.b16 %v3532, %v3531
  %v3576 = vpack.c.b16 %v3534, %v3533
  %v3577 = vpack.c.b16 %v3536, %v3535
  %v3578 = vpack.c.b16 %v3538, %v3537
  %v3579 = vpack.c.b16 %v3540, %v3539
  %v3580 = vpack.c.b16 %v3542, %v3541
  %v3581 = vpack.c.b16 %v3544, %v3543
  %v3582 = vpack.c.b16 %v3546, %v3545
  %v3583 = vpack.c.b16 %v3548, %v3547
  %v3584 = vpack.c.b16 %v3550, %v3549
  %v3585 = vpack.c.b16 %v3552, %v3551
  %v3586 = vpack.c.b16 %v3554, %v3553
  %v3593 = vunpack.c.l.b16 %v2786
  %v3594 = vunpack.c.l.b16 %v2787
  %v3595 = vunpack.c.l.b16 %v2788
  %v3596 = vunpack.c.l.b16 %v2789
  %v3597 = vunpack.c.l.b16 %v2790
  %v3598 = vunpack.c.l.b16 %v2791
  %v3599 = vpack.c.b16 %v3594, %v3593
  %v3600 = vpack.c.b16 %v3596, %v3595
  %v3601 = vpack.c.b16 %v3598, %v3597
  %v3606 = vsel %vm3041, %v3555, 0
  %v3609 = vsel %vm3041, %v3556, 0
  %v3612 = vsel %vm3041, %v3557, 0
  %v3615 = vsel %vm3041, %v3558, 0
  %v3618 = vsel %vm3041, %v3559, 0
  %v3621 = vsel %vm3041, %v3560, 0
  %v3624 = vsel %vm3041, %v3561, 0
  %v3627 = vsel %vm3041, %v3562, 0
  %v3630 = vsel %vm3041, %v3563, 0
  %v3633 = vsel %vm3041, %v3564, 0
  %v3636 = vsel %vm3041, %v3565, 0
  %v3639 = vsel %vm3041, %v3566, 0
  %v3642 = vsel %vm3041, %v3567, 0
  %v3645 = vsel %vm3041, %v3568, 0
  %v3648 = vsel %vm3041, %v3569, 0
  %v3651 = vsel %vm3041, %v3570, 0
  %v3654 = vsel %vm3041, %v3571, 0
  %v3657 = vsel %vm3041, %v3572, 0
  %v3660 = vsel %vm3041, %v3573, 0
  %v3663 = vsel %vm3041, %v3574, 0
  %v3666 = vsel %vm3041, %v3575, 0
  %v3669 = vsel %vm3041, %v3576, 0
  %v3672 = vsel %vm3041, %v3577, 0
  %v3675 = vsel %vm3041, %v3578, 0
  %v3678 = vsel %vm3041, %v3579, 0
  %v3681 = vsel %vm3041, %v3580, 0
  %v3684 = vsel %vm3041, %v3581, 0
  %v3687 = vsel %vm3041, %v3582, 0
  %v3690 = vsel %vm3041, %v3583, 0
  %v3693 = vsel %vm3041, %v3584, 0
  %v3696 = vsel %vm3041, %v3585, 0
  %v3699 = vsel %vm3041, %v3586, 0
  %3701 = vmatprep.subr.bf16.mxu0 0
  %3702 = vmatpush1.bf16.msra.mxu0 0
  %3703 = vmatprep.subr.bf16.mxu0 0
  %3704 = vmatpush1.bf16.msra.mxu0 0
  %3705 = vmatprep.subr.bf16.mxu0 0
  %3706 = vmatpush1.bf16.msra.mxu0 0
  %3707 = vmatprep.subr.bf16.mxu0 0
  %3708 = vmatpush1.bf16.msra.mxu0 0
  %3709 = vmatprep.subr.bf16.mxu0 0
  %3710 = vmatpush1.bf16.msra.mxu0 0
  %3711 = vmatprep.subr.bf16.mxu0 0
  %3712 = vmatpush1.bf16.msra.mxu0 %v3601
  %3713 = vmatprep.subr.bf16.mxu0 0
  %3714 = vmatpush1.bf16.msra.mxu0 %v3600
  %3715 = vmatprep.subr.bf16.mxu0 0
  %3716 = vmatpush1.bf16.msra.mxu0 %v3599
  %3717 = vmatprep.subr.bf16.mxu0 0
  %3718 = vmatpush2.bf16.msra.mxu0 0
  %3719 = vmatprep.subr.bf16.mxu0 0
  %3720 = vmatpush2.bf16.msra.mxu0 0
  %3721 = vmatprep.subr.bf16.mxu0 0
  %3722 = vmatpush2.bf16.msra.mxu0 0
  %3723 = vmatprep.subr.bf16.mxu0 0
  %3724 = vmatpush2.bf16.msra.mxu0 0
  %3725 = vmatprep.subr.bf16.mxu0 0
  %3726 = vmatpush2.bf16.msra.mxu0 0
  %3727 = vmatprep.subr.bf16.mxu0 0
  %3728 = vmatpush2.bf16.msra.mxu0 0
  %3729 = vmatprep.subr.bf16.mxu0 0
  %3730 = vmatpush2.bf16.msra.mxu0 0
  %3731 = vmatprep.subr.bf16.mxu0 0
  %3732 = vmatpush2.bf16.msra.mxu0 0
  %3733 = vmatprep.mubr.bf16.mxu0 0
  %3734 = vmatmul.mubr.bf16.gmra.mxu0 %v3606
  %v3735 = vpop.f32.mrf.mxu0
  %v3736 = vadd.f32 %v3173, %v3735
  %v3737 = vpop.f32.mrf.mxu0
  %v3738 = vpop.f32.mrf.mxu0
  %v3739 = vadd.f32 %v3176, %v3738
  %v3740 = vpop.f32.mrf.mxu0
  %3741 = vmatprep.mubr.bf16.mxu0 0
  %3742 = vmatmul.mubr.bf16.gmra.mxu0 %v3609
  %v3743 = vpop.f32.mrf.mxu0
  %v3744 = vadd.f32 %v3181, %v3743
  %v3745 = vpop.f32.mrf.mxu0
  %v3746 = vpop.f32.mrf.mxu0
  %v3747 = vadd.f32 %v3184, %v3746
  %v3748 = vpop.f32.mrf.mxu0
  %3749 = vmatprep.mubr.bf16.mxu0 0
  %3750 = vmatmul.mubr.bf16.gmra.mxu0 %v3612
  %v3751 = vpop.f32.mrf.mxu0
  %v3752 = vadd.f32 %v3189, %v3751
  %v3753 = vpop.f32.mrf.mxu0
  %v3754 = vpop.f32.mrf.mxu0
  %v3755 = vadd.f32 %v3192, %v3754
  %v3756 = vpop.f32.mrf.mxu0
  %3757 = vmatprep.mubr.bf16.mxu0 0
  %3758 = vmatmul.mubr.bf16.gmra.mxu0 %v3615
  %v3759 = vpop.f32.mrf.mxu0
  %v3760 = vadd.f32 %v3197, %v3759
  %v3761 = vpop.f32.mrf.mxu0
  %v3762 = vpop.f32.mrf.mxu0
  %v3763 = vadd.f32 %v3200, %v3762
  %v3764 = vpop.f32.mrf.mxu0
  %3765 = vmatprep.mubr.bf16.mxu0 0
  %3766 = vmatmul.mubr.bf16.gmra.mxu0 %v3618
  %v3767 = vpop.f32.mrf.mxu0
  %v3768 = vadd.f32 %v3205, %v3767
  %v3769 = vpop.f32.mrf.mxu0
  %v3770 = vpop.f32.mrf.mxu0
  %v3771 = vadd.f32 %v3208, %v3770
  %v3772 = vpop.f32.mrf.mxu0
  %3773 = vmatprep.mubr.bf16.mxu0 0
  %3774 = vmatmul.mubr.bf16.gmra.mxu0 %v3621
  %v3775 = vpop.f32.mrf.mxu0
  %v3776 = vadd.f32 %v3213, %v3775
  %v3777 = vpop.f32.mrf.mxu0
  %v3778 = vpop.f32.mrf.mxu0
  %v3779 = vadd.f32 %v3216, %v3778
  %v3780 = vpop.f32.mrf.mxu0
  %3781 = vmatprep.mubr.bf16.mxu0 0
  %3782 = vmatmul.mubr.bf16.gmra.mxu0 %v3624
  %v3783 = vpop.f32.mrf.mxu0
  %v3784 = vadd.f32 %v3221, %v3783
  %v3785 = vpop.f32.mrf.mxu0
  %v3786 = vpop.f32.mrf.mxu0
  %v3787 = vadd.f32 %v3224, %v3786
  %v3788 = vpop.f32.mrf.mxu0
  %3789 = vmatprep.mubr.bf16.mxu0 0
  %3790 = vmatmul.mubr.bf16.gmra.mxu0 %v3627
  %v3791 = vpop.f32.mrf.mxu0
  %v3792 = vadd.f32 %v3229, %v3791
  %v3793 = vpop.f32.mrf.mxu0
  %v3794 = vpop.f32.mrf.mxu0
  %v3795 = vadd.f32 %v3232, %v3794
  %v3796 = vpop.f32.mrf.mxu0
  %3797 = vmatprep.mubr.bf16.mxu0 0
  %3798 = vmatmul.mubr.bf16.gmra.mxu0 %v3630
  %v3799 = vpop.f32.mrf.mxu0
  %v3800 = vadd.f32 %v3237, %v3799
  %v3801 = vpop.f32.mrf.mxu0
  %v3802 = vpop.f32.mrf.mxu0
  %v3803 = vadd.f32 %v3240, %v3802
  %v3804 = vpop.f32.mrf.mxu0
  %3805 = vmatprep.mubr.bf16.mxu0 0
  %3806 = vmatmul.mubr.bf16.gmra.mxu0 %v3633
  %v3807 = vpop.f32.mrf.mxu0
  %v3808 = vadd.f32 %v3245, %v3807
  %v3809 = vpop.f32.mrf.mxu0
  %v3810 = vpop.f32.mrf.mxu0
  %v3811 = vadd.f32 %v3248, %v3810
  %v3812 = vpop.f32.mrf.mxu0
  %3813 = vmatprep.mubr.bf16.mxu0 0
  %3814 = vmatmul.mubr.bf16.gmra.mxu0 %v3636
  %v3815 = vpop.f32.mrf.mxu0
  %v3816 = vadd.f32 %v3253, %v3815
  %v3817 = vpop.f32.mrf.mxu0
  %v3818 = vpop.f32.mrf.mxu0
  %v3819 = vadd.f32 %v3256, %v3818
  %v3820 = vpop.f32.mrf.mxu0
  %3821 = vmatprep.mubr.bf16.mxu0 0
  %3822 = vmatmul.mubr.bf16.gmra.mxu0 %v3639
  %v3823 = vpop.f32.mrf.mxu0
  %v3824 = vadd.f32 %v3261, %v3823
  %v3825 = vpop.f32.mrf.mxu0
  %v3826 = vpop.f32.mrf.mxu0
  %v3827 = vadd.f32 %v3264, %v3826
  %v3828 = vpop.f32.mrf.mxu0
  %3829 = vmatprep.mubr.bf16.mxu0 0
  %3830 = vmatmul.mubr.bf16.gmra.mxu0 %v3642
  %v3831 = vpop.f32.mrf.mxu0
  %v3832 = vadd.f32 %v3269, %v3831
  %v3833 = vpop.f32.mrf.mxu0
  %v3834 = vpop.f32.mrf.mxu0
  %v3835 = vadd.f32 %v3272, %v3834
  %v3836 = vpop.f32.mrf.mxu0
  %3837 = vmatprep.mubr.bf16.mxu0 0
  %3838 = vmatmul.mubr.bf16.gmra.mxu0 %v3645
  %v3839 = vpop.f32.mrf.mxu0
  %v3840 = vadd.f32 %v3277, %v3839
  %v3841 = vpop.f32.mrf.mxu0
  %v3842 = vpop.f32.mrf.mxu0
  %v3843 = vadd.f32 %v3280, %v3842
  %v3844 = vpop.f32.mrf.mxu0
  %3845 = vmatprep.mubr.bf16.mxu0 0
  %3846 = vmatmul.mubr.bf16.gmra.mxu0 %v3648
  %v3847 = vpop.f32.mrf.mxu0
  %v3848 = vadd.f32 %v3285, %v3847
  %v3849 = vpop.f32.mrf.mxu0
  %v3850 = vpop.f32.mrf.mxu0
  %v3851 = vadd.f32 %v3288, %v3850
  %v3852 = vpop.f32.mrf.mxu0
  %3853 = vmatprep.mubr.bf16.mxu0 0
  %3854 = vmatmul.mubr.bf16.gmra.mxu0 %v3651
  %v3855 = vpop.f32.mrf.mxu0
  %v3856 = vadd.f32 %v3293, %v3855
  %v3857 = vpop.f32.mrf.mxu0
  %v3858 = vpop.f32.mrf.mxu0
  %v3859 = vadd.f32 %v3296, %v3858
  %v3860 = vpop.f32.mrf.mxu0
  %3861 = vmatprep.mubr.bf16.mxu0 0
  %3862 = vmatmul.mubr.bf16.gmra.mxu0 %v3654
  %v3863 = vpop.f32.mrf.mxu0
  %v3864 = vadd.f32 %v3301, %v3863
  %v3865 = vpop.f32.mrf.mxu0
  %v3866 = vpop.f32.mrf.mxu0
  %v3867 = vadd.f32 %v3304, %v3866
  %v3868 = vpop.f32.mrf.mxu0
  %3869 = vmatprep.mubr.bf16.mxu0 0
  %3870 = vmatmul.mubr.bf16.gmra.mxu0 %v3657
  %v3871 = vpop.f32.mrf.mxu0
  %v3872 = vadd.f32 %v3309, %v3871
  %v3873 = vpop.f32.mrf.mxu0
  %v3874 = vpop.f32.mrf.mxu0
  %v3875 = vadd.f32 %v3312, %v3874
  %v3876 = vpop.f32.mrf.mxu0
  %3877 = vmatprep.mubr.bf16.mxu0 0
  %3878 = vmatmul.mubr.bf16.gmra.mxu0 %v3660
  %v3879 = vpop.f32.mrf.mxu0
  %v3880 = vadd.f32 %v3317, %v3879
  %v3881 = vpop.f32.mrf.mxu0
  %v3882 = vpop.f32.mrf.mxu0
  %v3883 = vadd.f32 %v3320, %v3882
  %v3884 = vpop.f32.mrf.mxu0
  %3885 = vmatprep.mubr.bf16.mxu0 0
  %3886 = vmatmul.mubr.bf16.gmra.mxu0 %v3663
  %v3887 = vpop.f32.mrf.mxu0
  %v3888 = vadd.f32 %v3325, %v3887
  %v3889 = vpop.f32.mrf.mxu0
  %v3890 = vpop.f32.mrf.mxu0
  %v3891 = vadd.f32 %v3328, %v3890
  %v3892 = vpop.f32.mrf.mxu0
  %3893 = vmatprep.mubr.bf16.mxu0 0
  %3894 = vmatmul.mubr.bf16.gmra.mxu0 %v3666
  %v3895 = vpop.f32.mrf.mxu0
  %v3896 = vadd.f32 %v3333, %v3895
  %v3897 = vpop.f32.mrf.mxu0
  %v3898 = vpop.f32.mrf.mxu0
  %v3899 = vadd.f32 %v3336, %v3898
  %v3900 = vpop.f32.mrf.mxu0
  %3901 = vmatprep.mubr.bf16.mxu0 0
  %3902 = vmatmul.mubr.bf16.gmra.mxu0 %v3669
  %v3903 = vpop.f32.mrf.mxu0
  %v3904 = vadd.f32 %v3341, %v3903
  %v3905 = vpop.f32.mrf.mxu0
  %v3906 = vpop.f32.mrf.mxu0
  %v3907 = vadd.f32 %v3344, %v3906
  %v3908 = vpop.f32.mrf.mxu0
  %3909 = vmatprep.mubr.bf16.mxu0 0
  %3910 = vmatmul.mubr.bf16.gmra.mxu0 %v3672
  %v3911 = vpop.f32.mrf.mxu0
  %v3912 = vadd.f32 %v3349, %v3911
  %v3913 = vpop.f32.mrf.mxu0
  %v3914 = vpop.f32.mrf.mxu0
  %v3915 = vadd.f32 %v3352, %v3914
  %v3916 = vpop.f32.mrf.mxu0
  %3917 = vmatprep.mubr.bf16.mxu0 0
  %3918 = vmatmul.mubr.bf16.gmra.mxu0 %v3675
  %v3919 = vpop.f32.mrf.mxu0
  %v3920 = vadd.f32 %v3357, %v3919
  %v3921 = vpop.f32.mrf.mxu0
  %v3922 = vpop.f32.mrf.mxu0
  %v3923 = vadd.f32 %v3360, %v3922
  %v3924 = vpop.f32.mrf.mxu0
  %3925 = vmatprep.mubr.bf16.mxu0 0
  %3926 = vmatmul.mubr.bf16.gmra.mxu0 %v3678
  %v3927 = vpop.f32.mrf.mxu0
  %v3928 = vadd.f32 %v3365, %v3927
  %v3929 = vpop.f32.mrf.mxu0
  %v3930 = vpop.f32.mrf.mxu0
  %v3931 = vadd.f32 %v3368, %v3930
  %v3932 = vpop.f32.mrf.mxu0
  %3933 = vmatprep.mubr.bf16.mxu0 0
  %3934 = vmatmul.mubr.bf16.gmra.mxu0 %v3681
  %v3935 = vpop.f32.mrf.mxu0
  %v3936 = vadd.f32 %v3373, %v3935
  %v3937 = vpop.f32.mrf.mxu0
  %v3938 = vpop.f32.mrf.mxu0
  %v3939 = vadd.f32 %v3376, %v3938
  %v3940 = vpop.f32.mrf.mxu0
  %3941 = vmatprep.mubr.bf16.mxu0 0
  %3942 = vmatmul.mubr.bf16.gmra.mxu0 %v3684
  %v3943 = vpop.f32.mrf.mxu0
  %v3944 = vadd.f32 %v3381, %v3943
  %v3945 = vpop.f32.mrf.mxu0
  %v3946 = vpop.f32.mrf.mxu0
  %v3947 = vadd.f32 %v3384, %v3946
  %v3948 = vpop.f32.mrf.mxu0
  %3949 = vmatprep.mubr.bf16.mxu0 0
  %3950 = vmatmul.mubr.bf16.gmra.mxu0 %v3687
  %v3951 = vpop.f32.mrf.mxu0
  %v3952 = vadd.f32 %v3389, %v3951
  %v3953 = vpop.f32.mrf.mxu0
  %v3954 = vpop.f32.mrf.mxu0
  %v3955 = vadd.f32 %v3392, %v3954
  %v3956 = vpop.f32.mrf.mxu0
  %3957 = vmatprep.mubr.bf16.mxu0 0
  %3958 = vmatmul.mubr.bf16.gmra.mxu0 %v3690
  %v3959 = vpop.f32.mrf.mxu0
  %v3960 = vadd.f32 %v3397, %v3959
  %v3961 = vpop.f32.mrf.mxu0
  %v3962 = vpop.f32.mrf.mxu0
  %v3963 = vadd.f32 %v3400, %v3962
  %v3964 = vpop.f32.mrf.mxu0
  %3965 = vmatprep.mubr.bf16.mxu0 0
  %3966 = vmatmul.mubr.bf16.gmra.mxu0 %v3693
  %v3967 = vpop.f32.mrf.mxu0
  %v3968 = vadd.f32 %v3405, %v3967
  %v3969 = vpop.f32.mrf.mxu0
  %v3970 = vpop.f32.mrf.mxu0
  %v3971 = vadd.f32 %v3408, %v3970
  %v3972 = vpop.f32.mrf.mxu0
  %3973 = vmatprep.mubr.bf16.mxu0 0
  %3974 = vmatmul.mubr.bf16.gmra.mxu0 %v3696
  %v3975 = vpop.f32.mrf.mxu0
  %v3976 = vadd.f32 %v3413, %v3975
  %v3977 = vpop.f32.mrf.mxu0
  %v3978 = vpop.f32.mrf.mxu0
  %v3979 = vadd.f32 %v3416, %v3978
  %v3980 = vpop.f32.mrf.mxu0
  %3981 = vmatprep.mubr.bf16.mxu0 0
  %3982 = vmatmul.mubr.bf16.gmra.mxu0 %v3699
  %v3983 = vpop.f32.mrf.mxu0
  %v3984 = vadd.f32 %v3421, %v3983
  %v3985 = vpop.f32.mrf.mxu0
  %v3986 = vpop.f32.mrf.mxu0
  %v3987 = vadd.f32 %v3424, %v3986
  %v3988 = vpop.f32.mrf.mxu0
  %3989 = vdwg.mxu0
  %s3990 = scalar_lea.vmem [#allocation2], 16
  %v3991 = vld [vmem:[%s3990] sm:$0xf]
  %v3992 = vld [vmem:[%s3990 + $0x4] sm:$0xf]
  %v3993 = vld [vmem:[%s3990 + $0x8] sm:$0xf]
  %v3994 = vld [vmem:[%s3990 + $0xc] sm:$0xf]
  %v3995 = vld [vmem:[%s3990 + $0x10] sm:$0xf]
  %v3996 = vld [vmem:[%s3990 + $0x14] sm:$0xf]
  %v3997 = vld [vmem:[%s3990 + $0x18] sm:$0xf]
  %v3998 = vld [vmem:[%s3990 + $0x1c] sm:$0xf]
  %v3999 = vld [vmem:[%s3990 + $0x20] sm:$0xf]
  %v4000 = vld [vmem:[%s3990 + $0x24] sm:$0xf]
  %v4001 = vld [vmem:[%s3990 + $0x28] sm:$0xf]
  %v4002 = vld [vmem:[%s3990 + $0x2c] sm:$0xf]
  %v4003 = vld [vmem:[%s3990 + $0x30] sm:$0xf]
  %v4004 = vld [vmem:[%s3990 + $0x34] sm:$0xf]
  %v4005 = vld [vmem:[%s3990 + $0x38] sm:$0xf]
  %v4006 = vld [vmem:[%s3990 + $0x3c] sm:$0xf]
  %v4007 = vld [vmem:[%s3990 + $0x40] sm:$0xf]
  %v4008 = vld [vmem:[%s3990 + $0x44] sm:$0xf]
  %v4009 = vld [vmem:[%s3990 + $0x48] sm:$0xf]
  %v4010 = vld [vmem:[%s3990 + $0x4c] sm:$0xf]
  %v4011 = vld [vmem:[%s3990 + $0x50] sm:$0xf]
  %v4012 = vld [vmem:[%s3990 + $0x54] sm:$0xf]
  %v4013 = vld [vmem:[%s3990 + $0x58] sm:$0xf]
  %v4014 = vld [vmem:[%s3990 + $0x5c] sm:$0xf]
  %v4015 = vld [vmem:[%s3990 + $0x60] sm:$0xf]
  %v4016 = vld [vmem:[%s3990 + $0x64] sm:$0xf]
  %v4017 = vld [vmem:[%s3990 + $0x68] sm:$0xf]
  %v4018 = vld [vmem:[%s3990 + $0x6c] sm:$0xf]
  %v4019 = vld [vmem:[%s3990 + $0x70] sm:$0xf]
  %v4020 = vld [vmem:[%s3990 + $0x74] sm:$0xf]
  %v4021 = vld [vmem:[%s3990 + $0x78] sm:$0xf]
  %v4022 = vld [vmem:[%s3990 + $0x7c] sm:$0xf]
  %v4023 = vld [vmem:[%s3990 + $0x90] sm:$0xf]
  %v4024 = vld [vmem:[%s3990 + $0x94] sm:$0xf]
  %v4025 = vld [vmem:[%s3990 + $0x98] sm:$0xf]
  %v4026 = vld [vmem:[%s3990 + $0x9c] sm:$0xf]
  %v4027 = vld [vmem:[%s3990 + $0xa0] sm:$0xf]
  %v4028 = vld [vmem:[%s3990 + $0xa4] sm:$0xf]
  %v4029 = vld [vmem:[%s3990 + $0xa8] sm:$0xf]
  %v4030 = vld [vmem:[%s3990 + $0xac] sm:$0xf]
  %v4031 = vld [vmem:[%s3990 + $0xb0] sm:$0xf]
  %v4032 = vld [vmem:[%s3990 + $0xb4] sm:$0xf]
  %v4033 = vld [vmem:[%s3990 + $0xb8] sm:$0xf]
  %v4034 = vld [vmem:[%s3990 + $0xbc] sm:$0xf]
  %v4035 = vld [vmem:[%s3990 + $0xc0] sm:$0xf]
  %v4036 = vld [vmem:[%s3990 + $0xc4] sm:$0xf]
  %v4037 = vld [vmem:[%s3990 + $0xc8] sm:$0xf]
  %v4038 = vld [vmem:[%s3990 + $0xcc] sm:$0xf]
  %v4039 = vld [vmem:[%s3990 + $0xd0] sm:$0xf]
  %v4040 = vld [vmem:[%s3990 + $0xd4] sm:$0xf]
  %v4041 = vld [vmem:[%s3990 + $0xd8] sm:$0xf]
  %v4042 = vld [vmem:[%s3990 + $0xdc] sm:$0xf]
  %v4043 = vld [vmem:[%s3990 + $0xe0] sm:$0xf]
  %v4044 = vld [vmem:[%s3990 + $0xe4] sm:$0xf]
  %v4045 = vld [vmem:[%s3990 + $0xe8] sm:$0xf]
  %v4046 = vld [vmem:[%s3990 + $0xec] sm:$0xf]
  %v4047 = vld [vmem:[%s3990 + $0xf0] sm:$0xf]
  %v4048 = vld [vmem:[%s3990 + $0xf4] sm:$0xf]
  %v4049 = vld [vmem:[%s3990 + $0xf8] sm:$0xf]
  %v4050 = vld [vmem:[%s3990 + $0xfc] sm:$0xf]
  %v4051 = vld [vmem:[%s3990 + $0x100] sm:$0xf]
  %v4052 = vld [vmem:[%s3990 + $0x104] sm:$0xf]
  %v4053 = vld [vmem:[%s3990 + $0x108] sm:$0xf]
  %v4054 = vld [vmem:[%s3990 + $0x10c] sm:$0xf]
  %s4055 = scalar_lea.vmem %s3, 48
  %v4056 = vld [vmem:[%s4055] sm:$0xf]
  %v4057 = vld [vmem:[%s4055 + $0x4] sm:$0xf]
  %v4058 = vld [vmem:[%s4055 + $0x8] sm:$0xf]
  %v4059 = vld [vmem:[%s4055 + $0xc] sm:$0xf]
  %v4060 = vld [vmem:[%s4055 + $0x10] sm:$0xf]
  %v4061 = vld [vmem:[%s4055 + $0x14] sm:$0xf]
  %v4126 = vunpack.c.l.b16 %v3991
  %v4127 = vunpack.c.l.b16 %v3992
  %v4128 = vunpack.c.l.b16 %v3993
  %v4129 = vunpack.c.l.b16 %v3994
  %v4130 = vunpack.c.l.b16 %v3995
  %v4131 = vunpack.c.l.b16 %v3996
  %v4132 = vunpack.c.l.b16 %v3997
  %v4133 = vunpack.c.l.b16 %v3998
  %v4134 = vunpack.c.l.b16 %v3999
  %v4135 = vunpack.c.l.b16 %v4000
  %v4136 = vunpack.c.l.b16 %v4001
  %v4137 = vunpack.c.l.b16 %v4002
  %v4138 = vunpack.c.l.b16 %v4003
  %v4139 = vunpack.c.l.b16 %v4004
  %v4140 = vunpack.c.l.b16 %v4005
  %v4141 = vunpack.c.l.b16 %v4006
  %v4142 = vunpack.c.l.b16 %v4007
  %v4143 = vunpack.c.l.b16 %v4008
  %v4144 = vunpack.c.l.b16 %v4009
  %v4145 = vunpack.c.l.b16 %v4010
  %v4146 = vunpack.c.l.b16 %v4011
  %v4147 = vunpack.c.l.b16 %v4012
  %v4148 = vunpack.c.l.b16 %v4013
  %v4149 = vunpack.c.l.b16 %v4014
  %v4150 = vunpack.c.l.b16 %v4015
  %v4151 = vunpack.c.l.b16 %v4016
  %v4152 = vunpack.c.l.b16 %v4017
  %v4153 = vunpack.c.l.b16 %v4018
  %v4154 = vunpack.c.l.b16 %v4019
  %v4155 = vunpack.c.l.b16 %v4020
  %v4156 = vunpack.c.l.b16 %v4021
  %v4157 = vunpack.c.l.b16 %v4022
  %v4158 = vunpack.c.l.b16 %v4023
  %v4159 = vunpack.c.l.b16 %v4024
  %v4160 = vunpack.c.l.b16 %v4025
  %v4161 = vunpack.c.l.b16 %v4026
  %v4162 = vunpack.c.l.b16 %v4027
  %v4163 = vunpack.c.l.b16 %v4028
  %v4164 = vunpack.c.l.b16 %v4029
  %v4165 = vunpack.c.l.b16 %v4030
  %v4166 = vunpack.c.l.b16 %v4031
  %v4167 = vunpack.c.l.b16 %v4032
  %v4168 = vunpack.c.l.b16 %v4033
  %v4169 = vunpack.c.l.b16 %v4034
  %v4170 = vunpack.c.l.b16 %v4035
  %v4171 = vunpack.c.l.b16 %v4036
  %v4172 = vunpack.c.l.b16 %v4037
  %v4173 = vunpack.c.l.b16 %v4038
  %v4174 = vunpack.c.l.b16 %v4039
  %v4175 = vunpack.c.l.b16 %v4040
  %v4176 = vunpack.c.l.b16 %v4041
  %v4177 = vunpack.c.l.b16 %v4042
  %v4178 = vunpack.c.l.b16 %v4043
  %v4179 = vunpack.c.l.b16 %v4044
  %v4180 = vunpack.c.l.b16 %v4045
  %v4181 = vunpack.c.l.b16 %v4046
  %v4182 = vunpack.c.l.b16 %v4047
  %v4183 = vunpack.c.l.b16 %v4048
  %v4184 = vunpack.c.l.b16 %v4049
  %v4185 = vunpack.c.l.b16 %v4050
  %v4186 = vunpack.c.l.b16 %v4051
  %v4187 = vunpack.c.l.b16 %v4052
  %v4188 = vunpack.c.l.b16 %v4053
  %v4189 = vunpack.c.l.b16 %v4054
  %v4190 = vpack.c.b16 %v4127, %v4126
  %v4191 = vpack.c.b16 %v4129, %v4128
  %v4192 = vpack.c.b16 %v4131, %v4130
  %v4193 = vpack.c.b16 %v4133, %v4132
  %v4194 = vpack.c.b16 %v4135, %v4134
  %v4195 = vpack.c.b16 %v4137, %v4136
  %v4196 = vpack.c.b16 %v4139, %v4138
  %v4197 = vpack.c.b16 %v4141, %v4140
  %v4198 = vpack.c.b16 %v4143, %v4142
  %v4199 = vpack.c.b16 %v4145, %v4144
  %v4200 = vpack.c.b16 %v4147, %v4146
  %v4201 = vpack.c.b16 %v4149, %v4148
  %v4202 = vpack.c.b16 %v4151, %v4150
  %v4203 = vpack.c.b16 %v4153, %v4152
  %v4204 = vpack.c.b16 %v4155, %v4154
  %v4205 = vpack.c.b16 %v4157, %v4156
  %v4206 = vpack.c.b16 %v4159, %v4158
  %v4207 = vpack.c.b16 %v4161, %v4160
  %v4208 = vpack.c.b16 %v4163, %v4162
  %v4209 = vpack.c.b16 %v4165, %v4164
  %v4210 = vpack.c.b16 %v4167, %v4166
  %v4211 = vpack.c.b16 %v4169, %v4168
  %v4212 = vpack.c.b16 %v4171, %v4170
  %v4213 = vpack.c.b16 %v4173, %v4172
  %v4214 = vpack.c.b16 %v4175, %v4174
  %v4215 = vpack.c.b16 %v4177, %v4176
  %v4216 = vpack.c.b16 %v4179, %v4178
  %v4217 = vpack.c.b16 %v4181, %v4180
  %v4218 = vpack.c.b16 %v4183, %v4182
  %v4219 = vpack.c.b16 %v4185, %v4184
  %v4220 = vpack.c.b16 %v4187, %v4186
  %v4221 = vpack.c.b16 %v4189, %v4188
  %v4228 = vunpack.c.l.b16 %v4056
  %v4229 = vunpack.c.l.b16 %v4057
  %v4230 = vunpack.c.l.b16 %v4058
  %v4231 = vunpack.c.l.b16 %v4059
  %v4232 = vunpack.c.l.b16 %v4060
  %v4233 = vunpack.c.l.b16 %v4061
  %v4234 = vpack.c.b16 %v4229, %v4228
  %v4235 = vpack.c.b16 %v4231, %v4230
  %v4236 = vpack.c.b16 %v4233, %v4232
  %v4241 = vsel %vm3041, %v4190, 0
  %v4244 = vsel %vm3041, %v4191, 0
  %v4247 = vsel %vm3041, %v4192, 0
  %v4250 = vsel %vm3041, %v4193, 0
  %v4253 = vsel %vm3041, %v4194, 0
  %v4256 = vsel %vm3041, %v4195, 0
  %v4259 = vsel %vm3041, %v4196, 0
  %v4262 = vsel %vm3041, %v4197, 0
  %v4265 = vsel %vm3041, %v4198, 0
  %v4268 = vsel %vm3041, %v4199, 0
  %v4271 = vsel %vm3041, %v4200, 0
  %v4274 = vsel %vm3041, %v4201, 0
  %v4277 = vsel %vm3041, %v4202, 0
  %v4280 = vsel %vm3041, %v4203, 0
  %v4283 = vsel %vm3041, %v4204, 0
  %v4286 = vsel %vm3041, %v4205, 0
  %v4289 = vsel %vm3041, %v4206, 0
  %v4292 = vsel %vm3041, %v4207, 0
  %v4295 = vsel %vm3041, %v4208, 0
  %v4298 = vsel %vm3041, %v4209, 0
  %v4301 = vsel %vm3041, %v4210, 0
  %v4304 = vsel %vm3041, %v4211, 0
  %v4307 = vsel %vm3041, %v4212, 0
  %v4310 = vsel %vm3041, %v4213, 0
  %v4313 = vsel %vm3041, %v4214, 0
  %v4316 = vsel %vm3041, %v4215, 0
  %v4319 = vsel %vm3041, %v4216, 0
  %v4322 = vsel %vm3041, %v4217, 0
  %v4325 = vsel %vm3041, %v4218, 0
  %v4328 = vsel %vm3041, %v4219, 0
  %v4331 = vsel %vm3041, %v4220, 0
  %v4334 = vsel %vm3041, %v4221, 0
  %4336 = vmatprep.subr.bf16.mxu0 0
  %4337 = vmatpush1.bf16.msra.mxu0 0
  %4338 = vmatprep.subr.bf16.mxu0 0
  %4339 = vmatpush1.bf16.msra.mxu0 0
  %4340 = vmatprep.subr.bf16.mxu0 0
  %4341 = vmatpush1.bf16.msra.mxu0 0
  %4342 = vmatprep.subr.bf16.mxu0 0
  %4343 = vmatpush1.bf16.msra.mxu0 0
  %4344 = vmatprep.subr.bf16.mxu0 0
  %4345 = vmatpush1.bf16.msra.mxu0 0
  %4346 = vmatprep.subr.bf16.mxu0 0
  %4347 = vmatpush1.bf16.msra.mxu0 %v4236
  %4348 = vmatprep.subr.bf16.mxu0 0
  %4349 = vmatpush1.bf16.msra.mxu0 %v4235
  %4350 = vmatprep.subr.bf16.mxu0 0
  %4351 = vmatpush1.bf16.msra.mxu0 %v4234
  %4352 = vmatprep.subr.bf16.mxu0 0
  %4353 = vmatpush2.bf16.msra.mxu0 0
  %4354 = vmatprep.subr.bf16.mxu0 0
  %4355 = vmatpush2.bf16.msra.mxu0 0
  %4356 = vmatprep.subr.bf16.mxu0 0
  %4357 = vmatpush2.bf16.msra.mxu0 0
  %4358 = vmatprep.subr.bf16.mxu0 0
  %4359 = vmatpush2.bf16.msra.mxu0 0
  %4360 = vmatprep.subr.bf16.mxu0 0
  %4361 = vmatpush2.bf16.msra.mxu0 0
  %4362 = vmatprep.subr.bf16.mxu0 0
  %4363 = vmatpush2.bf16.msra.mxu0 0
  %4364 = vmatprep.subr.bf16.mxu0 0
  %4365 = vmatpush2.bf16.msra.mxu0 0
  %4366 = vmatprep.subr.bf16.mxu0 0
  %4367 = vmatpush2.bf16.msra.mxu0 0
  %4368 = vmatprep.mubr.bf16.mxu0 0
  %4369 = vmatmul.mubr.bf16.gmra.mxu0 %v4241
  %v4370 = vpop.f32.mrf.mxu0
  %v4371 = vadd.f32 0.0, %v4370
  %v4372 = vpop.f32.mrf.mxu0
  %v4373 = vpop.f32.mrf.mxu0
  %v4374 = vadd.f32 0.0, %v4373
  %v4375 = vpop.f32.mrf.mxu0
  %4376 = vmatprep.mubr.bf16.mxu0 0
  %4377 = vmatmul.mubr.bf16.gmra.mxu0 %v4244
  %v4378 = vpop.f32.mrf.mxu0
  %v4379 = vadd.f32 0.0, %v4378
  %v4380 = vpop.f32.mrf.mxu0
  %v4381 = vpop.f32.mrf.mxu0
  %v4382 = vadd.f32 0.0, %v4381
  %v4383 = vpop.f32.mrf.mxu0
  %4384 = vmatprep.mubr.bf16.mxu0 0
  %4385 = vmatmul.mubr.bf16.gmra.mxu0 %v4247
  %v4386 = vpop.f32.mrf.mxu0
  %v4387 = vadd.f32 0.0, %v4386
  %v4388 = vpop.f32.mrf.mxu0
  %v4389 = vpop.f32.mrf.mxu0
  %v4390 = vadd.f32 0.0, %v4389
  %v4391 = vpop.f32.mrf.mxu0
  %4392 = vmatprep.mubr.bf16.mxu0 0
  %4393 = vmatmul.mubr.bf16.gmra.mxu0 %v4250
  %v4394 = vpop.f32.mrf.mxu0
  %v4395 = vadd.f32 0.0, %v4394
  %v4396 = vpop.f32.mrf.mxu0
  %v4397 = vpop.f32.mrf.mxu0
  %v4398 = vadd.f32 0.0, %v4397
  %v4399 = vpop.f32.mrf.mxu0
  %4400 = vmatprep.mubr.bf16.mxu0 0
  %4401 = vmatmul.mubr.bf16.gmra.mxu0 %v4253
  %v4402 = vpop.f32.mrf.mxu0
  %v4403 = vadd.f32 0.0, %v4402
  %v4404 = vpop.f32.mrf.mxu0
  %v4405 = vpop.f32.mrf.mxu0
  %v4406 = vadd.f32 0.0, %v4405
  %v4407 = vpop.f32.mrf.mxu0
  %4408 = vmatprep.mubr.bf16.mxu0 0
  %4409 = vmatmul.mubr.bf16.gmra.mxu0 %v4256
  %v4410 = vpop.f32.mrf.mxu0
  %v4411 = vadd.f32 0.0, %v4410
  %v4412 = vpop.f32.mrf.mxu0
  %v4413 = vpop.f32.mrf.mxu0
  %v4414 = vadd.f32 0.0, %v4413
  %v4415 = vpop.f32.mrf.mxu0
  %4416 = vmatprep.mubr.bf16.mxu0 0
  %4417 = vmatmul.mubr.bf16.gmra.mxu0 %v4259
  %v4418 = vpop.f32.mrf.mxu0
  %v4419 = vadd.f32 0.0, %v4418
  %v4420 = vpop.f32.mrf.mxu0
  %v4421 = vpop.f32.mrf.mxu0
  %v4422 = vadd.f32 0.0, %v4421
  %v4423 = vpop.f32.mrf.mxu0
  %4424 = vmatprep.mubr.bf16.mxu0 0
  %4425 = vmatmul.mubr.bf16.gmra.mxu0 %v4262
  %v4426 = vpop.f32.mrf.mxu0
  %v4427 = vadd.f32 0.0, %v4426
  %v4428 = vpop.f32.mrf.mxu0
  %v4429 = vpop.f32.mrf.mxu0
  %v4430 = vadd.f32 0.0, %v4429
  %v4431 = vpop.f32.mrf.mxu0
  %4432 = vmatprep.mubr.bf16.mxu0 0
  %4433 = vmatmul.mubr.bf16.gmra.mxu0 %v4265
  %v4434 = vpop.f32.mrf.mxu0
  %v4435 = vadd.f32 0.0, %v4434
  %v4436 = vpop.f32.mrf.mxu0
  %v4437 = vpop.f32.mrf.mxu0
  %v4438 = vadd.f32 0.0, %v4437
  %v4439 = vpop.f32.mrf.mxu0
  %4440 = vmatprep.mubr.bf16.mxu0 0
  %4441 = vmatmul.mubr.bf16.gmra.mxu0 %v4268
  %v4442 = vpop.f32.mrf.mxu0
  %v4443 = vadd.f32 0.0, %v4442
  %v4444 = vpop.f32.mrf.mxu0
  %v4445 = vpop.f32.mrf.mxu0
  %v4446 = vadd.f32 0.0, %v4445
  %v4447 = vpop.f32.mrf.mxu0
  %4448 = vmatprep.mubr.bf16.mxu0 0
  %4449 = vmatmul.mubr.bf16.gmra.mxu0 %v4271
  %v4450 = vpop.f32.mrf.mxu0
  %v4451 = vadd.f32 0.0, %v4450
  %v4452 = vpop.f32.mrf.mxu0
  %v4453 = vpop.f32.mrf.mxu0
  %v4454 = vadd.f32 0.0, %v4453
  %v4455 = vpop.f32.mrf.mxu0
  %4456 = vmatprep.mubr.bf16.mxu0 0
  %4457 = vmatmul.mubr.bf16.gmra.mxu0 %v4274
  %v4458 = vpop.f32.mrf.mxu0
  %v4459 = vadd.f32 0.0, %v4458
  %v4460 = vpop.f32.mrf.mxu0
  %v4461 = vpop.f32.mrf.mxu0
  %v4462 = vadd.f32 0.0, %v4461
  %v4463 = vpop.f32.mrf.mxu0
  %4464 = vmatprep.mubr.bf16.mxu0 0
  %4465 = vmatmul.mubr.bf16.gmra.mxu0 %v4277
  %v4466 = vpop.f32.mrf.mxu0
  %v4467 = vadd.f32 0.0, %v4466
  %v4468 = vpop.f32.mrf.mxu0
  %v4469 = vpop.f32.mrf.mxu0
  %v4470 = vadd.f32 0.0, %v4469
  %v4471 = vpop.f32.mrf.mxu0
  %4472 = vmatprep.mubr.bf16.mxu0 0
  %4473 = vmatmul.mubr.bf16.gmra.mxu0 %v4280
  %v4474 = vpop.f32.mrf.mxu0
  %v4475 = vadd.f32 0.0, %v4474
  %v4476 = vpop.f32.mrf.mxu0
  %v4477 = vpop.f32.mrf.mxu0
  %v4478 = vadd.f32 0.0, %v4477
  %v4479 = vpop.f32.mrf.mxu0
  %4480 = vmatprep.mubr.bf16.mxu0 0
  %4481 = vmatmul.mubr.bf16.gmra.mxu0 %v4283
  %v4482 = vpop.f32.mrf.mxu0
  %v4483 = vadd.f32 0.0, %v4482
  %v4484 = vpop.f32.mrf.mxu0
  %v4485 = vpop.f32.mrf.mxu0
  %v4486 = vadd.f32 0.0, %v4485
  %v4487 = vpop.f32.mrf.mxu0
  %4488 = vmatprep.mubr.bf16.mxu0 0
  %4489 = vmatmul.mubr.bf16.gmra.mxu0 %v4286
  %v4490 = vpop.f32.mrf.mxu0
  %v4491 = vadd.f32 0.0, %v4490
  %v4492 = vpop.f32.mrf.mxu0
  %v4493 = vpop.f32.mrf.mxu0
  %v4494 = vadd.f32 0.0, %v4493
  %v4495 = vpop.f32.mrf.mxu0
  %4496 = vmatprep.mubr.bf16.mxu0 0
  %4497 = vmatmul.mubr.bf16.gmra.mxu0 %v4289
  %v4498 = vpop.f32.mrf.mxu0
  %v4499 = vadd.f32 0.0, %v4498
  %v4500 = vpop.f32.mrf.mxu0
  %v4501 = vpop.f32.mrf.mxu0
  %v4502 = vadd.f32 0.0, %v4501
  %v4503 = vpop.f32.mrf.mxu0
  %4504 = vmatprep.mubr.bf16.mxu0 0
  %4505 = vmatmul.mubr.bf16.gmra.mxu0 %v4292
  %v4506 = vpop.f32.mrf.mxu0
  %v4507 = vadd.f32 0.0, %v4506
  %v4508 = vpop.f32.mrf.mxu0
  %v4509 = vpop.f32.mrf.mxu0
  %v4510 = vadd.f32 0.0, %v4509
  %v4511 = vpop.f32.mrf.mxu0
  %4512 = vmatprep.mubr.bf16.mxu0 0
  %4513 = vmatmul.mubr.bf16.gmra.mxu0 %v4295
  %v4514 = vpop.f32.mrf.mxu0
  %v4515 = vadd.f32 0.0, %v4514
  %v4516 = vpop.f32.mrf.mxu0
  %v4517 = vpop.f32.mrf.mxu0
  %v4518 = vadd.f32 0.0, %v4517
  %v4519 = vpop.f32.mrf.mxu0
  %4520 = vmatprep.mubr.bf16.mxu0 0
  %4521 = vmatmul.mubr.bf16.gmra.mxu0 %v4298
  %v4522 = vpop.f32.mrf.mxu0
  %v4523 = vadd.f32 0.0, %v4522
  %v4524 = vpop.f32.mrf.mxu0
  %v4525 = vpop.f32.mrf.mxu0
  %v4526 = vadd.f32 0.0, %v4525
  %v4527 = vpop.f32.mrf.mxu0
  %4528 = vmatprep.mubr.bf16.mxu0 0
  %4529 = vmatmul.mubr.bf16.gmra.mxu0 %v4301
  %v4530 = vpop.f32.mrf.mxu0
  %v4531 = vadd.f32 0.0, %v4530
  %v4532 = vpop.f32.mrf.mxu0
  %v4533 = vpop.f32.mrf.mxu0
  %v4534 = vadd.f32 0.0, %v4533
  %v4535 = vpop.f32.mrf.mxu0
  %4536 = vmatprep.mubr.bf16.mxu0 0
  %4537 = vmatmul.mubr.bf16.gmra.mxu0 %v4304
  %v4538 = vpop.f32.mrf.mxu0
  %v4539 = vadd.f32 0.0, %v4538
  %v4540 = vpop.f32.mrf.mxu0
  %v4541 = vpop.f32.mrf.mxu0
  %v4542 = vadd.f32 0.0, %v4541
  %v4543 = vpop.f32.mrf.mxu0
  %4544 = vmatprep.mubr.bf16.mxu0 0
  %4545 = vmatmul.mubr.bf16.gmra.mxu0 %v4307
  %v4546 = vpop.f32.mrf.mxu0
  %v4547 = vadd.f32 0.0, %v4546
  %v4548 = vpop.f32.mrf.mxu0
  %v4549 = vpop.f32.mrf.mxu0
  %v4550 = vadd.f32 0.0, %v4549
  %v4551 = vpop.f32.mrf.mxu0
  %4552 = vmatprep.mubr.bf16.mxu0 0
  %4553 = vmatmul.mubr.bf16.gmra.mxu0 %v4310
  %v4554 = vpop.f32.mrf.mxu0
  %v4555 = vadd.f32 0.0, %v4554
  %v4556 = vpop.f32.mrf.mxu0
  %v4557 = vpop.f32.mrf.mxu0
  %v4558 = vadd.f32 0.0, %v4557
  %v4559 = vpop.f32.mrf.mxu0
  %4560 = vmatprep.mubr.bf16.mxu0 0
  %4561 = vmatmul.mubr.bf16.gmra.mxu0 %v4313
  %v4562 = vpop.f32.mrf.mxu0
  %v4563 = vadd.f32 0.0, %v4562
  %v4564 = vpop.f32.mrf.mxu0
  %v4565 = vpop.f32.mrf.mxu0
  %v4566 = vadd.f32 0.0, %v4565
  %v4567 = vpop.f32.mrf.mxu0
  %4568 = vmatprep.mubr.bf16.mxu0 0
  %4569 = vmatmul.mubr.bf16.gmra.mxu0 %v4316
  %v4570 = vpop.f32.mrf.mxu0
  %v4571 = vadd.f32 0.0, %v4570
  %v4572 = vpop.f32.mrf.mxu0
  %v4573 = vpop.f32.mrf.mxu0
  %v4574 = vadd.f32 0.0, %v4573
  %v4575 = vpop.f32.mrf.mxu0
  %4576 = vmatprep.mubr.bf16.mxu0 0
  %4577 = vmatmul.mubr.bf16.gmra.mxu0 %v4319
  %v4578 = vpop.f32.mrf.mxu0
  %v4579 = vadd.f32 0.0, %v4578
  %v4580 = vpop.f32.mrf.mxu0
  %v4581 = vpop.f32.mrf.mxu0
  %v4582 = vadd.f32 0.0, %v4581
  %v4583 = vpop.f32.mrf.mxu0
  %4584 = vmatprep.mubr.bf16.mxu0 0
  %4585 = vmatmul.mubr.bf16.gmra.mxu0 %v4322
  %v4586 = vpop.f32.mrf.mxu0
  %v4587 = vadd.f32 0.0, %v4586
  %v4588 = vpop.f32.mrf.mxu0
  %v4589 = vpop.f32.mrf.mxu0
  %v4590 = vadd.f32 0.0, %v4589
  %v4591 = vpop.f32.mrf.mxu0
  %4592 = vmatprep.mubr.bf16.mxu0 0
  %4593 = vmatmul.mubr.bf16.gmra.mxu0 %v4325
  %v4594 = vpop.f32.mrf.mxu0
  %v4595 = vadd.f32 0.0, %v4594
  %v4596 = vpop.f32.mrf.mxu0
  %v4597 = vpop.f32.mrf.mxu0
  %v4598 = vadd.f32 0.0, %v4597
  %v4599 = vpop.f32.mrf.mxu0
  %4600 = vmatprep.mubr.bf16.mxu0 0
  %4601 = vmatmul.mubr.bf16.gmra.mxu0 %v4328
  %v4602 = vpop.f32.mrf.mxu0
  %v4603 = vadd.f32 0.0, %v4602
  %v4604 = vpop.f32.mrf.mxu0
  %v4605 = vpop.f32.mrf.mxu0
  %v4606 = vadd.f32 0.0, %v4605
  %v4607 = vpop.f32.mrf.mxu0
  %4608 = vmatprep.mubr.bf16.mxu0 0
  %4609 = vmatmul.mubr.bf16.gmra.mxu0 %v4331
  %v4610 = vpop.f32.mrf.mxu0
  %v4611 = vadd.f32 0.0, %v4610
  %v4612 = vpop.f32.mrf.mxu0
  %v4613 = vpop.f32.mrf.mxu0
  %v4614 = vadd.f32 0.0, %v4613
  %v4615 = vpop.f32.mrf.mxu0
  %4616 = vmatprep.mubr.bf16.mxu0 0
  %4617 = vmatmul.mubr.bf16.gmra.mxu0 %v4334
  %v4618 = vpop.f32.mrf.mxu0
  %v4619 = vadd.f32 0.0, %v4618
  %v4620 = vpop.f32.mrf.mxu0
  %v4621 = vpop.f32.mrf.mxu0
  %v4622 = vadd.f32 0.0, %v4621
  %v4623 = vpop.f32.mrf.mxu0
  %4624 = vdwg.mxu0
  %v4625 = vadd.f32 %v3736, %v4371
  %v4626 = vadd.f32 %v3739, %v4374
  %v4627 = vadd.f32 %v3744, %v4379
  %v4628 = vadd.f32 %v3747, %v4382
  %v4629 = vadd.f32 %v3752, %v4387
  %v4630 = vadd.f32 %v3755, %v4390
  %v4631 = vadd.f32 %v3760, %v4395
  %v4632 = vadd.f32 %v3763, %v4398
  %v4633 = vadd.f32 %v3768, %v4403
  %v4634 = vadd.f32 %v3771, %v4406
  %v4635 = vadd.f32 %v3776, %v4411
  %v4636 = vadd.f32 %v3779, %v4414
  %v4637 = vadd.f32 %v3784, %v4419
  %v4638 = vadd.f32 %v3787, %v4422
  %v4639 = vadd.f32 %v3792, %v4427
  %v4640 = vadd.f32 %v3795, %v4430
  %v4641 = vadd.f32 %v3800, %v4435
  %v4642 = vadd.f32 %v3803, %v4438
  %v4643 = vadd.f32 %v3808, %v4443
  %v4644 = vadd.f32 %v3811, %v4446
  %v4645 = vadd.f32 %v3816, %v4451
  %v4646 = vadd.f32 %v3819, %v4454
  %v4647 = vadd.f32 %v3824, %v4459
  %v4648 = vadd.f32 %v3827, %v4462
  %v4649 = vadd.f32 %v3832, %v4467
  %v4650 = vadd.f32 %v3835, %v4470
  %v4651 = vadd.f32 %v3840, %v4475
  %v4652 = vadd.f32 %v3843, %v4478
  %v4653 = vadd.f32 %v3848, %v4483
  %v4654 = vadd.f32 %v3851, %v4486
  %v4655 = vadd.f32 %v3856, %v4491
  %v4656 = vadd.f32 %v3859, %v4494
  %v4657 = vadd.f32 %v3864, %v4499
  %v4658 = vadd.f32 %v3867, %v4502
  %v4659 = vadd.f32 %v3872, %v4507
  %v4660 = vadd.f32 %v3875, %v4510
  %v4661 = vadd.f32 %v3880, %v4515
  %v4662 = vadd.f32 %v3883, %v4518
  %v4663 = vadd.f32 %v3888, %v4523
  %v4664 = vadd.f32 %v3891, %v4526
  %v4665 = vadd.f32 %v3896, %v4531
  %v4666 = vadd.f32 %v3899, %v4534
  %v4667 = vadd.f32 %v3904, %v4539
  %v4668 = vadd.f32 %v3907, %v4542
  %v4669 = vadd.f32 %v3912, %v4547
  %v4670 = vadd.f32 %v3915, %v4550
  %v4671 = vadd.f32 %v3920, %v4555
  %v4672 = vadd.f32 %v3923, %v4558
  %v4673 = vadd.f32 %v3928, %v4563
  %v4674 = vadd.f32 %v3931, %v4566
  %v4675 = vadd.f32 %v3936, %v4571
  %v4676 = vadd.f32 %v3939, %v4574
  %v4677 = vadd.f32 %v3944, %v4579
  %v4678 = vadd.f32 %v3947, %v4582
  %v4679 = vadd.f32 %v3952, %v4587
  %v4680 = vadd.f32 %v3955, %v4590
  %v4681 = vadd.f32 %v3960, %v4595
  %v4682 = vadd.f32 %v3963, %v4598
  %v4683 = vadd.f32 %v3968, %v4603
  %v4684 = vadd.f32 %v3971, %v4606
  %v4685 = vadd.f32 %v3976, %v4611
  %v4686 = vadd.f32 %v3979, %v4614
  %v4687 = vadd.f32 %v3984, %v4619
  %v4688 = vadd.f32 %v3987, %v4622
  %v4689 = vld [vmem:[%s4] sm:$0x1]
  %v4691 = vlaneseq
  %v4692 = vshrl.u32 %v4691, 7
  %v4693 = vsub.s32 0, %v4692
  %v4694 = vrot.slane %v4689, %v4693
  %v4696 = vadd.f32 %v4625, %v4694
  %v4697 = vadd.f32 %v4626, %v4694
  %v4698 = vadd.f32 %v4627, %v4694
  %v4699 = vadd.f32 %v4628, %v4694
  %v4700 = vadd.f32 %v4629, %v4694
  %v4701 = vadd.f32 %v4630, %v4694
  %v4702 = vadd.f32 %v4631, %v4694
  %v4703 = vadd.f32 %v4632, %v4694
  %v4704 = vadd.f32 %v4633, %v4694
  %v4705 = vadd.f32 %v4634, %v4694
  %v4706 = vadd.f32 %v4635, %v4694
  %v4707 = vadd.f32 %v4636, %v4694
  %v4708 = vadd.f32 %v4637, %v4694
  %v4709 = vadd.f32 %v4638, %v4694
  %v4710 = vadd.f32 %v4639, %v4694
  %v4711 = vadd.f32 %v4640, %v4694
  %v4712 = vadd.f32 %v4641, %v4694
  %v4713 = vadd.f32 %v4642, %v4694
  %v4714 = vadd.f32 %v4643, %v4694
  %v4715 = vadd.f32 %v4644, %v4694
  %v4716 = vadd.f32 %v4645, %v4694
  %v4717 = vadd.f32 %v4646, %v4694
  %v4718 = vadd.f32 %v4647, %v4694
  %v4719 = vadd.f32 %v4648, %v4694
  %v4720 = vadd.f32 %v4649, %v4694
  %v4721 = vadd.f32 %v4650, %v4694
  %v4722 = vadd.f32 %v4651, %v4694
  %v4723 = vadd.f32 %v4652, %v4694
  %v4724 = vadd.f32 %v4653, %v4694
  %v4725 = vadd.f32 %v4654, %v4694
  %v4726 = vadd.f32 %v4655, %v4694
  %v4727 = vadd.f32 %v4656, %v4694
  %v4728 = vadd.f32 %v4657, %v4694
  %v4729 = vadd.f32 %v4658, %v4694
  %v4730 = vadd.f32 %v4659, %v4694
  %v4731 = vadd.f32 %v4660, %v4694
  %v4732 = vadd.f32 %v4661, %v4694
  %v4733 = vadd.f32 %v4662, %v4694
  %v4734 = vadd.f32 %v4663, %v4694
  %v4735 = vadd.f32 %v4664, %v4694
  %v4736 = vadd.f32 %v4665, %v4694
  %v4737 = vadd.f32 %v4666, %v4694
  %v4738 = vadd.f32 %v4667, %v4694
  %v4739 = vadd.f32 %v4668, %v4694
  %v4740 = vadd.f32 %v4669, %v4694
  %v4741 = vadd.f32 %v4670, %v4694
  %v4742 = vadd.f32 %v4671, %v4694
  %v4743 = vadd.f32 %v4672, %v4694
  %v4744 = vadd.f32 %v4673, %v4694
  %v4745 = vadd.f32 %v4674, %v4694
  %v4746 = vadd.f32 %v4675, %v4694
  %v4747 = vadd.f32 %v4676, %v4694
  %v4748 = vadd.f32 %v4677, %v4694
  %v4749 = vadd.f32 %v4678, %v4694
  %v4750 = vadd.f32 %v4679, %v4694
  %v4751 = vadd.f32 %v4680, %v4694
  %v4752 = vadd.f32 %v4681, %v4694
  %v4753 = vadd.f32 %v4682, %v4694
  %v4754 = vadd.f32 %v4683, %v4694
  %v4755 = vadd.f32 %v4684, %v4694
  %v4756 = vadd.f32 %v4685, %v4694
  %v4757 = vadd.f32 %v4686, %v4694
  %v4758 = vadd.f32 %v4687, %v4694
  %v4759 = vadd.f32 %v4688, %v4694
  %v4760 = vmax.f32 %v4696, 0.0
  %v4761 = vmax.f32 %v4697, 0.0
  %v4762 = vmax.f32 %v4698, 0.0
  %v4763 = vmax.f32 %v4699, 0.0
  %v4764 = vmax.f32 %v4700, 0.0
  %v4765 = vmax.f32 %v4701, 0.0
  %v4766 = vmax.f32 %v4702, 0.0
  %v4767 = vmax.f32 %v4703, 0.0
  %v4768 = vmax.f32 %v4704, 0.0
  %v4769 = vmax.f32 %v4705, 0.0
  %v4770 = vmax.f32 %v4706, 0.0
  %v4771 = vmax.f32 %v4707, 0.0
  %v4772 = vmax.f32 %v4708, 0.0
  %v4773 = vmax.f32 %v4709, 0.0
  %v4774 = vmax.f32 %v4710, 0.0
  %v4775 = vmax.f32 %v4711, 0.0
  %v4776 = vmax.f32 %v4712, 0.0
  %v4777 = vmax.f32 %v4713, 0.0
  %v4778 = vmax.f32 %v4714, 0.0
  %v4779 = vmax.f32 %v4715, 0.0
  %v4780 = vmax.f32 %v4716, 0.0
  %v4781 = vmax.f32 %v4717, 0.0
  %v4782 = vmax.f32 %v4718, 0.0
  %v4783 = vmax.f32 %v4719, 0.0
  %v4784 = vmax.f32 %v4720, 0.0
  %v4785 = vmax.f32 %v4721, 0.0
  %v4786 = vmax.f32 %v4722, 0.0
  %v4787 = vmax.f32 %v4723, 0.0
  %v4788 = vmax.f32 %v4724, 0.0
  %v4789 = vmax.f32 %v4725, 0.0
  %v4790 = vmax.f32 %v4726, 0.0
  %v4791 = vmax.f32 %v4727, 0.0
  %v4792 = vmax.f32 %v4728, 0.0
  %v4793 = vmax.f32 %v4729, 0.0
  %v4794 = vmax.f32 %v4730, 0.0
  %v4795 = vmax.f32 %v4731, 0.0
  %v4796 = vmax.f32 %v4732, 0.0
  %v4797 = vmax.f32 %v4733, 0.0
  %v4798 = vmax.f32 %v4734, 0.0
  %v4799 = vmax.f32 %v4735, 0.0
  %v4800 = vmax.f32 %v4736, 0.0
  %v4801 = vmax.f32 %v4737, 0.0
  %v4802 = vmax.f32 %v4738, 0.0
  %v4803 = vmax.f32 %v4739, 0.0
  %v4804 = vmax.f32 %v4740, 0.0
  %v4805 = vmax.f32 %v4741, 0.0
  %v4806 = vmax.f32 %v4742, 0.0
  %v4807 = vmax.f32 %v4743, 0.0
  %v4808 = vmax.f32 %v4744, 0.0
  %v4809 = vmax.f32 %v4745, 0.0
  %v4810 = vmax.f32 %v4746, 0.0
  %v4811 = vmax.f32 %v4747, 0.0
  %v4812 = vmax.f32 %v4748, 0.0
  %v4813 = vmax.f32 %v4749, 0.0
  %v4814 = vmax.f32 %v4750, 0.0
  %v4815 = vmax.f32 %v4751, 0.0
  %v4816 = vmax.f32 %v4752, 0.0
  %v4817 = vmax.f32 %v4753, 0.0
  %v4818 = vmax.f32 %v4754, 0.0
  %v4819 = vmax.f32 %v4755, 0.0
  %v4820 = vmax.f32 %v4756, 0.0
  %v4821 = vmax.f32 %v4757, 0.0
  %v4822 = vmax.f32 %v4758, 0.0
  %v4823 = vmax.f32 %v4759, 0.0
  %v4824 = vpack.c.bf16 %v4761, %v4760
  %v4825 = vpack.c.bf16 %v4763, %v4762
  %v4826 = vpack.c.bf16 %v4765, %v4764
  %v4827 = vpack.c.bf16 %v4767, %v4766
  %v4828 = vpack.c.bf16 %v4769, %v4768
  %v4829 = vpack.c.bf16 %v4771, %v4770
  %v4830 = vpack.c.bf16 %v4773, %v4772
  %v4831 = vpack.c.bf16 %v4775, %v4774
  %v4832 = vpack.c.bf16 %v4777, %v4776
  %v4833 = vpack.c.bf16 %v4779, %v4778
  %v4834 = vpack.c.bf16 %v4781, %v4780
  %v4835 = vpack.c.bf16 %v4783, %v4782
  %v4836 = vpack.c.bf16 %v4785, %v4784
  %v4837 = vpack.c.bf16 %v4787, %v4786
  %v4838 = vpack.c.bf16 %v4789, %v4788
  %v4839 = vpack.c.bf16 %v4791, %v4790
  %v4840 = vpack.c.bf16 %v4793, %v4792
  %v4841 = vpack.c.bf16 %v4795, %v4794
  %v4842 = vpack.c.bf16 %v4797, %v4796
  %v4843 = vpack.c.bf16 %v4799, %v4798
  %v4844 = vpack.c.bf16 %v4801, %v4800
  %v4845 = vpack.c.bf16 %v4803, %v4802
  %v4846 = vpack.c.bf16 %v4805, %v4804
  %v4847 = vpack.c.bf16 %v4807, %v4806
  %v4848 = vpack.c.bf16 %v4809, %v4808
  %v4849 = vpack.c.bf16 %v4811, %v4810
  %v4850 = vpack.c.bf16 %v4813, %v4812
  %v4851 = vpack.c.bf16 %v4815, %v4814
  %v4852 = vpack.c.bf16 %v4817, %v4816
  %v4853 = vpack.c.bf16 %v4819, %v4818
  %v4854 = vpack.c.bf16 %v4821, %v4820
  %v4855 = vpack.c.bf16 %v4823, %v4822
  %v4856 = vld [vmem:[%s5] sm:$0xf]
  %v4857 = vld [vmem:[%s5 + $0x4] sm:$0xf]
  %v4858 = vld [vmem:[%s6] sm:$0x1]
  %v4860 = vlaneseq
  %v4861 = vshrl.u32 %v4860, 7
  %v4862 = vsub.s32 0, %v4861
  %v4863 = vrot.slane %v4858, %v4862
  %v4867 = vunpack.c.l.b16 %v4856
  %v4868 = vunpack.c.l.b16 %v4857
  %v4869 = vpack.c.b16 %v4868, %v4867
  %vm4871 = vcmask 130048
  %v4873 = vsel %vm4871, %v4824, 0
  %v4876 = vsel %vm4871, %v4825, 0
  %v4879 = vsel %vm4871, %v4826, 0
  %v4882 = vsel %vm4871, %v4827, 0
  %v4885 = vsel %vm4871, %v4828, 0
  %v4888 = vsel %vm4871, %v4829, 0
  %v4891 = vsel %vm4871, %v4830, 0
  %v4894 = vsel %vm4871, %v4831, 0
  %v4897 = vsel %vm4871, %v4832, 0
  %v4900 = vsel %vm4871, %v4833, 0
  %v4903 = vsel %vm4871, %v4834, 0
  %v4906 = vsel %vm4871, %v4835, 0
  %v4909 = vsel %vm4871, %v4836, 0
  %v4912 = vsel %vm4871, %v4837, 0
  %v4915 = vsel %vm4871, %v4838, 0
  %v4918 = vsel %vm4871, %v4839, 0
  %v4921 = vsel %vm4871, %v4840, 0
  %v4924 = vsel %vm4871, %v4841, 0
  %v4927 = vsel %vm4871, %v4842, 0
  %v4930 = vsel %vm4871, %v4843, 0
  %v4933 = vsel %vm4871, %v4844, 0
  %v4936 = vsel %vm4871, %v4845, 0
  %v4939 = vsel %vm4871, %v4846, 0
  %v4942 = vsel %vm4871, %v4847, 0
  %v4945 = vsel %vm4871, %v4848, 0
  %v4948 = vsel %vm4871, %v4849, 0
  %v4951 = vsel %vm4871, %v4850, 0
  %v4954 = vsel %vm4871, %v4851, 0
  %v4957 = vsel %vm4871, %v4852, 0
  %v4960 = vsel %vm4871, %v4853, 0
  %v4963 = vsel %vm4871, %v4854, 0
  %v4966 = vsel %vm4871, %v4855, 0
  %4968 = vmatprep.subr.bf16.mxu0 0
  %4969 = vmatpush1.bf16.msra.mxu0 0
  %4970 = vmatprep.subr.bf16.mxu0 0
  %4971 = vmatpush1.bf16.msra.mxu0 0
  %4972 = vmatprep.subr.bf16.mxu0 0
  %4973 = vmatpush1.bf16.msra.mxu0 0
  %4974 = vmatprep.subr.bf16.mxu0 0
  %4975 = vmatpush1.bf16.msra.mxu0 0
  %4976 = vmatprep.subr.bf16.mxu0 0
  %4977 = vmatpush1.bf16.msra.mxu0 0
  %4978 = vmatprep.subr.bf16.mxu0 0
  %4979 = vmatpush1.bf16.msra.mxu0 0
  %4980 = vmatprep.subr.bf16.mxu0 0
  %4981 = vmatpush1.bf16.msra.mxu0 0
  %4982 = vmatprep.subr.bf16.mxu0 0
  %4983 = vmatpush1.bf16.msra.mxu0 %v4869
  %4984 = vmatprep.subr.bf16.mxu0 0
  %4985 = vmatpush2.bf16.msra.mxu0 0
  %4986 = vmatprep.subr.bf16.mxu0 0
  %4987 = vmatpush2.bf16.msra.mxu0 0
  %4988 = vmatprep.subr.bf16.mxu0 0
  %4989 = vmatpush2.bf16.msra.mxu0 0
  %4990 = vmatprep.subr.bf16.mxu0 0
  %4991 = vmatpush2.bf16.msra.mxu0 0
  %4992 = vmatprep.subr.bf16.mxu0 0
  %4993 = vmatpush2.bf16.msra.mxu0 0
  %4994 = vmatprep.subr.bf16.mxu0 0
  %4995 = vmatpush2.bf16.msra.mxu0 0
  %4996 = vmatprep.subr.bf16.mxu0 0
  %4997 = vmatpush2.bf16.msra.mxu0 0
  %4998 = vmatprep.subr.bf16.mxu0 0
  %4999 = vmatpush2.bf16.msra.mxu0 0
  %5000 = vmatprep.mubr.bf16.mxu0 0
  %5001 = vmatmul.mubr.bf16.gmra.mxu0 %v4873
  %v5002 = vpop.f32.mrf.mxu0
  %v5003 = vadd.f32 %v4863, %v5002
  %v5004 = vpop.f32.mrf.mxu0
  %v5005 = vpop.f32.mrf.mxu0
  %v5006 = vadd.f32 %v4863, %v5005
  %v5007 = vpop.f32.mrf.mxu0
  %5008 = vmatprep.mubr.bf16.mxu0 0
  %5009 = vmatmul.mubr.bf16.gmra.mxu0 %v4876
  %v5010 = vpop.f32.mrf.mxu0
  %v5011 = vadd.f32 %v4863, %v5010
  %v5012 = vpop.f32.mrf.mxu0
  %v5013 = vpop.f32.mrf.mxu0
  %v5014 = vadd.f32 %v4863, %v5013
  %v5015 = vpop.f32.mrf.mxu0
  %5016 = vmatprep.mubr.bf16.mxu0 0
  %5017 = vmatmul.mubr.bf16.gmra.mxu0 %v4879
  %v5018 = vpop.f32.mrf.mxu0
  %v5019 = vadd.f32 %v4863, %v5018
  %v5020 = vpop.f32.mrf.mxu0
  %v5021 = vpop.f32.mrf.mxu0
  %v5022 = vadd.f32 %v4863, %v5021
  %v5023 = vpop.f32.mrf.mxu0
  %5024 = vmatprep.mubr.bf16.mxu0 0
  %5025 = vmatmul.mubr.bf16.gmra.mxu0 %v4882
  %v5026 = vpop.f32.mrf.mxu0
  %v5027 = vadd.f32 %v4863, %v5026
  %v5028 = vpop.f32.mrf.mxu0
  %v5029 = vpop.f32.mrf.mxu0
  %v5030 = vadd.f32 %v4863, %v5029
  %v5031 = vpop.f32.mrf.mxu0
  %5032 = vmatprep.mubr.bf16.mxu0 0
  %5033 = vmatmul.mubr.bf16.gmra.mxu0 %v4885
  %v5034 = vpop.f32.mrf.mxu0
  %v5035 = vadd.f32 %v4863, %v5034
  %v5036 = vpop.f32.mrf.mxu0
  %v5037 = vpop.f32.mrf.mxu0
  %v5038 = vadd.f32 %v4863, %v5037
  %v5039 = vpop.f32.mrf.mxu0
  %5040 = vmatprep.mubr.bf16.mxu0 0
  %5041 = vmatmul.mubr.bf16.gmra.mxu0 %v4888
  %v5042 = vpop.f32.mrf.mxu0
  %v5043 = vadd.f32 %v4863, %v5042
  %v5044 = vpop.f32.mrf.mxu0
  %v5045 = vpop.f32.mrf.mxu0
  %v5046 = vadd.f32 %v4863, %v5045
  %v5047 = vpop.f32.mrf.mxu0
  %5048 = vmatprep.mubr.bf16.mxu0 0
  %5049 = vmatmul.mubr.bf16.gmra.mxu0 %v4891
  %v5050 = vpop.f32.mrf.mxu0
  %v5051 = vadd.f32 %v4863, %v5050
  %v5052 = vpop.f32.mrf.mxu0
  %v5053 = vpop.f32.mrf.mxu0
  %v5054 = vadd.f32 %v4863, %v5053
  %v5055 = vpop.f32.mrf.mxu0
  %5056 = vmatprep.mubr.bf16.mxu0 0
  %5057 = vmatmul.mubr.bf16.gmra.mxu0 %v4894
  %v5058 = vpop.f32.mrf.mxu0
  %v5059 = vadd.f32 %v4863, %v5058
  %v5060 = vpop.f32.mrf.mxu0
  %v5061 = vpop.f32.mrf.mxu0
  %v5062 = vadd.f32 %v4863, %v5061
  %v5063 = vpop.f32.mrf.mxu0
  %5064 = vmatprep.mubr.bf16.mxu0 0
  %5065 = vmatmul.mubr.bf16.gmra.mxu0 %v4897
  %v5066 = vpop.f32.mrf.mxu0
  %v5067 = vadd.f32 %v4863, %v5066
  %v5068 = vpop.f32.mrf.mxu0
  %v5069 = vpop.f32.mrf.mxu0
  %v5070 = vadd.f32 %v4863, %v5069
  %v5071 = vpop.f32.mrf.mxu0
  %5072 = vmatprep.mubr.bf16.mxu0 0
  %5073 = vmatmul.mubr.bf16.gmra.mxu0 %v4900
  %v5074 = vpop.f32.mrf.mxu0
  %v5075 = vadd.f32 %v4863, %v5074
  %v5076 = vpop.f32.mrf.mxu0
  %v5077 = vpop.f32.mrf.mxu0
  %v5078 = vadd.f32 %v4863, %v5077
  %v5079 = vpop.f32.mrf.mxu0
  %5080 = vmatprep.mubr.bf16.mxu0 0
  %5081 = vmatmul.mubr.bf16.gmra.mxu0 %v4903
  %v5082 = vpop.f32.mrf.mxu0
  %v5083 = vadd.f32 %v4863, %v5082
  %v5084 = vpop.f32.mrf.mxu0
  %v5085 = vpop.f32.mrf.mxu0
  %v5086 = vadd.f32 %v4863, %v5085
  %v5087 = vpop.f32.mrf.mxu0
  %5088 = vmatprep.mubr.bf16.mxu0 0
  %5089 = vmatmul.mubr.bf16.gmra.mxu0 %v4906
  %v5090 = vpop.f32.mrf.mxu0
  %v5091 = vadd.f32 %v4863, %v5090
  %v5092 = vpop.f32.mrf.mxu0
  %v5093 = vpop.f32.mrf.mxu0
  %v5094 = vadd.f32 %v4863, %v5093
  %v5095 = vpop.f32.mrf.mxu0
  %5096 = vmatprep.mubr.bf16.mxu0 0
  %5097 = vmatmul.mubr.bf16.gmra.mxu0 %v4909
  %v5098 = vpop.f32.mrf.mxu0
  %v5099 = vadd.f32 %v4863, %v5098
  %v5100 = vpop.f32.mrf.mxu0
  %v5101 = vpop.f32.mrf.mxu0
  %v5102 = vadd.f32 %v4863, %v5101
  %v5103 = vpop.f32.mrf.mxu0
  %5104 = vmatprep.mubr.bf16.mxu0 0
  %5105 = vmatmul.mubr.bf16.gmra.mxu0 %v4912
  %v5106 = vpop.f32.mrf.mxu0
  %v5107 = vadd.f32 %v4863, %v5106
  %v5108 = vpop.f32.mrf.mxu0
  %v5109 = vpop.f32.mrf.mxu0
  %v5110 = vadd.f32 %v4863, %v5109
  %v5111 = vpop.f32.mrf.mxu0
  %5112 = vmatprep.mubr.bf16.mxu0 0
  %5113 = vmatmul.mubr.bf16.gmra.mxu0 %v4915
  %v5114 = vpop.f32.mrf.mxu0
  %v5115 = vadd.f32 %v4863, %v5114
  %v5116 = vpop.f32.mrf.mxu0
  %v5117 = vpop.f32.mrf.mxu0
  %v5118 = vadd.f32 %v4863, %v5117
  %v5119 = vpop.f32.mrf.mxu0
  %5120 = vmatprep.mubr.bf16.mxu0 0
  %5121 = vmatmul.mubr.bf16.gmra.mxu0 %v4918
  %v5122 = vpop.f32.mrf.mxu0
  %v5123 = vadd.f32 %v4863, %v5122
  %v5124 = vpop.f32.mrf.mxu0
  %v5125 = vpop.f32.mrf.mxu0
  %v5126 = vadd.f32 %v4863, %v5125
  %v5127 = vpop.f32.mrf.mxu0
  %5128 = vmatprep.mubr.bf16.mxu0 0
  %5129 = vmatmul.mubr.bf16.gmra.mxu0 %v4921
  %v5130 = vpop.f32.mrf.mxu0
  %v5131 = vadd.f32 %v4863, %v5130
  %v5132 = vpop.f32.mrf.mxu0
  %v5133 = vpop.f32.mrf.mxu0
  %v5134 = vadd.f32 %v4863, %v5133
  %v5135 = vpop.f32.mrf.mxu0
  %5136 = vmatprep.mubr.bf16.mxu0 0
  %5137 = vmatmul.mubr.bf16.gmra.mxu0 %v4924
  %v5138 = vpop.f32.mrf.mxu0
  %v5139 = vadd.f32 %v4863, %v5138
  %v5140 = vpop.f32.mrf.mxu0
  %v5141 = vpop.f32.mrf.mxu0
  %v5142 = vadd.f32 %v4863, %v5141
  %v5143 = vpop.f32.mrf.mxu0
  %5144 = vmatprep.mubr.bf16.mxu0 0
  %5145 = vmatmul.mubr.bf16.gmra.mxu0 %v4927
  %v5146 = vpop.f32.mrf.mxu0
  %v5147 = vadd.f32 %v4863, %v5146
  %v5148 = vpop.f32.mrf.mxu0
  %v5149 = vpop.f32.mrf.mxu0
  %v5150 = vadd.f32 %v4863, %v5149
  %v5151 = vpop.f32.mrf.mxu0
  %5152 = vmatprep.mubr.bf16.mxu0 0
  %5153 = vmatmul.mubr.bf16.gmra.mxu0 %v4930
  %v5154 = vpop.f32.mrf.mxu0
  %v5155 = vadd.f32 %v4863, %v5154
  %v5156 = vpop.f32.mrf.mxu0
  %v5157 = vpop.f32.mrf.mxu0
  %v5158 = vadd.f32 %v4863, %v5157
  %v5159 = vpop.f32.mrf.mxu0
  %5160 = vmatprep.mubr.bf16.mxu0 0
  %5161 = vmatmul.mubr.bf16.gmra.mxu0 %v4933
  %v5162 = vpop.f32.mrf.mxu0
  %v5163 = vadd.f32 %v4863, %v5162
  %v5164 = vpop.f32.mrf.mxu0
  %v5165 = vpop.f32.mrf.mxu0
  %v5166 = vadd.f32 %v4863, %v5165
  %v5167 = vpop.f32.mrf.mxu0
  %5168 = vmatprep.mubr.bf16.mxu0 0
  %5169 = vmatmul.mubr.bf16.gmra.mxu0 %v4936
  %v5170 = vpop.f32.mrf.mxu0
  %v5171 = vadd.f32 %v4863, %v5170
  %v5172 = vpop.f32.mrf.mxu0
  %v5173 = vpop.f32.mrf.mxu0
  %v5174 = vadd.f32 %v4863, %v5173
  %v5175 = vpop.f32.mrf.mxu0
  %5176 = vmatprep.mubr.bf16.mxu0 0
  %5177 = vmatmul.mubr.bf16.gmra.mxu0 %v4939
  %v5178 = vpop.f32.mrf.mxu0
  %v5179 = vadd.f32 %v4863, %v5178
  %v5180 = vpop.f32.mrf.mxu0
  %v5181 = vpop.f32.mrf.mxu0
  %v5182 = vadd.f32 %v4863, %v5181
  %v5183 = vpop.f32.mrf.mxu0
  %5184 = vmatprep.mubr.bf16.mxu0 0
  %5185 = vmatmul.mubr.bf16.gmra.mxu0 %v4942
  %v5186 = vpop.f32.mrf.mxu0
  %v5187 = vadd.f32 %v4863, %v5186
  %v5188 = vpop.f32.mrf.mxu0
  %v5189 = vpop.f32.mrf.mxu0
  %v5190 = vadd.f32 %v4863, %v5189
  %v5191 = vpop.f32.mrf.mxu0
  %5192 = vmatprep.mubr.bf16.mxu0 0
  %5193 = vmatmul.mubr.bf16.gmra.mxu0 %v4945
  %v5194 = vpop.f32.mrf.mxu0
  %v5195 = vadd.f32 %v4863, %v5194
  %v5196 = vpop.f32.mrf.mxu0
  %v5197 = vpop.f32.mrf.mxu0
  %v5198 = vadd.f32 %v4863, %v5197
  %v5199 = vpop.f32.mrf.mxu0
  %5200 = vmatprep.mubr.bf16.mxu0 0
  %5201 = vmatmul.mubr.bf16.gmra.mxu0 %v4948
  %v5202 = vpop.f32.mrf.mxu0
  %v5203 = vadd.f32 %v4863, %v5202
  %v5204 = vpop.f32.mrf.mxu0
  %v5205 = vpop.f32.mrf.mxu0
  %v5206 = vadd.f32 %v4863, %v5205
  %v5207 = vpop.f32.mrf.mxu0
  %5208 = vmatprep.mubr.bf16.mxu0 0
  %5209 = vmatmul.mubr.bf16.gmra.mxu0 %v4951
  %v5210 = vpop.f32.mrf.mxu0
  %v5211 = vadd.f32 %v4863, %v5210
  %v5212 = vpop.f32.mrf.mxu0
  %v5213 = vpop.f32.mrf.mxu0
  %v5214 = vadd.f32 %v4863, %v5213
  %v5215 = vpop.f32.mrf.mxu0
  %5216 = vmatprep.mubr.bf16.mxu0 0
  %5217 = vmatmul.mubr.bf16.gmra.mxu0 %v4954
  %v5218 = vpop.f32.mrf.mxu0
  %v5219 = vadd.f32 %v4863, %v5218
  %v5220 = vpop.f32.mrf.mxu0
  %v5221 = vpop.f32.mrf.mxu0
  %v5222 = vadd.f32 %v4863, %v5221
  %v5223 = vpop.f32.mrf.mxu0
  %5224 = vmatprep.mubr.bf16.mxu0 0
  %5225 = vmatmul.mubr.bf16.gmra.mxu0 %v4957
  %v5226 = vpop.f32.mrf.mxu0
  %v5227 = vadd.f32 %v4863, %v5226
  %v5228 = vpop.f32.mrf.mxu0
  %v5229 = vpop.f32.mrf.mxu0
  %v5230 = vadd.f32 %v4863, %v5229
  %v5231 = vpop.f32.mrf.mxu0
  %5232 = vmatprep.mubr.bf16.mxu0 0
  %5233 = vmatmul.mubr.bf16.gmra.mxu0 %v4960
  %v5234 = vpop.f32.mrf.mxu0
  %v5235 = vadd.f32 %v4863, %v5234
  %v5236 = vpop.f32.mrf.mxu0
  %v5237 = vpop.f32.mrf.mxu0
  %v5238 = vadd.f32 %v4863, %v5237
  %v5239 = vpop.f32.mrf.mxu0
  %5240 = vmatprep.mubr.bf16.mxu0 0
  %5241 = vmatmul.mubr.bf16.gmra.mxu0 %v4963
  %v5242 = vpop.f32.mrf.mxu0
  %v5243 = vadd.f32 %v4863, %v5242
  %v5244 = vpop.f32.mrf.mxu0
  %v5245 = vpop.f32.mrf.mxu0
  %v5246 = vadd.f32 %v4863, %v5245
  %v5247 = vpop.f32.mrf.mxu0
  %5248 = vmatprep.mubr.bf16.mxu0 0
  %5249 = vmatmul.mubr.bf16.gmra.mxu0 %v4966
  %v5250 = vpop.f32.mrf.mxu0
  %v5251 = vadd.f32 %v4863, %v5250
  %v5252 = vpop.f32.mrf.mxu0
  %v5253 = vpop.f32.mrf.mxu0
  %v5254 = vadd.f32 %v4863, %v5253
  %v5255 = vpop.f32.mrf.mxu0
  %5256 = vdwg.mxu0
  %v5257 = vmax.f32 %v5003, 0.0
  %v5258 = vmax.f32 %v5006, 0.0
  %v5259 = vmax.f32 %v5011, 0.0
  %v5260 = vmax.f32 %v5014, 0.0
  %v5261 = vmax.f32 %v5019, 0.0
  %v5262 = vmax.f32 %v5022, 0.0
  %v5263 = vmax.f32 %v5027, 0.0
  %v5264 = vmax.f32 %v5030, 0.0
  %v5265 = vmax.f32 %v5035, 0.0
  %v5266 = vmax.f32 %v5038, 0.0
  %v5267 = vmax.f32 %v5043, 0.0
  %v5268 = vmax.f32 %v5046, 0.0
  %v5269 = vmax.f32 %v5051, 0.0
  %v5270 = vmax.f32 %v5054, 0.0
  %v5271 = vmax.f32 %v5059, 0.0
  %v5272 = vmax.f32 %v5062, 0.0
  %v5273 = vmax.f32 %v5067, 0.0
  %v5274 = vmax.f32 %v5070, 0.0
  %v5275 = vmax.f32 %v5075, 0.0
  %v5276 = vmax.f32 %v5078, 0.0
  %v5277 = vmax.f32 %v5083, 0.0
  %v5278 = vmax.f32 %v5086, 0.0
  %v5279 = vmax.f32 %v5091, 0.0
  %v5280 = vmax.f32 %v5094, 0.0
  %v5281 = vmax.f32 %v5099, 0.0
  %v5282 = vmax.f32 %v5102, 0.0
  %v5283 = vmax.f32 %v5107, 0.0
  %v5284 = vmax.f32 %v5110, 0.0
  %v5285 = vmax.f32 %v5115, 0.0
  %v5286 = vmax.f32 %v5118, 0.0
  %v5287 = vmax.f32 %v5123, 0.0
  %v5288 = vmax.f32 %v5126, 0.0
  %v5289 = vmax.f32 %v5131, 0.0
  %v5290 = vmax.f32 %v5134, 0.0
  %v5291 = vmax.f32 %v5139, 0.0
  %v5292 = vmax.f32 %v5142, 0.0
  %v5293 = vmax.f32 %v5147, 0.0
  %v5294 = vmax.f32 %v5150, 0.0
  %v5295 = vmax.f32 %v5155, 0.0
  %v5296 = vmax.f32 %v5158, 0.0
  %v5297 = vmax.f32 %v5163, 0.0
  %v5298 = vmax.f32 %v5166, 0.0
  %v5299 = vmax.f32 %v5171, 0.0
  %v5300 = vmax.f32 %v5174, 0.0
  %v5301 = vmax.f32 %v5179, 0.0
  %v5302 = vmax.f32 %v5182, 0.0
  %v5303 = vmax.f32 %v5187, 0.0
  %v5304 = vmax.f32 %v5190, 0.0
  %v5305 = vmax.f32 %v5195, 0.0
  %v5306 = vmax.f32 %v5198, 0.0
  %v5307 = vmax.f32 %v5203, 0.0
  %v5308 = vmax.f32 %v5206, 0.0
  %v5309 = vmax.f32 %v5211, 0.0
  %v5310 = vmax.f32 %v5214, 0.0
  %v5311 = vmax.f32 %v5219, 0.0
  %v5312 = vmax.f32 %v5222, 0.0
  %v5313 = vmax.f32 %v5227, 0.0
  %v5314 = vmax.f32 %v5230, 0.0
  %v5315 = vmax.f32 %v5235, 0.0
  %v5316 = vmax.f32 %v5238, 0.0
  %v5317 = vmax.f32 %v5243, 0.0
  %v5318 = vmax.f32 %v5246, 0.0
  %v5319 = vmax.f32 %v5251, 0.0
  %v5320 = vmax.f32 %v5254, 0.0
  %v5321 = vld [vmem:[%s0] sm:$0xf]
  %v5322 = vld [vmem:[%s0 + $0x4] sm:$0xf]
  %v5323 = vld [vmem:[%s0 + $0x8] sm:$0xf]
  %v5324 = vld [vmem:[%s0 + $0xc] sm:$0xf]
  %v5325 = vld [vmem:[%s0 + $0x10] sm:$0xf]
  %v5326 = vld [vmem:[%s0 + $0x14] sm:$0xf]
  %v5327 = vld [vmem:[%s0 + $0x18] sm:$0xf]
  %v5328 = vld [vmem:[%s0 + $0x1c] sm:$0xf]
  %v5329 = vld [vmem:[%s0 + $0x20] sm:$0xf]
  %v5330 = vld [vmem:[%s0 + $0x24] sm:$0xf]
  %v5331 = vld [vmem:[%s0 + $0x28] sm:$0xf]
  %v5332 = vld [vmem:[%s0 + $0x2c] sm:$0xf]
  %v5333 = vld [vmem:[%s0 + $0x30] sm:$0xf]
  %v5334 = vld [vmem:[%s0 + $0x34] sm:$0xf]
  %v5335 = vld [vmem:[%s0 + $0x38] sm:$0xf]
  %v5336 = vld [vmem:[%s0 + $0x3c] sm:$0xf]
  %v5337 = vld [vmem:[%s0 + $0x40] sm:$0xf]
  %v5338 = vld [vmem:[%s0 + $0x44] sm:$0xf]
  %v5339 = vld [vmem:[%s0 + $0x48] sm:$0xf]
  %v5340 = vld [vmem:[%s0 + $0x4c] sm:$0xf]
  %v5341 = vld [vmem:[%s0 + $0x50] sm:$0xf]
  %v5342 = vld [vmem:[%s0 + $0x54] sm:$0xf]
  %v5343 = vld [vmem:[%s0 + $0x58] sm:$0xf]
  %v5344 = vld [vmem:[%s0 + $0x5c] sm:$0xf]
  %v5345 = vld [vmem:[%s0 + $0x60] sm:$0xf]
  %v5346 = vld [vmem:[%s0 + $0x64] sm:$0xf]
  %v5347 = vld [vmem:[%s0 + $0x68] sm:$0xf]
  %v5348 = vld [vmem:[%s0 + $0x6c] sm:$0xf]
  %v5349 = vld [vmem:[%s0 + $0x70] sm:$0xf]
  %v5350 = vld [vmem:[%s0 + $0x74] sm:$0xf]
  %v5351 = vld [vmem:[%s0 + $0x78] sm:$0xf]
  %v5352 = vld [vmem:[%s0 + $0x7c] sm:$0xf]
  %v5353 = vld [vmem:[%s0 + $0x80] sm:$0xf]
  %v5354 = vld [vmem:[%s0 + $0x84] sm:$0xf]
  %v5355 = vld [vmem:[%s0 + $0x88] sm:$0xf]
  %v5356 = vld [vmem:[%s0 + $0x8c] sm:$0xf]
  %v5357 = vld [vmem:[%s0 + $0x90] sm:$0xf]
  %v5358 = vld [vmem:[%s0 + $0x94] sm:$0xf]
  %v5359 = vld [vmem:[%s0 + $0x98] sm:$0xf]
  %v5360 = vld [vmem:[%s0 + $0x9c] sm:$0xf]
  %v5361 = vld [vmem:[%s0 + $0xa0] sm:$0xf]
  %v5362 = vld [vmem:[%s0 + $0xa4] sm:$0xf]
  %v5363 = vld [vmem:[%s0 + $0xa8] sm:$0xf]
  %v5364 = vld [vmem:[%s0 + $0xac] sm:$0xf]
  %v5365 = vld [vmem:[%s0 + $0xb0] sm:$0xf]
  %v5366 = vld [vmem:[%s0 + $0xb4] sm:$0xf]
  %v5367 = vld [vmem:[%s0 + $0xb8] sm:$0xf]
  %v5368 = vld [vmem:[%s0 + $0xbc] sm:$0xf]
  %v5369 = vld [vmem:[%s0 + $0xc0] sm:$0xf]
  %v5370 = vld [vmem:[%s0 + $0xc4] sm:$0xf]
  %v5371 = vld [vmem:[%s0 + $0xc8] sm:$0xf]
  %v5372 = vld [vmem:[%s0 + $0xcc] sm:$0xf]
  %v5373 = vld [vmem:[%s0 + $0xd0] sm:$0xf]
  %v5374 = vld [vmem:[%s0 + $0xd4] sm:$0xf]
  %v5375 = vld [vmem:[%s0 + $0xd8] sm:$0xf]
  %v5376 = vld [vmem:[%s0 + $0xdc] sm:$0xf]
  %v5377 = vld [vmem:[%s0 + $0xe0] sm:$0xf]
  %v5378 = vld [vmem:[%s0 + $0xe4] sm:$0xf]
  %v5379 = vld [vmem:[%s0 + $0xe8] sm:$0xf]
  %v5380 = vld [vmem:[%s0 + $0xec] sm:$0xf]
  %v5381 = vld [vmem:[%s0 + $0xf0] sm:$0xf]
  %v5382 = vld [vmem:[%s0 + $0xf4] sm:$0xf]
  %v5383 = vld [vmem:[%s0 + $0xf8] sm:$0xf]
  %v5384 = vld [vmem:[%s0 + $0xfc] sm:$0xf]
  %v5385 = vunpack.c.l.bf16 %v5321
  %v5386 = vunpack.c.l.bf16 %v5322
  %v5387 = vunpack.c.l.bf16 %v5323
  %v5388 = vunpack.c.l.bf16 %v5324
  %v5389 = vunpack.c.l.bf16 %v5325
  %v5390 = vunpack.c.l.bf16 %v5326
  %v5391 = vunpack.c.l.bf16 %v5327
  %v5392 = vunpack.c.l.bf16 %v5328
  %v5393 = vunpack.c.l.bf16 %v5329
  %v5394 = vunpack.c.l.bf16 %v5330
  %v5395 = vunpack.c.l.bf16 %v5331
  %v5396 = vunpack.c.l.bf16 %v5332
  %v5397 = vunpack.c.l.bf16 %v5333
  %v5398 = vunpack.c.l.bf16 %v5334
  %v5399 = vunpack.c.l.bf16 %v5335
  %v5400 = vunpack.c.l.bf16 %v5336
  %v5401 = vunpack.c.l.bf16 %v5337
  %v5402 = vunpack.c.l.bf16 %v5338
  %v5403 = vunpack.c.l.bf16 %v5339
  %v5404 = vunpack.c.l.bf16 %v5340
  %v5405 = vunpack.c.l.bf16 %v5341
  %v5406 = vunpack.c.l.bf16 %v5342
  %v5407 = vunpack.c.l.bf16 %v5343
  %v5408 = vunpack.c.l.bf16 %v5344
  %v5409 = vunpack.c.l.bf16 %v5345
  %v5410 = vunpack.c.l.bf16 %v5346
  %v5411 = vunpack.c.l.bf16 %v5347
  %v5412 = vunpack.c.l.bf16 %v5348
  %v5413 = vunpack.c.l.bf16 %v5349
  %v5414 = vunpack.c.l.bf16 %v5350
  %v5415 = vunpack.c.l.bf16 %v5351
  %v5416 = vunpack.c.l.bf16 %v5352
  %v5417 = vunpack.c.l.bf16 %v5353
  %v5418 = vunpack.c.l.bf16 %v5354
  %v5419 = vunpack.c.l.bf16 %v5355
  %v5420 = vunpack.c.l.bf16 %v5356
  %v5421 = vunpack.c.l.bf16 %v5357
  %v5422 = vunpack.c.l.bf16 %v5358
  %v5423 = vunpack.c.l.bf16 %v5359
  %v5424 = vunpack.c.l.bf16 %v5360
  %v5425 = vunpack.c.l.bf16 %v5361
  %v5426 = vunpack.c.l.bf16 %v5362
  %v5427 = vunpack.c.l.bf16 %v5363
  %v5428 = vunpack.c.l.bf16 %v5364
  %v5429 = vunpack.c.l.bf16 %v5365
  %v5430 = vunpack.c.l.bf16 %v5366
  %v5431 = vunpack.c.l.bf16 %v5367
  %v5432 = vunpack.c.l.bf16 %v5368
  %v5433 = vunpack.c.l.bf16 %v5369
  %v5434 = vunpack.c.l.bf16 %v5370
  %v5435 = vunpack.c.l.bf16 %v5371
  %v5436 = vunpack.c.l.bf16 %v5372
  %v5437 = vunpack.c.l.bf16 %v5373
  %v5438 = vunpack.c.l.bf16 %v5374
  %v5439 = vunpack.c.l.bf16 %v5375
  %v5440 = vunpack.c.l.bf16 %v5376
  %v5441 = vunpack.c.l.bf16 %v5377
  %v5442 = vunpack.c.l.bf16 %v5378
  %v5443 = vunpack.c.l.bf16 %v5379
  %v5444 = vunpack.c.l.bf16 %v5380
  %v5445 = vunpack.c.l.bf16 %v5381
  %v5446 = vunpack.c.l.bf16 %v5382
  %v5447 = vunpack.c.l.bf16 %v5383
  %v5448 = vunpack.c.l.bf16 %v5384
  %v5449 = vadd.f32 %v5257, %v5385
  %v5450 = vadd.f32 %v5258, %v5386
  %v5451 = vadd.f32 %v5259, %v5387
  %v5452 = vadd.f32 %v5260, %v5388
  %v5453 = vadd.f32 %v5261, %v5389
  %v5454 = vadd.f32 %v5262, %v5390
  %v5455 = vadd.f32 %v5263, %v5391
  %v5456 = vadd.f32 %v5264, %v5392
  %v5457 = vadd.f32 %v5265, %v5393
  %v5458 = vadd.f32 %v5266, %v5394
  %v5459 = vadd.f32 %v5267, %v5395
  %v5460 = vadd.f32 %v5268, %v5396
  %v5461 = vadd.f32 %v5269, %v5397
  %v5462 = vadd.f32 %v5270, %v5398
  %v5463 = vadd.f32 %v5271, %v5399
  %v5464 = vadd.f32 %v5272, %v5400
  %v5465 = vadd.f32 %v5273, %v5401
  %v5466 = vadd.f32 %v5274, %v5402
  %v5467 = vadd.f32 %v5275, %v5403
  %v5468 = vadd.f32 %v5276, %v5404
  %v5469 = vadd.f32 %v5277, %v5405
  %v5470 = vadd.f32 %v5278, %v5406
  %v5471 = vadd.f32 %v5279, %v5407
  %v5472 = vadd.f32 %v5280, %v5408
  %v5473 = vadd.f32 %v5281, %v5409
  %v5474 = vadd.f32 %v5282, %v5410
  %v5475 = vadd.f32 %v5283, %v5411
  %v5476 = vadd.f32 %v5284, %v5412
  %v5477 = vadd.f32 %v5285, %v5413
  %v5478 = vadd.f32 %v5286, %v5414
  %v5479 = vadd.f32 %v5287, %v5415
  %v5480 = vadd.f32 %v5288, %v5416
  %v5481 = vadd.f32 %v5289, %v5417
  %v5482 = vadd.f32 %v5290, %v5418
  %v5483 = vadd.f32 %v5291, %v5419
  %v5484 = vadd.f32 %v5292, %v5420
  %v5485 = vadd.f32 %v5293, %v5421
  %v5486 = vadd.f32 %v5294, %v5422
  %v5487 = vadd.f32 %v5295, %v5423
  %v5488 = vadd.f32 %v5296, %v5424
  %v5489 = vadd.f32 %v5297, %v5425
  %v5490 = vadd.f32 %v5298, %v5426
  %v5491 = vadd.f32 %v5299, %v5427
  %v5492 = vadd.f32 %v5300, %v5428
  %v5493 = vadd.f32 %v5301, %v5429
  %v5494 = vadd.f32 %v5302, %v5430
  %v5495 = vadd.f32 %v5303, %v5431
  %v5496 = vadd.f32 %v5304, %v5432
  %v5497 = vadd.f32 %v5305, %v5433
  %v5498 = vadd.f32 %v5306, %v5434
  %v5499 = vadd.f32 %v5307, %v5435
  %v5500 = vadd.f32 %v5308, %v5436
  %v5501 = vadd.f32 %v5309, %v5437
  %v5502 = vadd.f32 %v5310, %v5438
  %v5503 = vadd.f32 %v5311, %v5439
  %v5504 = vadd.f32 %v5312, %v5440
  %v5505 = vadd.f32 %v5313, %v5441
  %v5506 = vadd.f32 %v5314, %v5442
  %v5507 = vadd.f32 %v5315, %v5443
  %v5508 = vadd.f32 %v5316, %v5444
  %v5509 = vadd.f32 %v5317, %v5445
  %v5510 = vadd.f32 %v5318, %v5446
  %v5511 = vadd.f32 %v5319, %v5447
  %v5512 = vadd.f32 %v5320, %v5448
  %v5513 = vmax.f32 %v5449, 0.0
  %v5514 = vmax.f32 %v5450, 0.0
  %v5515 = vmax.f32 %v5451, 0.0
  %v5516 = vmax.f32 %v5452, 0.0
  %v5517 = vmax.f32 %v5453, 0.0
  %v5518 = vmax.f32 %v5454, 0.0
  %v5519 = vmax.f32 %v5455, 0.0
  %v5520 = vmax.f32 %v5456, 0.0
  %v5521 = vmax.f32 %v5457, 0.0
  %v5522 = vmax.f32 %v5458, 0.0
  %v5523 = vmax.f32 %v5459, 0.0
  %v5524 = vmax.f32 %v5460, 0.0
  %v5525 = vmax.f32 %v5461, 0.0
  %v5526 = vmax.f32 %v5462, 0.0
  %v5527 = vmax.f32 %v5463, 0.0
  %v5528 = vmax.f32 %v5464, 0.0
  %v5529 = vmax.f32 %v5465, 0.0
  %v5530 = vmax.f32 %v5466, 0.0
  %v5531 = vmax.f32 %v5467, 0.0
  %v5532 = vmax.f32 %v5468, 0.0
  %v5533 = vmax.f32 %v5469, 0.0
  %v5534 = vmax.f32 %v5470, 0.0
  %v5535 = vmax.f32 %v5471, 0.0
  %v5536 = vmax.f32 %v5472, 0.0
  %v5537 = vmax.f32 %v5473, 0.0
  %v5538 = vmax.f32 %v5474, 0.0
  %v5539 = vmax.f32 %v5475, 0.0
  %v5540 = vmax.f32 %v5476, 0.0
  %v5541 = vmax.f32 %v5477, 0.0
  %v5542 = vmax.f32 %v5478, 0.0
  %v5543 = vmax.f32 %v5479, 0.0
  %v5544 = vmax.f32 %v5480, 0.0
  %v5545 = vmax.f32 %v5481, 0.0
  %v5546 = vmax.f32 %v5482, 0.0
  %v5547 = vmax.f32 %v5483, 0.0
  %v5548 = vmax.f32 %v5484, 0.0
  %v5549 = vmax.f32 %v5485, 0.0
  %v5550 = vmax.f32 %v5486, 0.0
  %v5551 = vmax.f32 %v5487, 0.0
  %v5552 = vmax.f32 %v5488, 0.0
  %v5553 = vmax.f32 %v5489, 0.0
  %v5554 = vmax.f32 %v5490, 0.0
  %v5555 = vmax.f32 %v5491, 0.0
  %v5556 = vmax.f32 %v5492, 0.0
  %v5557 = vmax.f32 %v5493, 0.0
  %v5558 = vmax.f32 %v5494, 0.0
  %v5559 = vmax.f32 %v5495, 0.0
  %v5560 = vmax.f32 %v5496, 0.0
  %v5561 = vmax.f32 %v5497, 0.0
  %v5562 = vmax.f32 %v5498, 0.0
  %v5563 = vmax.f32 %v5499, 0.0
  %v5564 = vmax.f32 %v5500, 0.0
  %v5565 = vmax.f32 %v5501, 0.0
  %v5566 = vmax.f32 %v5502, 0.0
  %v5567 = vmax.f32 %v5503, 0.0
  %v5568 = vmax.f32 %v5504, 0.0
  %v5569 = vmax.f32 %v5505, 0.0
  %v5570 = vmax.f32 %v5506, 0.0
  %v5571 = vmax.f32 %v5507, 0.0
  %v5572 = vmax.f32 %v5508, 0.0
  %v5573 = vmax.f32 %v5509, 0.0
  %v5574 = vmax.f32 %v5510, 0.0
  %v5575 = vmax.f32 %v5511, 0.0
  %v5576 = vmax.f32 %v5512, 0.0
  %v5577 = vpack.c.bf16 %v5514, %v5513
  %v5578 = vpack.c.bf16 %v5516, %v5515
  %v5579 = vpack.c.bf16 %v5518, %v5517
  %v5580 = vpack.c.bf16 %v5520, %v5519
  %v5581 = vpack.c.bf16 %v5522, %v5521
  %v5582 = vpack.c.bf16 %v5524, %v5523
  %v5583 = vpack.c.bf16 %v5526, %v5525
  %v5584 = vpack.c.bf16 %v5528, %v5527
  %v5585 = vpack.c.bf16 %v5530, %v5529
  %v5586 = vpack.c.bf16 %v5532, %v5531
  %v5587 = vpack.c.bf16 %v5534, %v5533
  %v5588 = vpack.c.bf16 %v5536, %v5535
  %v5589 = vpack.c.bf16 %v5538, %v5537
  %v5590 = vpack.c.bf16 %v5540, %v5539
  %v5591 = vpack.c.bf16 %v5542, %v5541
  %v5592 = vpack.c.bf16 %v5544, %v5543
  %v5593 = vpack.c.bf16 %v5546, %v5545
  %v5594 = vpack.c.bf16 %v5548, %v5547
  %v5595 = vpack.c.bf16 %v5550, %v5549
  %v5596 = vpack.c.bf16 %v5552, %v5551
  %v5597 = vpack.c.bf16 %v5554, %v5553
  %v5598 = vpack.c.bf16 %v5556, %v5555
  %v5599 = vpack.c.bf16 %v5558, %v5557
  %v5600 = vpack.c.bf16 %v5560, %v5559
  %v5601 = vpack.c.bf16 %v5562, %v5561
  %v5602 = vpack.c.bf16 %v5564, %v5563
  %v5603 = vpack.c.bf16 %v5566, %v5565
  %v5604 = vpack.c.bf16 %v5568, %v5567
  %v5605 = vpack.c.bf16 %v5570, %v5569
  %v5606 = vpack.c.bf16 %v5572, %v5571
  %v5607 = vpack.c.bf16 %v5574, %v5573
  %v5608 = vpack.c.bf16 %v5576, %v5575
  %v5641 = vunpack.c.l.b16 %v5577
  %v5642 = vunpack.c.h.b16 %v5577
  %v5643 = vunpack.c.l.b16 %v5578
  %v5644 = vunpack.c.h.b16 %v5578
  %v5645 = vunpack.c.l.b16 %v5579
  %v5646 = vunpack.c.h.b16 %v5579
  %v5647 = vunpack.c.l.b16 %v5580
  %v5648 = vunpack.c.h.b16 %v5580
  %v5649 = vunpack.c.l.b16 %v5581
  %v5650 = vunpack.c.h.b16 %v5581
  %v5651 = vunpack.c.l.b16 %v5582
  %v5652 = vunpack.c.h.b16 %v5582
  %v5653 = vunpack.c.l.b16 %v5583
  %v5654 = vunpack.c.h.b16 %v5583
  %v5655 = vunpack.c.l.b16 %v5584
  %v5656 = vunpack.c.h.b16 %v5584
  %v5657 = vunpack.c.l.b16 %v5585
  %v5658 = vunpack.c.h.b16 %v5585
  %v5659 = vunpack.c.l.b16 %v5586
  %v5660 = vunpack.c.h.b16 %v5586
  %v5661 = vunpack.c.l.b16 %v5587
  %v5662 = vunpack.c.h.b16 %v5587
  %v5663 = vunpack.c.l.b16 %v5588
  %v5664 = vunpack.c.h.b16 %v5588
  %v5665 = vunpack.c.l.b16 %v5589
  %v5666 = vunpack.c.h.b16 %v5589
  %v5667 = vunpack.c.l.b16 %v5590
  %v5668 = vunpack.c.h.b16 %v5590
  %v5669 = vunpack.c.l.b16 %v5591
  %v5670 = vunpack.c.h.b16 %v5591
  %v5671 = vunpack.c.l.b16 %v5592
  %v5672 = vunpack.c.h.b16 %v5592
  %v5673 = vunpack.c.l.b16 %v5593
  %v5674 = vunpack.c.h.b16 %v5593
  %v5675 = vunpack.c.l.b16 %v5594
  %v5676 = vunpack.c.h.b16 %v5594
  %v5677 = vunpack.c.l.b16 %v5595
  %v5678 = vunpack.c.h.b16 %v5595
  %v5679 = vunpack.c.l.b16 %v5596
  %v5680 = vunpack.c.h.b16 %v5596
  %v5681 = vunpack.c.l.b16 %v5597
  %v5682 = vunpack.c.h.b16 %v5597
  %v5683 = vunpack.c.l.b16 %v5598
  %v5684 = vunpack.c.h.b16 %v5598
  %v5685 = vunpack.c.l.b16 %v5599
  %v5686 = vunpack.c.h.b16 %v5599
  %v5687 = vunpack.c.l.b16 %v5600
  %v5688 = vunpack.c.h.b16 %v5600
  %v5689 = vunpack.c.l.b16 %v5601
  %v5690 = vunpack.c.h.b16 %v5601
  %v5691 = vunpack.c.l.b16 %v5602
  %v5692 = vunpack.c.h.b16 %v5602
  %v5693 = vunpack.c.l.b16 %v5603
  %v5694 = vunpack.c.h.b16 %v5603
  %v5695 = vunpack.c.l.b16 %v5604
  %v5696 = vunpack.c.h.b16 %v5604
  %v5697 = vunpack.c.l.b16 %v5605
  %v5698 = vunpack.c.h.b16 %v5605
  %v5699 = vunpack.c.l.b16 %v5606
  %v5700 = vunpack.c.h.b16 %v5606
  %v5701 = vunpack.c.l.b16 %v5607
  %v5702 = vunpack.c.h.b16 %v5607
  %v5703 = vunpack.c.l.b16 %v5608
  %v5704 = vunpack.c.h.b16 %v5608
  %v5705 = vpack.c.b16 %v5641, %v5641
  %v5706 = vpack.c.b16 %v5642, %v5642
  %v5707 = vpack.c.b16 %v5643, %v5643
  %v5708 = vpack.c.b16 %v5644, %v5644
  %v5709 = vpack.c.b16 %v5645, %v5645
  %v5710 = vpack.c.b16 %v5646, %v5646
  %v5711 = vpack.c.b16 %v5647, %v5647
  %v5712 = vpack.c.b16 %v5648, %v5648
  %v5713 = vpack.c.b16 %v5649, %v5649
  %v5714 = vpack.c.b16 %v5650, %v5650
  %v5715 = vpack.c.b16 %v5651, %v5651
  %v5716 = vpack.c.b16 %v5652, %v5652
  %v5717 = vpack.c.b16 %v5653, %v5653
  %v5718 = vpack.c.b16 %v5654, %v5654
  %v5719 = vpack.c.b16 %v5655, %v5655
  %v5720 = vpack.c.b16 %v5656, %v5656
  %v5721 = vpack.c.b16 %v5657, %v5657
  %v5722 = vpack.c.b16 %v5658, %v5658
  %v5723 = vpack.c.b16 %v5659, %v5659
  %v5724 = vpack.c.b16 %v5660, %v5660
  %v5725 = vpack.c.b16 %v5661, %v5661
  %v5726 = vpack.c.b16 %v5662, %v5662
  %v5727 = vpack.c.b16 %v5663, %v5663
  %v5728 = vpack.c.b16 %v5664, %v5664
  %v5729 = vpack.c.b16 %v5665, %v5665
  %v5730 = vpack.c.b16 %v5666, %v5666
  %v5731 = vpack.c.b16 %v5667, %v5667
  %v5732 = vpack.c.b16 %v5668, %v5668
  %v5733 = vpack.c.b16 %v5669, %v5669
  %v5734 = vpack.c.b16 %v5670, %v5670
  %v5735 = vpack.c.b16 %v5671, %v5671
  %v5736 = vpack.c.b16 %v5672, %v5672
  %v5737 = vpack.c.b16 %v5673, %v5673
  %v5738 = vpack.c.b16 %v5674, %v5674
  %v5739 = vpack.c.b16 %v5675, %v5675
  %v5740 = vpack.c.b16 %v5676, %v5676
  %v5741 = vpack.c.b16 %v5677, %v5677
  %v5742 = vpack.c.b16 %v5678, %v5678
  %v5743 = vpack.c.b16 %v5679, %v5679
  %v5744 = vpack.c.b16 %v5680, %v5680
  %v5745 = vpack.c.b16 %v5681, %v5681
  %v5746 = vpack.c.b16 %v5682, %v5682
  %v5747 = vpack.c.b16 %v5683, %v5683
  %v5748 = vpack.c.b16 %v5684, %v5684
  %v5749 = vpack.c.b16 %v5685, %v5685
  %v5750 = vpack.c.b16 %v5686, %v5686
  %v5751 = vpack.c.b16 %v5687, %v5687
  %v5752 = vpack.c.b16 %v5688, %v5688
  %v5753 = vpack.c.b16 %v5689, %v5689
  %v5754 = vpack.c.b16 %v5690, %v5690
  %v5755 = vpack.c.b16 %v5691, %v5691
  %v5756 = vpack.c.b16 %v5692, %v5692
  %v5757 = vpack.c.b16 %v5693, %v5693
  %v5758 = vpack.c.b16 %v5694, %v5694
  %v5759 = vpack.c.b16 %v5695, %v5695
  %v5760 = vpack.c.b16 %v5696, %v5696
  %v5761 = vpack.c.b16 %v5697, %v5697
  %v5762 = vpack.c.b16 %v5698, %v5698
  %v5763 = vpack.c.b16 %v5699, %v5699
  %v5764 = vpack.c.b16 %v5700, %v5700
  %v5765 = vpack.c.b16 %v5701, %v5701
  %v5766 = vpack.c.b16 %v5702, %v5702
  %v5767 = vpack.c.b16 %v5703, %v5703
  %v5768 = vpack.c.b16 %v5704, %v5704
  %vm5833 = vcmask 519168
  %5834 = vst.msk [vmem:[%s7] sm:$0xf] %vm5833, %v5705
  %5835 = vst.msk [vmem:[%s7 + $0x4] sm:$0xf] %vm5833, %v5706
  %5836 = vst.msk [vmem:[%s7 + $0x8] sm:$0xf] %vm5833, %v5707
  %5837 = vst.msk [vmem:[%s7 + $0xc] sm:$0xf] %vm5833, %v5708
  %5838 = vst.msk [vmem:[%s7 + $0x10] sm:$0xf] %vm5833, %v5709
  %5839 = vst.msk [vmem:[%s7 + $0x14] sm:$0xf] %vm5833, %v5710
  %5840 = vst.msk [vmem:[%s7 + $0x18] sm:$0xf] %vm5833, %v5711
  %5841 = vst.msk [vmem:[%s7 + $0x1c] sm:$0xf] %vm5833, %v5712
  %5842 = vst.msk [vmem:[%s7 + $0x20] sm:$0xf] %vm5833, %v5713
  %5843 = vst.msk [vmem:[%s7 + $0x24] sm:$0xf] %vm5833, %v5714
  %5844 = vst.msk [vmem:[%s7 + $0x28] sm:$0xf] %vm5833, %v5715
  %5845 = vst.msk [vmem:[%s7 + $0x2c] sm:$0xf] %vm5833, %v5716
  %5846 = vst.msk [vmem:[%s7 + $0x30] sm:$0xf] %vm5833, %v5717
  %5847 = vst.msk [vmem:[%s7 + $0x34] sm:$0xf] %vm5833, %v5718
  %5848 = vst.msk [vmem:[%s7 + $0x38] sm:$0xf] %vm5833, %v5719
  %5849 = vst.msk [vmem:[%s7 + $0x3c] sm:$0xf] %vm5833, %v5720
  %5850 = vst.msk [vmem:[%s7 + $0x40] sm:$0xf] %vm5833, %v5721
  %5851 = vst.msk [vmem:[%s7 + $0x44] sm:$0xf] %vm5833, %v5722
  %5852 = vst.msk [vmem:[%s7 + $0x48] sm:$0xf] %vm5833, %v5723
  %5853 = vst.msk [vmem:[%s7 + $0x4c] sm:$0xf] %vm5833, %v5724
  %5854 = vst.msk [vmem:[%s7 + $0x50] sm:$0xf] %vm5833, %v5725
  %5855 = vst.msk [vmem:[%s7 + $0x54] sm:$0xf] %vm5833, %v5726
  %5856 = vst.msk [vmem:[%s7 + $0x58] sm:$0xf] %vm5833, %v5727
  %5857 = vst.msk [vmem:[%s7 + $0x5c] sm:$0xf] %vm5833, %v5728
  %5858 = vst.msk [vmem:[%s7 + $0x60] sm:$0xf] %vm5833, %v5729
  %5859 = vst.msk [vmem:[%s7 + $0x64] sm:$0xf] %vm5833, %v5730
  %5860 = vst.msk [vmem:[%s7 + $0x68] sm:$0xf] %vm5833, %v5731
  %5861 = vst.msk [vmem:[%s7 + $0x6c] sm:$0xf] %vm5833, %v5732
  %5862 = vst.msk [vmem:[%s7 + $0x70] sm:$0xf] %vm5833, %v5733
  %5863 = vst.msk [vmem:[%s7 + $0x74] sm:$0xf] %vm5833, %v5734
  %5864 = vst.msk [vmem:[%s7 + $0x78] sm:$0xf] %vm5833, %v5735
  %5865 = vst.msk [vmem:[%s7 + $0x7c] sm:$0xf] %vm5833, %v5736
  %5866 = vst.msk [vmem:[%s7 + $0x80] sm:$0xf] %vm5833, %v5737
  %5867 = vst.msk [vmem:[%s7 + $0x84] sm:$0xf] %vm5833, %v5738
  %5868 = vst.msk [vmem:[%s7 + $0x88] sm:$0xf] %vm5833, %v5739
  %5869 = vst.msk [vmem:[%s7 + $0x8c] sm:$0xf] %vm5833, %v5740
  %5870 = vst.msk [vmem:[%s7 + $0x90] sm:$0xf] %vm5833, %v5741
  %5871 = vst.msk [vmem:[%s7 + $0x94] sm:$0xf] %vm5833, %v5742
  %5872 = vst.msk [vmem:[%s7 + $0x98] sm:$0xf] %vm5833, %v5743
  %5873 = vst.msk [vmem:[%s7 + $0x9c] sm:$0xf] %vm5833, %v5744
  %5874 = vst.msk [vmem:[%s7 + $0xa0] sm:$0xf] %vm5833, %v5745
  %5875 = vst.msk [vmem:[%s7 + $0xa4] sm:$0xf] %vm5833, %v5746
  %5876 = vst.msk [vmem:[%s7 + $0xa8] sm:$0xf] %vm5833, %v5747
  %5877 = vst.msk [vmem:[%s7 + $0xac] sm:$0xf] %vm5833, %v5748
  %5878 = vst.msk [vmem:[%s7 + $0xb0] sm:$0xf] %vm5833, %v5749
  %5879 = vst.msk [vmem:[%s7 + $0xb4] sm:$0xf] %vm5833, %v5750
  %5880 = vst.msk [vmem:[%s7 + $0xb8] sm:$0xf] %vm5833, %v5751
  %5881 = vst.msk [vmem:[%s7 + $0xbc] sm:$0xf] %vm5833, %v5752
  %5882 = vst.msk [vmem:[%s7 + $0xc0] sm:$0xf] %vm5833, %v5753
  %5883 = vst.msk [vmem:[%s7 + $0xc4] sm:$0xf] %vm5833, %v5754
  %5884 = vst.msk [vmem:[%s7 + $0xc8] sm:$0xf] %vm5833, %v5755
  %5885 = vst.msk [vmem:[%s7 + $0xcc] sm:$0xf] %vm5833, %v5756
  %5886 = vst.msk [vmem:[%s7 + $0xd0] sm:$0xf] %vm5833, %v5757
  %5887 = vst.msk [vmem:[%s7 + $0xd4] sm:$0xf] %vm5833, %v5758
  %5888 = vst.msk [vmem:[%s7 + $0xd8] sm:$0xf] %vm5833, %v5759
  %5889 = vst.msk [vmem:[%s7 + $0xdc] sm:$0xf] %vm5833, %v5760
  %5890 = vst.msk [vmem:[%s7 + $0xe0] sm:$0xf] %vm5833, %v5761
  %5891 = vst.msk [vmem:[%s7 + $0xe4] sm:$0xf] %vm5833, %v5762
  %5892 = vst.msk [vmem:[%s7 + $0xe8] sm:$0xf] %vm5833, %v5763
  %5893 = vst.msk [vmem:[%s7 + $0xec] sm:$0xf] %vm5833, %v5764
  %5894 = vst.msk [vmem:[%s7 + $0xf0] sm:$0xf] %vm5833, %v5765
  %5895 = vst.msk [vmem:[%s7 + $0xf4] sm:$0xf] %vm5833, %v5766
  %5896 = vst.msk [vmem:[%s7 + $0xf8] sm:$0xf] %vm5833, %v5767
  %5897 = vst.msk [vmem:[%s7 + $0xfc] sm:$0xf] %vm5833, %v5768
  // Predicated region
  $region30: #{bottleneck_forward.1} parent=0 // pred_check
    _
  $region31: #{bottleneck_forward.1} parent=0 // pred_check_branch
    %5899 = sbr.rel (0) target = $region33
  $region32: #{bottleneck_forward.1} parent=0 // pred_region
    _
  $region33: #{bottleneck_forward.1} parent=0 // pred_fallthru
    _
  // Predicated region
  $region34: #{bottleneck_forward.1} parent=0 // pred_check
    _
  $region35: #{bottleneck_forward.1} parent=0 // pred_check_branch
    %5901 = sbr.rel (0) target = $region37
  $region36: #{bottleneck_forward.1} parent=0 // pred_region
    _
  $region37: #{bottleneck_forward.1} parent=0 // pred_fallthru
    _

</llo_original>
